<compile_context>
chip_gen: v6e
topology: v6e:2x2x1
jax: 0.10.0
libtpu: 0.0.40
codegen_flags: <defaults>
</compile_context>

<pallas_src>
import functools

import jax
import jax.numpy as jnp
from jax import lax
from jax.experimental import pallas as pl
from jax.experimental.pallas import tpu as pltpu


def _graph_loss_kernel(n_ref, pred_ref, lab_ref, logp_ref, avg_ref,
                       loss_ref, new_avg_ref, *, mxu_w_reduce):
    pred = pred_ref[...]                      # (C, TN)    native dtype
    lab = lab_ref[...]                        # (C, TN)
    logp = logp_ref[...]                      # (TN, H, W) native dtype
    avg = avg_ref[...]                        # (1, TN)    float32

    c, tn = pred.shape
    h, w = logp.shape[1], logp.shape[2]

    # ---- argmax over the class axis (sublanes) via the iota/min trick; the
    # result is lane-dense (1, TN).  First occurrence wins on ties.
    cls = lax.broadcasted_iota(jnp.int32, (c, tn), 0)
    pred_arg = jnp.min(
        jnp.where(pred == jnp.max(pred, axis=0, keepdims=True), cls, c),
        axis=0, keepdims=True)                                        # (1, TN)
    lab_arg = jnp.min(
        jnp.where(lab == jnp.max(lab, axis=0, keepdims=True), cls, c),
        axis=0, keepdims=True)                                        # (1, TN)
    corr = (pred_arg == lab_arg).astype(jnp.float32)                  # (1, TN)

    # ---- spatial mean of exp(logprobs), landing lane-dense (1, TN).
    # exp runs in the native dtype of logprobs; all accumulation is f32.
    exp_lp = jnp.exp(logp)                                            # (TN,H,W)
    if mxu_w_reduce:
        # Per-element heavy work on the MXU instead of the XLU lane reduce.
        # The flatten below is layout-free because the wrapper only enables
        # this path when H is a multiple of the dtype's sublane granule.
        exp_2d = exp_lp.reshape(tn * h, w)                            # (TN*H,W)
        ones_w = jnp.ones((w, 8), dtype=exp_2d.dtype)
        s1 = jnp.dot(exp_2d, ones_w,
                     preferred_element_type=jnp.float32)              # (TN*H,8)
        # Small sublane reduce over H (one vreg per row tile).
        s_red = jnp.sum(s1.reshape(tn, h, 8), axis=1)                 # (TN, 8)
        red_k, red_scale = 8, 1.0 / (8.0 * h * w)   # 8 identical columns summed
    else:
        # Fallback: XLU lane reduce with the f32 cast fused into the reduce
        # (no separate full-slab f32 temporary).
        s_red = jnp.sum(exp_lp, axis=2, dtype=jnp.float32)            # (TN, H)
        red_k, red_scale = h, 1.0 / (h * w)

    # Final contraction on the MXU against ones: sums the remaining small axis
    # AND lands the row sums lane-dense (1, TN) with no sublane->lane relayout.
    ones_k = jnp.ones((8, red_k), dtype=jnp.float32)
    row_sum = lax.dot_general(ones_k, s_red, (((1,), (1,)), ((), ())),
                              preferred_element_type=jnp.float32)[0:1, :]
    exp_mean = row_sum * red_scale                                    # (1, TN)

    # ---- mask the ragged last tile: rows >= N read uninitialised logprobs.
    col = pl.program_id(0) * tn + lax.broadcasted_iota(jnp.int32, (1, tn), 1)
    valid = col < n_ref[0]

    # point_w = avg_accuracy - corr_pred ; graph_loss = point_w * exp_mean
    point_w = avg - corr
    loss_ref[...] = jnp.where(valid, point_w * exp_mean, 0.0)
    new_avg_ref[...] = avg * 0.9 + 0.1 * corr          # EMA state update


def _round_up(x, m):
    return ((x + m - 1) // m) * m


def _vmem_capacity_bytes():
    """Best-effort trace-time VMEM capacity query (conservative default)."""
    try:
        info = pltpu.get_tpu_info()
        for attr in ("vmem_capacity_bytes", "vmem_bytes", "vmem_size_bytes"):
            val = getattr(info, attr, None)
            if val:
                return int(val)
    except Exception:
        pass
    return 64 * 1024 * 1024   # conservative (v7x-sized) default


@functools.partial(jax.jit, static_argnames=("tn", "mxu_w_reduce", "vmem_limit"))
def _graph_loss_impl(train_pred, train_lab, logprobs, avg_accuracy, *,
                     tn, mxu_w_reduce, vmem_limit):
    n, c = train_pred.shape
    _, h, w = logprobs.shape
    num_tiles = -(-n // tn)
    n_pad = num_tiles * tn
    pad = n_pad - n

    # Only the tiny per-row arrays are padded / transposed on the wrapper side
    # (lane-dense layouts).  The big (N, H, W) logprobs array is streamed as-is.
    pred_t = jnp.pad(train_pred.T, ((0, 0), (0, pad)))                # (C, Np)
    lab_t = jnp.pad(train_lab.T, ((0, 0), (0, pad)))                  # (C, Np)
    avg_row = jnp.pad(avg_accuracy.astype(jnp.float32).reshape(1, n),
                      ((0, 0), (0, pad)))                             # (1, Np)
    n_scalar = jnp.full((1,), n, dtype=jnp.int32)                     # prefetch

    kernel = functools.partial(_graph_loss_kernel, mxu_w_reduce=mxu_w_reduce)

    cost = pl.CostEstimate(
        flops=int(2 * n * h * w * 8 + 8 * n * c),
        transcendentals=int(n * h * w),
        bytes_accessed=int(logprobs.size * logprobs.dtype.itemsize
                           + pred_t.size * pred_t.dtype.itemsize
                           + lab_t.size * lab_t.dtype.itemsize
                           + 3 * n_pad * 4),
    )

    loss_rows, new_avg_row = pl.pallas_call(
        kernel,
        grid_spec=pltpu.PrefetchScalarGridSpec(
            num_scalar_prefetch=1,
            grid=(num_tiles,),
            in_specs=[
                pl.BlockSpec((c, tn), lambda i, n_ref: (0, i)),       # pred
                pl.BlockSpec((c, tn), lambda i, n_ref: (0, i)),       # lab
                pl.BlockSpec((tn, h, w), lambda i, n_ref: (i, 0, 0)),  # logp
                pl.BlockSpec((1, tn), lambda i, n_ref: (0, i)),       # avg
            ],
            out_specs=[
                pl.BlockSpec((1, tn), lambda i, n_ref: (0, i)),       # loss
                pl.BlockSpec((1, tn), lambda i, n_ref: (0, i)),       # new avg
            ],
        ),
        out_shape=[
            jax.ShapeDtypeStruct((1, n_pad), jnp.float32),
            jax.ShapeDtypeStruct((1, n_pad), jnp.float32),
        ],
        compiler_params=pltpu.CompilerParams(
            dimension_semantics=("parallel",),   # independent row tiles
            vmem_limit_bytes=vmem_limit,
        ),
        cost_estimate=cost,
        # NOTE: pipeline_mode=pl.Buffered(3) on the logprobs spec is a small
        # optional win where the VMEM budget allows; left at the default 2.
    )(n_scalar, pred_t, lab_t, logprobs, avg_row)

    loss = jnp.sum(loss_rows) / n          # masked rows contribute exactly 0
    new_avg = new_avg_row[0, :n]
    return loss, new_avg


def graph_loss(train_pred, train_lab, logprobs, avg_accuracy, *, block_n=None):
    """Functional GraphLoss.forward.

    Args:
      train_pred: (N, C) float predictions.
      train_lab:  (N, C) float one-hot (or score) labels.
      logprobs:   (N, H, W) float log-probabilities (bf16 streaming recommended).
      avg_accuracy: (N,) float running-accuracy state (0.5-filled on 1st call).
      block_n: optional rows per tile (multiple of 128); auto-sized otherwise.

    Returns:
      (scalar loss, updated avg_accuracy of shape (N,)).
    """
    n, c = train_pred.shape
    nb, h, w = logprobs.shape
    assert nb == n and train_lab.shape == (n, c) and avg_accuracy.shape == (n,)

    itemsize = jnp.dtype(logprobs.dtype).itemsize
    packing = max(1, 4 // itemsize)            # f32:1, bf16:2, fp8:4
    # The MXU W-reduction path needs the (TN, H, W) -> (TN*H, W) flatten to be
    # layout-free: H must be a multiple of the sublane granule for this dtype.
    mxu_w_reduce = (h % (8 * packing) == 0)

    # ---- generation-aware tile / VMEM budget.
    vmem_cap = _vmem_capacity_bytes()
    if vmem_cap <= 64 * 1024 * 1024:           # v7x-class: 64 MiB VMEM per TC
        slab_budget, vmem_limit = 8 * 1024 * 1024, 48 * 1024 * 1024
    else:                                      # v5e / v6e: 128 MiB VMEM
        slab_budget, vmem_limit = 16 * 1024 * 1024, 96 * 1024 * 1024

    row_bytes = h * w * itemsize
    if block_n is None:
        budget_tn = max(1, slab_budget // max(row_bytes, 1))
        # Keep the grid at >= ~4 steps so DMA/compute overlap and the v7x dual
        # TensorCores both engage even for small-to-medium N.
        target_tn = _round_up(max(1, -(-n // 4)), 128)
        block_n = min(budget_tn, target_tn)
    tn = max(128, (int(block_n) // 128) * 128)
    # TODO(synk): also tile H/W if a single 128-row slab ever exceeds the VMEM
    # budget (not needed for the shapes this module is used with).

    return _graph_loss_impl(train_pred, train_lab, logprobs, avg_accuracy,
                            tn=tn, mxu_w_reduce=mxu_w_reduce,
                            vmem_limit=vmem_limit)


if __name__ == "__main__":
    key = jax.random.PRNGKey(0)
    k1, k2, k3 = jax.random.split(key, 3)

    # Small deterministic shapes.  block_n=128 exercises a 3-step parallel grid
    # with a ragged last tile (N=300 -> 128 + 128 + 44 valid rows), so the
    # in-kernel masking path (no -inf padding of logprobs) is covered.
    N, C, H, W = 300, 10, 8, 256
    train_pred = jax.random.normal(k1, (N, C), dtype=jnp.float32)
    train_lab = jax.nn.one_hot(
        jax.random.randint(k2, (N,), 0, C), C, dtype=jnp.float32)
    logprobs = jax.nn.log_softmax(
        jax.random.normal(k3, (N, H, W), dtype=jnp.float32), axis=-1)

    # first call: avg_accuracy state initialised to 0.5 (ones_like * 0.5)
    avg0 = jnp.full((N,), 0.5, dtype=jnp.float32)

    loss, new_avg = graph_loss(train_pred, train_lab, logprobs, avg0,
                               block_n=128)
    jax.block_until_ready((loss, new_avg))

    # pure-JAX reference of the PyTorch semantics
    corr_ref = (jnp.argmax(train_pred, -1) ==
                jnp.argmax(train_lab, -1)).astype(jnp.float32)
    point_w_ref = avg0 - corr_ref
    loss_ref = jnp.mean(point_w_ref * jnp.mean(jnp.exp(logprobs),
                                               axis=(-1, -2)))
    avg_ref = avg0 * 0.9 + 0.1 * corr_ref

    assert jnp.allclose(loss, loss_ref, rtol=1e-3, atol=1e-5), (loss, loss_ref)
    assert jnp.allclose(new_avg, avg_ref, atol=1e-6)

    print("KERNEL_OK")
</pallas_src>

<mosaic_0001>
module attributes {stable_mosaic.version = 11 : i64} {
  func.func @_graph_loss_kernel(%arg0: i32, %arg1: memref<1xi32, #tpu.memory_space<smem>>, %arg2: memref<10x128xf32, #tpu.memory_space<vmem>>, %arg3: memref<10x128xf32, #tpu.memory_space<vmem>>, %arg4: memref<128x8x256xf32, #tpu.memory_space<vmem>>, %arg5: memref<1x128xf32, #tpu.memory_space<vmem>>, %arg6: memref<1x128xf32, #tpu.memory_space<vmem>>, %arg7: memref<1x128xf32, #tpu.memory_space<vmem>>) attributes {dimension_semantics = [#tpu.dimension_semantics<parallel>], iteration_bounds = array<i64: 3>, scalar_prefetch = 1 : i64, scratch_operands = 0 : i64, tpu.core_type = #tpu.core_type<tc>, window_params = [{transform_indices = @transform_0, window_bounds = array<i64: 10, 128>}, {transform_indices = @transform_1, window_bounds = array<i64: 10, 128>}, {transform_indices = @transform_2, window_bounds = array<i64: 128, 8, 256>}, {transform_indices = @transform_3, window_bounds = array<i64: 1, 128>}, {transform_indices = @transform_4, window_bounds = array<i64: 1, 128>}, {transform_indices = @transform_5, window_bounds = array<i64: 1, 128>}]} {
    %c0 = arith.constant 0 : index
    %c0_0 = arith.constant 0 : index
    %0 = vector.load %arg2[%c0, %c0_0] : memref<10x128xf32, #tpu.memory_space<vmem>>, vector<10x128xf32>
    %c0_1 = arith.constant 0 : index
    %c0_2 = arith.constant 0 : index
    %1 = vector.load %arg3[%c0_1, %c0_2] : memref<10x128xf32, #tpu.memory_space<vmem>>, vector<10x128xf32>
    %c0_3 = arith.constant 0 : index
    %c0_4 = arith.constant 0 : index
    %c0_5 = arith.constant 0 : index
    %2 = vector.load %arg4[%c0_3, %c0_4, %c0_5] : memref<128x8x256xf32, #tpu.memory_space<vmem>>, vector<128x8x256xf32>
    %c0_6 = arith.constant 0 : index
    %c0_7 = arith.constant 0 : index
    %3 = vector.load %arg5[%c0_6, %c0_7] : memref<1x128xf32, #tpu.memory_space<vmem>>, vector<1x128xf32>
    %4 = tpu.iota {dimensions = array<i32: 0>} : vector<10x128xi32>
    %cst = arith.constant dense<0xFF800000> : vector<128xf32>
    %5 = vector.multi_reduction <maximumf>, %0, %cst [0] : vector<10x128xf32> to vector<128xf32>
    %6 = vector.shape_cast %5 : vector<128xf32> to vector<1x128xf32>
    %7 = vector.broadcast %6 : vector<1x128xf32> to vector<10x128xf32>
    %8 = arith.cmpf oeq, %0, %7 : vector<10x128xf32>
    %c10_i32 = arith.constant 10 : i32
    %9 = vector.broadcast %c10_i32 : i32 to vector<10x128xi32>
    %10 = arith.select %8, %4, %9 : vector<10x128xi1>, vector<10x128xi32>
    %cst_8 = arith.constant dense<2147483647> : vector<128xi32>
    %11 = vector.multi_reduction <minsi>, %10, %cst_8 [0] : vector<10x128xi32> to vector<128xi32>
    %12 = vector.shape_cast %11 : vector<128xi32> to vector<1x128xi32>
    %cst_9 = arith.constant dense<0xFF800000> : vector<128xf32>
    %13 = vector.multi_reduction <maximumf>, %1, %cst_9 [0] : vector<10x128xf32> to vector<128xf32>
    %14 = vector.shape_cast %13 : vector<128xf32> to vector<1x128xf32>
    %15 = vector.broadcast %14 : vector<1x128xf32> to vector<10x128xf32>
    %16 = arith.cmpf oeq, %1, %15 : vector<10x128xf32>
    %c10_i32_10 = arith.constant 10 : i32
    %17 = vector.broadcast %c10_i32_10 : i32 to vector<10x128xi32>
    %18 = arith.select %16, %4, %17 : vector<10x128xi1>, vector<10x128xi32>
    %cst_11 = arith.constant dense<2147483647> : vector<128xi32>
    %19 = vector.multi_reduction <minsi>, %18, %cst_11 [0] : vector<10x128xi32> to vector<128xi32>
    %20 = vector.shape_cast %19 : vector<128xi32> to vector<1x128xi32>
    %21 = arith.cmpi eq, %12, %20 : vector<1x128xi32>
    %22 = arith.extui %21 : vector<1x128xi1> to vector<1x128xi32>
    %23 = arith.sitofp %22 : vector<1x128xi32> to vector<1x128xf32>
    %24 = math.exp %2 : vector<128x8x256xf32>
    %25 = vector.shape_cast %24 : vector<128x8x256xf32> to vector<1024x256xf32>
    %cst_12 = arith.constant 1.000000e+00 : f32
    %26 = vector.broadcast %cst_12 : f32 to vector<256x8xf32>
    %cst_13 = arith.constant dense<0.000000e+00> : vector<1024x8xf32>
    %27 = tpu.matmul %25, %26, %cst_13 {dimension_numbers = #tpu.dot_dimension_numbers<[1], [0], [0], [1], [0, 0, 1, 1], [], []>} : vector<1024x256xf32>, vector<256x8xf32>, vector<1024x8xf32> -> vector<1024x8xf32>
    %28 = vector.shape_cast %27 : vector<1024x8xf32> to vector<128x8x8xf32>
    %cst_14 = arith.constant dense<0.000000e+00> : vector<128x8xf32>
    %29 = vector.multi_reduction <add>, %28, %cst_14 [1] : vector<128x8x8xf32> to vector<128x8xf32>
    %cst_15 = arith.constant 1.000000e+00 : f32
    %30 = vector.broadcast %cst_15 : f32 to vector<8x8xf32>
    %cst_16 = arith.constant dense<0.000000e+00> : vector<8x128xf32>
    %31 = tpu.matmul %30, %29, %cst_16 {dimension_numbers = #tpu.dot_dimension_numbers<[1], [1], [0], [0], [0, 0, 1, 0], [], []>} : vector<8x8xf32>, vector<128x8xf32>, vector<8x128xf32> -> vector<8x128xf32>
    %32 = vector.extract_strided_slice %31 {offsets = [0, 0], sizes = [1, 128], strides = [1, 1]} : vector<8x128xf32> to vector<1x128xf32>
    %cst_17 = arith.constant 6.10351563E-5 : f32
    %33 = vector.broadcast %cst_17 : f32 to vector<1x128xf32>
    %34 = arith.mulf %32, %33 : vector<1x128xf32>
    %c128_i32 = arith.constant 128 : i32
    %35 = arith.muli %arg0, %c128_i32 : i32
    %36 = tpu.iota {dimensions = array<i32: 1>} : vector<1x128xi32>
    %37 = vector.broadcast %35 : i32 to vector<1x128xi32>
    %38 = arith.addi %37, %36 : vector<1x128xi32>
    %c0_18 = arith.constant 0 : index
    %39 = memref.load %arg1[%c0_18] : memref<1xi32, #tpu.memory_space<smem>>
    %40 = vector.broadcast %39 : i32 to vector<1x128xi32>
    %41 = arith.cmpi slt, %38, %40 : vector<1x128xi32>
    %42 = arith.subf %3, %23 : vector<1x128xf32>
    %43 = arith.mulf %42, %34 : vector<1x128xf32>
    %cst_19 = arith.constant 0.000000e+00 : f32
    %44 = vector.broadcast %cst_19 : f32 to vector<1x128xf32>
    %45 = arith.select %41, %43, %44 : vector<1x128xi1>, vector<1x128xf32>
    %c0_20 = arith.constant 0 : index
    %c0_21 = arith.constant 0 : index
    %46 = vector.load %arg6[%c0_20, %c0_21] : memref<1x128xf32, #tpu.memory_space<vmem>>, vector<1x128xf32>
    tpu.vector_store %arg6[%c0_20, %c0_21], %45 {strides = array<i32>} : memref<1x128xf32, #tpu.memory_space<vmem>>, vector<1x128xf32>,
    %cst_22 = arith.constant 0.899999976 : f32
    %47 = vector.broadcast %cst_22 : f32 to vector<1x128xf32>
    %48 = arith.mulf %3, %47 : vector<1x128xf32>
    %cst_23 = arith.constant 1.000000e-01 : f32
    %49 = vector.broadcast %cst_23 : f32 to vector<1x128xf32>
    %50 = arith.mulf %49, %23 : vector<1x128xf32>
    %51 = arith.addf %48, %50 : vector<1x128xf32>
    %c0_24 = arith.constant 0 : index
    %c0_25 = arith.constant 0 : index
    %52 = vector.load %arg7[%c0_24, %c0_25] : memref<1x128xf32, #tpu.memory_space<vmem>>, vector<1x128xf32>
    tpu.vector_store %arg7[%c0_24, %c0_25], %51 {strides = array<i32>} : memref<1x128xf32, #tpu.memory_space<vmem>>, vector<1x128xf32>,
    return
  }
  func.func @transform_0(%arg0: i32, %arg1: memref<1xi32, #tpu.memory_space<smem>>) -> (i32, i32) {
    %c0_i32 = arith.constant 0 : i32
    %c0_i32_0 = arith.constant 0 : i32
    return %c0_i32, %arg0 : i32, i32
  }
  func.func @transform_1(%arg0: i32, %arg1: memref<1xi32, #tpu.memory_space<smem>>) -> (i32, i32) {
    %c0_i32 = arith.constant 0 : i32
    %c0_i32_0 = arith.constant 0 : i32
    return %c0_i32, %arg0 : i32, i32
  }
  func.func @transform_2(%arg0: i32, %arg1: memref<1xi32, #tpu.memory_space<smem>>) -> (i32, i32, i32) {
    %c0_i32 = arith.constant 0 : i32
    %c0_i32_0 = arith.constant 0 : i32
    %c0_i32_1 = arith.constant 0 : i32
    return %arg0, %c0_i32, %c0_i32_0 : i32, i32, i32
  }
  func.func @transform_3(%arg0: i32, %arg1: memref<1xi32, #tpu.memory_space<smem>>) -> (i32, i32) {
    %c0_i32 = arith.constant 0 : i32
    %c0_i32_0 = arith.constant 0 : i32
    return %c0_i32, %arg0 : i32, i32
  }
  func.func @transform_4(%arg0: i32, %arg1: memref<1xi32, #tpu.memory_space<smem>>) -> (i32, i32) {
    %c0_i32 = arith.constant 0 : i32
    %c0_i32_0 = arith.constant 0 : i32
    return %c0_i32, %arg0 : i32, i32
  }
  func.func @transform_5(%arg0: i32, %arg1: memref<1xi32, #tpu.memory_space<smem>>) -> (i32, i32) {
    %c0_i32 = arith.constant 0 : i32
    %c0_i32_0 = arith.constant 0 : i32
    return %c0_i32, %arg0 : i32, i32
  }
}

</mosaic_0001>

<llo_original>
// kernel: _graph_loss_impl.1
$region0: #{_graph_loss_impl.1}
  #allocation0 [shape = 'u32[]', space=smem, size = 0x4, offset = 0x4, fixed_abs, tag = 'smem constant byte address 0x4 - core index']
  #allocation1 [shape = 'u32[144,128]{1,0:T(1,128)}', space=vmem, size = 0x12000, scoped, tag = 'internal scratch']
  #allocation2 [shape = 's32[1]{0}', space=sflag, size = 0x4, scoped, tag = 'scoped memory for _graph_loss_impl.1']
  #allocation3 [shape = 's32[1]{0:T(128)S(6)}', space=smem, size = 0x200, scoped, tag = 'prefetched SMEM operand 0']
  %s0 = inlined_call_operand.<no memory space> [shape: s32[1], index: 0, kind: input, shape index: {}]
  %s1 = inlined_call_operand.vmem [shape: f32[10,384], index: 1, kind: input, shape index: {}]
  %s2 = inlined_call_operand.vmem [shape: f32[10,384], index: 2, kind: input, shape index: {}]
  %s3 = inlined_call_operand.hbm [shape: f32[300,8,256], index: 3, kind: input, shape index: {}]
  %s4 = inlined_call_operand.vmem [shape: f32[1,384], index: 4, kind: input, shape index: {}]
  %s5 = inlined_call_operand.vmem [shape: f32[1,384], index: 5, kind: output, shape index: {0}]
  %s6 = inlined_call_operand.vmem [shape: f32[1,384], index: 6, kind: output, shape index: {1}]
  %7 = xla_tuple %s5, %s6
  %s8 = sld [smem:[#allocation0]]
  $region137: #{_graph_loss_impl.1} parent=0
    _
  %s10 = ssub.s32 1, %s8
  %s11 = scalar_select 0, %s10, %s8
  %12 = sst [smem:[#allocation3]] %s0
  $region1: #{_graph_loss_impl.1} parent=0
    #allocation4 [shape = 'u8[16384]{0}', space=vmem, size = 0x4000, scoped, tag = 'input window, operand 1']
    #allocation5 [shape = 'u8[16384]{0}', space=vmem, size = 0x4000, scoped, tag = 'input window, operand 2']
    #allocation6 [shape = 'u8[2097152]{0}', space=vmem, size = 0x200000, scoped, tag = 'input window, operand 3']
    #allocation7 [shape = 's32[2]{0}', space=sflag, size = 0x8, scoped, tag = 'scoped memory for _graph_loss_impl.1']
    %13 = vsyncpa [#allocation7], 0
    %s14 = scalar_lea.sflag [#allocation7], 1
    %15 = vsyncpa %s14, 0
    loop: start=0, step=1, limit=5
    $region2: #{_graph_loss_impl.1} parent=1 // loop_pre_header
      _
    $region3: #{_graph_loss_impl.1} parent=1 // loop_header
      %s17 = sphi 0, %s21
      %p18 = scmp.ge.s32.totalorder %s17, 5
      %s27 = sphi 0, %s29
      %s30 = sphi 0, %s27
      %s31 = sphi 0, %s30
      %s47 = sphi 0, %s31
      %s53 = sphi 0, %s55
      %s56 = sphi 0, %s53
      %s57 = sphi 0, %s56
      %s73 = sphi 0, %s57
      %s79 = sphi 0, %s81
      %s82 = sphi 0, %s79
      %s83 = sphi 0, %s82
      %s99 = sphi 0, %s83
      %s105 = sphi 0, %s107
      %s108 = sphi 0, %s105
      %s109 = sphi 0, %s108
      %s125 = sphi 0, %s109
      %s131 = sphi 0, %s133
      %s134 = sphi 0, %s131
      %s135 = sphi 0, %s134
      %s151 = sphi 0, %s135
      %s157 = sphi 0, %s159
      %s160 = sphi 0, %s157
      %s161 = sphi 0, %s160
      %s177 = sphi 0, %s161
    $region4: #{_graph_loss_impl.1} parent=1 // loop_header_branch
      %20 = sbr.rel (%p18) target = $region8
    $region5: #{_graph_loss_impl.1} parent=1 // loop_body
      %s22 = ssub.s32 %s17, 1
      %s23 = ssub.s32 %s17, 2
      %s24 = sadd.s32 %s17, 1
      %s25 = ssub.s32 %s17, %s24
      %p26 = scmp.eq.s32.totalorder %s25, 0
      %s28 = sadd.s32 %s27, 1
      %s29 = scalar_select %p26, %s27, %s28
      %p32 = pneg %p26
      %p33 = scmp.eq.s32.totalorder %s17, 2
      %p34 = por %p32, %p33
      %p35 = scmp.ne.s32.totalorder %s27, %s30
      %p36 = scmp.eq.s32.totalorder %s17, 0
      %p37 = por %p35, %p36
      %p38 = scmp.ne.s32.totalorder %s27, %s30
      %p39 = scmp.eq.s32.totalorder %s22, 2
      %p40 = por %p38, %p39
      %p41 = scmp.ne.s32.totalorder %s30, %s31
      %p42 = scmp.eq.s32.totalorder %s22, 0
      %p43 = por %p41, %p42
      %p44 = scmp.ne.s32.totalorder %s30, %s31
      %p45 = scmp.eq.s32.totalorder %s23, 2
      %p46 = por %p44, %p45
      %p48 = scmp.ne.s32.totalorder %s31, %s47
      %p49 = scmp.eq.s32.totalorder %s23, 0
      %p50 = por %p48, %p49
      %s51 = ssub.s32 %s17, %s24
      %p52 = scmp.eq.s32.totalorder %s51, 0
      %s54 = sadd.s32 %s53, 1
      %s55 = scalar_select %p52, %s53, %s54
      %p58 = pneg %p52
      %p59 = scmp.eq.s32.totalorder %s17, 2
      %p60 = por %p58, %p59
      %p61 = scmp.ne.s32.totalorder %s53, %s56
      %p62 = scmp.eq.s32.totalorder %s17, 0
      %p63 = por %p61, %p62
      %p64 = scmp.ne.s32.totalorder %s53, %s56
      %p65 = scmp.eq.s32.totalorder %s22, 2
      %p66 = por %p64, %p65
      %p67 = scmp.ne.s32.totalorder %s56, %s57
      %p68 = scmp.eq.s32.totalorder %s22, 0
      %p69 = por %p67, %p68
      %p70 = scmp.ne.s32.totalorder %s56, %s57
      %p71 = scmp.eq.s32.totalorder %s23, 2
      %p72 = por %p70, %p71
      %p74 = scmp.ne.s32.totalorder %s57, %s73
      %p75 = scmp.eq.s32.totalorder %s23, 0
      %p76 = por %p74, %p75
      %s77 = ssub.s32 %s17, %s24
      %p78 = scmp.eq.s32.totalorder %s77, 0
      %s80 = sadd.s32 %s79, 1
      %s81 = scalar_select %p78, %s79, %s80
      %p84 = pneg %p78
      %p85 = scmp.eq.s32.totalorder %s17, 2
      %p86 = por %p84, %p85
      %p87 = scmp.ne.s32.totalorder %s79, %s82
      %p88 = scmp.eq.s32.totalorder %s17, 0
      %p89 = por %p87, %p88
      %p90 = scmp.ne.s32.totalorder %s79, %s82
      %p91 = scmp.eq.s32.totalorder %s22, 2
      %p92 = por %p90, %p91
      %p93 = scmp.ne.s32.totalorder %s82, %s83
      %p94 = scmp.eq.s32.totalorder %s22, 0
      %p95 = por %p93, %p94
      %p96 = scmp.ne.s32.totalorder %s82, %s83
      %p97 = scmp.eq.s32.totalorder %s23, 2
      %p98 = por %p96, %p97
      %p100 = scmp.ne.s32.totalorder %s83, %s99
      %p101 = scmp.eq.s32.totalorder %s23, 0
      %p102 = por %p100, %p101
      %s103 = ssub.s32 %s17, %s24
      %p104 = scmp.eq.s32.totalorder %s103, 0
      %s106 = sadd.s32 %s105, 1
      %s107 = scalar_select %p104, %s105, %s106
      %p110 = pneg %p104
      %p111 = scmp.eq.s32.totalorder %s17, 2
      %p112 = por %p110, %p111
      %p113 = scmp.ne.s32.totalorder %s105, %s108
      %p114 = scmp.eq.s32.totalorder %s17, 0
      %p115 = por %p113, %p114
      %p116 = scmp.ne.s32.totalorder %s105, %s108
      %p117 = scmp.eq.s32.totalorder %s22, 2
      %p118 = por %p116, %p117
      %p119 = scmp.ne.s32.totalorder %s108, %s109
      %p120 = scmp.eq.s32.totalorder %s22, 0
      %p121 = por %p119, %p120
      %p122 = scmp.ne.s32.totalorder %s108, %s109
      %p123 = scmp.eq.s32.totalorder %s23, 2
      %p124 = por %p122, %p123
      %p126 = scmp.ne.s32.totalorder %s109, %s125
      %p127 = scmp.eq.s32.totalorder %s23, 0
      %p128 = por %p126, %p127
      %s129 = ssub.s32 %s17, %s24
      %p130 = scmp.eq.s32.totalorder %s129, 0
      %s132 = sadd.s32 %s131, 1
      %s133 = scalar_select %p130, %s131, %s132
      %p136 = pneg %p130
      %p137 = scmp.eq.s32.totalorder %s17, 2
      %p138 = por %p136, %p137
      %p139 = scmp.ne.s32.totalorder %s131, %s134
      %p140 = scmp.eq.s32.totalorder %s17, 0
      %p141 = por %p139, %p140
      %p142 = scmp.ne.s32.totalorder %s131, %s134
      %p143 = scmp.eq.s32.totalorder %s22, 2
      %p144 = por %p142, %p143
      %p145 = scmp.ne.s32.totalorder %s134, %s135
      %p146 = scmp.eq.s32.totalorder %s22, 0
      %p147 = por %p145, %p146
      %p148 = scmp.ne.s32.totalorder %s134, %s135
      %p149 = scmp.eq.s32.totalorder %s23, 2
      %p150 = por %p148, %p149
      %p152 = scmp.ne.s32.totalorder %s135, %s151
      %p153 = scmp.eq.s32.totalorder %s23, 0
      %p154 = por %p152, %p153
      %s155 = ssub.s32 %s17, %s24
      %p156 = scmp.eq.s32.totalorder %s155, 0
      %s158 = sadd.s32 %s157, 1
      %s159 = scalar_select %p156, %s157, %s158
      %p162 = pneg %p156
      %p163 = scmp.eq.s32.totalorder %s17, 2
      %p164 = por %p162, %p163
      %p165 = scmp.ne.s32.totalorder %s157, %s160
      %p166 = scmp.eq.s32.totalorder %s17, 0
      %p167 = por %p165, %p166
      %p168 = scmp.ne.s32.totalorder %s157, %s160
      %p169 = scmp.eq.s32.totalorder %s22, 2
      %p170 = por %p168, %p169
      %p171 = scmp.ne.s32.totalorder %s160, %s161
      %p172 = scmp.eq.s32.totalorder %s22, 0
      %p173 = por %p171, %p172
      %p174 = scmp.ne.s32.totalorder %s160, %s161
      %p175 = scmp.eq.s32.totalorder %s23, 2
      %p176 = por %p174, %p175
      %p178 = scmp.ne.s32.totalorder %s161, %s177
      %p179 = scmp.eq.s32.totalorder %s23, 0
      %p180 = por %p178, %p179
      %p181 = scmp.le.s32.totalorder 1, %s17
      %p182 = scmp.lt.s32.totalorder %s17, 4
      %p183 = pnand %p181, %p182
      %p184 = pneg %p183
      // Predicated region
      $region9: #{_graph_loss_impl.1} parent=5 // pred_check
        _
      $region10: #{_graph_loss_impl.1} parent=5 // pred_check_branch
        %186 = sbr.rel (%p183) target = $region12
      $region11: #{_graph_loss_impl.1} parent=5 // pred_region
        %s187 = ssub.s32 %s17, 1
      $region12: #{_graph_loss_impl.1} parent=5 // pred_fallthru
        _
      %p188 = scmp.lt.s32.totalorder %s17, 3
      // Predicated region
      $region13: #{_graph_loss_impl.1} parent=5 // pred_check
        %p189 = pneg %p188
      $region14: #{_graph_loss_impl.1} parent=5 // pred_check_branch
        %191 = sbr.rel (%p189) target = $region16
      $region15: #{_graph_loss_impl.1} parent=5 // pred_region
        // Predicated region
        $region17: #{_graph_loss_impl.1} parent=15 // pred_check
          %p192 = pneg %p37
        $region18: #{_graph_loss_impl.1} parent=15 // pred_check_branch
          %194 = sbr.rel (%p192) target = $region20
        $region19: #{_graph_loss_impl.1} parent=15 // pred_region
          %s195 = sand.u32 %s27, 1
          %s196 = sand.u32 %s27, 1
          %s197 = smul.addr %s196, 16
          %s198 = scalar_lea.vmem [#allocation4], %s197
          %s199 = smul.addr %s17, 8
          %s200 = scalar_lea.vmem %s1, %s199
          // Predicated region
          $region21: #{_graph_loss_impl.1} parent=19 // pred_check
            _
          $region22: #{_graph_loss_impl.1} parent=19 // pred_check_branch
            %202 = sbr.rel (0) target = $region24
          $region23: #{_graph_loss_impl.1} parent=19 // pred_region
            // Predicated region
            $region25: #{_graph_loss_impl.1} parent=23 // pred_check
              _
            $region26: #{_graph_loss_impl.1} parent=23 // pred_check_branch
              %204 = sbr.rel (0) target = $region28
            $region27: #{_graph_loss_impl.1} parent=23 // pred_region
              // Predicated region
              $region40: #{_graph_loss_impl.1} parent=27 // pred_check
                _
              $region41: #{_graph_loss_impl.1} parent=27 // pred_check_branch
                %222 = sbr.rel (0) target = $region43
              $region42: #{_graph_loss_impl.1} parent=27 // pred_region
                loop: start=0, step=1, limit=1
                $region44: #{_graph_loss_impl.1} parent=42 // loop_pre_header
                  _
                $region45: #{_graph_loss_impl.1} parent=42 // loop_header
                  %s224 = sphi 0, %s228
                  %p225 = scmp.ge.s32.totalorder %s224, 1
                  %s229 = sphi %s200, %s200
                  %s230 = sphi %s198, %s198
                $region46: #{_graph_loss_impl.1} parent=42 // loop_header_branch
                  %227 = sbr.rel (%p225) target = $region50
                $region47: #{_graph_loss_impl.1} parent=42 // loop_body
                  %v231 = vld [vmem:[%s229] sm:$0xff]
                  %232 = vst [vmem:[%s230] sm:$0xff] %v231
                  %v233 = vld [vmem:[%s229 + $0x18] sm:$0xff]
                  %234 = vst [vmem:[%s230 + $0x8] sm:$0xff] %v233
                $region48: #{_graph_loss_impl.1} parent=42 // loop_footer
                  %s228 = sadd.s32 1, %s224
                $region49: #{_graph_loss_impl.1} parent=42 // loop_footer_branch
                  %223 = sbr.rel target = $region45
                $region50: #{_graph_loss_impl.1} parent=42 // loop_exit
                  _
              $region43: #{_graph_loss_impl.1} parent=27 // pred_fallthru
                _
              // Predicated region
              $region51: #{_graph_loss_impl.1} parent=27 // pred_check
                _
              $region52: #{_graph_loss_impl.1} parent=27 // pred_check_branch
                %236 = sbr.rel target = $region54
              $region53: #{_graph_loss_impl.1} parent=27 // pred_region
                _
              $region54: #{_graph_loss_impl.1} parent=27 // pred_fallthru
                _
            $region28: #{_graph_loss_impl.1} parent=23 // pred_fallthru
              _
            // Predicated region
            $region29: #{_graph_loss_impl.1} parent=23 // pred_check
              _
            $region30: #{_graph_loss_impl.1} parent=23 // pred_check_branch
              %206 = sbr.rel target = $region32
            $region31: #{_graph_loss_impl.1} parent=23 // pred_region
              %s208 = ssub.s32 256, 1
              loop: start=0, step=1, limit=1
              $region33: #{_graph_loss_impl.1} parent=31 // loop_pre_header
                _
              $region34: #{_graph_loss_impl.1} parent=31 // loop_header
                %s210 = sphi 0, %s214
                %p211 = scmp.ge.s32.totalorder %s210, 1
                %s215 = sphi %s200, %s200
                %s216 = sphi %s198, %s198
              $region35: #{_graph_loss_impl.1} parent=31 // loop_header_branch
                %213 = sbr.rel (%p211) target = $region39
              $region36: #{_graph_loss_impl.1} parent=31 // loop_body
                %v217 = vld [vmem:[%s215] sm:%s208]
                %218 = vst [vmem:[%s216] sm:%s208] %v217
                %v219 = vld [vmem:[%s215 + $0x18] sm:%s208]
                %220 = vst [vmem:[%s216 + $0x8] sm:%s208] %v219
              $region37: #{_graph_loss_impl.1} parent=31 // loop_footer
                %s214 = sadd.s32 1, %s210
              $region38: #{_graph_loss_impl.1} parent=31 // loop_footer_branch
                %209 = sbr.rel target = $region34
              $region39: #{_graph_loss_impl.1} parent=31 // loop_exit
                _
            $region32: #{_graph_loss_impl.1} parent=23 // pred_fallthru
              _
          $region24: #{_graph_loss_impl.1} parent=19 // pred_fallthru
            _
          %237 = vnop
        $region20: #{_graph_loss_impl.1} parent=15 // pred_fallthru
          _
        // Predicated region
        $region55: #{_graph_loss_impl.1} parent=15 // pred_check
          %p238 = pneg %p63
        $region56: #{_graph_loss_impl.1} parent=15 // pred_check_branch
          %240 = sbr.rel (%p238) target = $region58
        $region57: #{_graph_loss_impl.1} parent=15 // pred_region
          %s241 = sand.u32 %s53, 1
          %s242 = sand.u32 %s53, 1
          %s243 = smul.addr %s242, 16
          %s244 = scalar_lea.vmem [#allocation5], %s243
          %s245 = smul.addr %s17, 8
          %s246 = scalar_lea.vmem %s2, %s245
          // Predicated region
          $region59: #{_graph_loss_impl.1} parent=57 // pred_check
            _
          $region60: #{_graph_loss_impl.1} parent=57 // pred_check_branch
            %248 = sbr.rel (0) target = $region62
          $region61: #{_graph_loss_impl.1} parent=57 // pred_region
            // Predicated region
            $region63: #{_graph_loss_impl.1} parent=61 // pred_check
              _
            $region64: #{_graph_loss_impl.1} parent=61 // pred_check_branch
              %250 = sbr.rel (0) target = $region66
            $region65: #{_graph_loss_impl.1} parent=61 // pred_region
              // Predicated region
              $region78: #{_graph_loss_impl.1} parent=65 // pred_check
                _
              $region79: #{_graph_loss_impl.1} parent=65 // pred_check_branch
                %268 = sbr.rel (0) target = $region81
              $region80: #{_graph_loss_impl.1} parent=65 // pred_region
                loop: start=0, step=1, limit=1
                $region82: #{_graph_loss_impl.1} parent=80 // loop_pre_header
                  _
                $region83: #{_graph_loss_impl.1} parent=80 // loop_header
                  %s270 = sphi 0, %s274
                  %p271 = scmp.ge.s32.totalorder %s270, 1
                  %s275 = sphi %s246, %s246
                  %s276 = sphi %s244, %s244
                $region84: #{_graph_loss_impl.1} parent=80 // loop_header_branch
                  %273 = sbr.rel (%p271) target = $region88
                $region85: #{_graph_loss_impl.1} parent=80 // loop_body
                  %v277 = vld [vmem:[%s275] sm:$0xff]
                  %278 = vst [vmem:[%s276] sm:$0xff] %v277
                  %v279 = vld [vmem:[%s275 + $0x18] sm:$0xff]
                  %280 = vst [vmem:[%s276 + $0x8] sm:$0xff] %v279
                $region86: #{_graph_loss_impl.1} parent=80 // loop_footer
                  %s274 = sadd.s32 1, %s270
                $region87: #{_graph_loss_impl.1} parent=80 // loop_footer_branch
                  %269 = sbr.rel target = $region83
                $region88: #{_graph_loss_impl.1} parent=80 // loop_exit
                  _
              $region81: #{_graph_loss_impl.1} parent=65 // pred_fallthru
                _
              // Predicated region
              $region89: #{_graph_loss_impl.1} parent=65 // pred_check
                _
              $region90: #{_graph_loss_impl.1} parent=65 // pred_check_branch
                %282 = sbr.rel target = $region92
              $region91: #{_graph_loss_impl.1} parent=65 // pred_region
                _
              $region92: #{_graph_loss_impl.1} parent=65 // pred_fallthru
                _
            $region66: #{_graph_loss_impl.1} parent=61 // pred_fallthru
              _
            // Predicated region
            $region67: #{_graph_loss_impl.1} parent=61 // pred_check
              _
            $region68: #{_graph_loss_impl.1} parent=61 // pred_check_branch
              %252 = sbr.rel target = $region70
            $region69: #{_graph_loss_impl.1} parent=61 // pred_region
              %s254 = ssub.s32 256, 1
              loop: start=0, step=1, limit=1
              $region71: #{_graph_loss_impl.1} parent=69 // loop_pre_header
                _
              $region72: #{_graph_loss_impl.1} parent=69 // loop_header
                %s256 = sphi 0, %s260
                %p257 = scmp.ge.s32.totalorder %s256, 1
                %s261 = sphi %s246, %s246
                %s262 = sphi %s244, %s244
              $region73: #{_graph_loss_impl.1} parent=69 // loop_header_branch
                %259 = sbr.rel (%p257) target = $region77
              $region74: #{_graph_loss_impl.1} parent=69 // loop_body
                %v263 = vld [vmem:[%s261] sm:%s254]
                %264 = vst [vmem:[%s262] sm:%s254] %v263
                %v265 = vld [vmem:[%s261 + $0x18] sm:%s254]
                %266 = vst [vmem:[%s262 + $0x8] sm:%s254] %v265
              $region75: #{_graph_loss_impl.1} parent=69 // loop_footer
                %s260 = sadd.s32 1, %s256
              $region76: #{_graph_loss_impl.1} parent=69 // loop_footer_branch
                %255 = sbr.rel target = $region72
              $region77: #{_graph_loss_impl.1} parent=69 // loop_exit
                _
            $region70: #{_graph_loss_impl.1} parent=61 // pred_fallthru
              _
          $region62: #{_graph_loss_impl.1} parent=57 // pred_fallthru
            _
          %283 = vnop
        $region58: #{_graph_loss_impl.1} parent=15 // pred_fallthru
          _
        // Predicated region
        $region93: #{_graph_loss_impl.1} parent=15 // pred_check
          %p284 = pneg %p89
        $region94: #{_graph_loss_impl.1} parent=15 // pred_check_branch
          %286 = sbr.rel (%p284) target = $region96
        $region95: #{_graph_loss_impl.1} parent=15 // pred_region
          %s287 = sand.u32 %s79, 1
          %s288 = scalar_lea.sflag [#allocation7], %s287
          %s289 = sand.u32 %s79, 1
          %s290 = smul.addr %s289, 2048
          %s291 = scalar_lea.vmem [#allocation6], %s290
          %s292 = smul.u32 128, %s17
          %s293 = ssub.s32 300, %s292
          %p294 = scmp.lt.s32.totalorder %s293, 128
          %s295 = scalar_select %p294, %s293, 128
          %s296 = smul.u32 128, %s295
          %s297 = smul.u32 %s296, 2
          %s299 = ssub.s32 32768, %s297
          %300 = vsyncadd %s288, %s299
          %p301 = scmp.ne.s32.totalorder 0, %s297
          %s302 = smul.addr %s292, 2
          %s303 = smul.addr %s302, 128
          %s304 = scalar_lea.hbm %s3, %s303
          %s305 = smul.u32 16, %s295
          %s306 = sshll.u32 %s291, 4
          %s307 = int_to_ptr.vmem [resolvable:$true] %s306
          %s308 = sshll.u32 %s305, 4
          %312 = dma.hbm_to_vmem [thread:$0]  (%p301), %s304, %s308, %s307, %s288, 256, 256, 16
        $region96: #{_graph_loss_impl.1} parent=15 // pred_fallthru
          _
        // Predicated region
        $region97: #{_graph_loss_impl.1} parent=15 // pred_check
          %p313 = pneg %p115
        $region98: #{_graph_loss_impl.1} parent=15 // pred_check_branch
          %315 = sbr.rel (%p313) target = $region100
        $region99: #{_graph_loss_impl.1} parent=15 // pred_region
          %p316 = scmp.lt.s32.totalorder %s17, 2
          %s317 = scalar_select %p316, %s17, 2
          %s318 = scalar_lea.vmem %s4, %s317
        $region100: #{_graph_loss_impl.1} parent=15 // pred_fallthru
          _
      $region16: #{_graph_loss_impl.1} parent=5 // pred_fallthru
        _
      %p319 = scmp.le.s32.totalorder 1, %s17
      %p320 = scmp.lt.s32.totalorder %s17, 4
      %p321 = pnand %p319, %p320
      %p322 = pneg %p321
      // Predicated region
      $region101: #{_graph_loss_impl.1} parent=5 // pred_check
        _
      $region102: #{_graph_loss_impl.1} parent=5 // pred_check_branch
        %324 = sbr.rel (%p321) target = $region104
      $region103: #{_graph_loss_impl.1} parent=5 // pred_region
        %s325 = ssub.s32 %s17, 1
        %s326 = sand.u32 %s30, 1
        %s327 = sand.u32 %s30, 1
        %s328 = smul.addr %s327, 16
        %s329 = scalar_lea.vmem [#allocation4], %s328
        // Predicated region
        $region105: #{_graph_loss_impl.1} parent=103 // pred_check
          %p330 = pneg %p43
        $region106: #{_graph_loss_impl.1} parent=103 // pred_check_branch
          %332 = sbr.rel (%p330) target = $region108
        $region107: #{_graph_loss_impl.1} parent=103 // pred_region
          _
        $region108: #{_graph_loss_impl.1} parent=103 // pred_fallthru
          _
        %s333 = sand.u32 %s56, 1
        %s334 = sand.u32 %s56, 1
        %s335 = smul.addr %s334, 16
        %s336 = scalar_lea.vmem [#allocation5], %s335
        // Predicated region
        $region109: #{_graph_loss_impl.1} parent=103 // pred_check
          %p337 = pneg %p69
        $region110: #{_graph_loss_impl.1} parent=103 // pred_check_branch
          %339 = sbr.rel (%p337) target = $region112
        $region111: #{_graph_loss_impl.1} parent=103 // pred_region
          _
        $region112: #{_graph_loss_impl.1} parent=103 // pred_fallthru
          _
        %s340 = sand.u32 %s82, 1
        %s341 = scalar_lea.sflag [#allocation7], %s340
        %s342 = sand.u32 %s82, 1
        %s343 = smul.addr %s342, 2048
        %s344 = scalar_lea.vmem [#allocation6], %s343
        // Predicated region
        $region113: #{_graph_loss_impl.1} parent=103 // pred_check
          %p345 = pneg %p95
        $region114: #{_graph_loss_impl.1} parent=103 // pred_check_branch
          %347 = sbr.rel (%p345) target = $region116
        $region115: #{_graph_loss_impl.1} parent=103 // pred_region
          %348 = dma.done %s341, 32768
        $region116: #{_graph_loss_impl.1} parent=103 // pred_fallthru
          _
        %s349 = sand.u32 %s30, 1
        %s350 = sand.u32 %s30, 1
        %s351 = smul.addr %s350, 16
        %s352 = scalar_lea.vmem [#allocation4], %s351
        %p353 = pneg %p43
        %p354 = pneg %p40
        %s355 = sand.u32 %s56, 1
        %s356 = sand.u32 %s56, 1
        %s357 = smul.addr %s356, 16
        %s358 = scalar_lea.vmem [#allocation5], %s357
        %p359 = pneg %p69
        %p360 = pneg %p66
        %s361 = sand.u32 %s82, 1
        %s362 = scalar_lea.sflag [#allocation7], %s361
        %s363 = sand.u32 %s82, 1
        %s364 = smul.addr %s363, 2048
        %s365 = scalar_lea.vmem [#allocation6], %s364
        %p366 = pneg %p95
        %p367 = pneg %p92
        %p368 = scmp.lt.s32.totalorder %s22, 2
        %s369 = scalar_select %p368, %s22, 2
        %s370 = scalar_lea.vmem %s4, %s369
        %p371 = pneg %p121
        %p372 = pneg %p118
        %p373 = pneg %p147
        %p374 = pneg %p144
        %p375 = scmp.lt.s32.totalorder %s22, 2
        %s376 = scalar_select %p375, %s22, 2
        %s377 = scalar_lea.vmem %s5, %s376
        %p378 = pneg %p173
        %p379 = pneg %p170
        %p380 = scmp.lt.s32.totalorder %s22, 2
        %s381 = scalar_select %p380, %s22, 2
        %s382 = scalar_lea.vmem %s6, %s381
        %s383 = smul.u32 128, %s22
        %s384 = ssub.s32 300, %s383
        %p385 = scmp.lt.s32.totalorder %s384, 128
        %s386 = scalar_select %p385, %s384, 128
        %s387 = smul.u32 128, %s386
        %s388 = smul.u32 %s387, 2
        %p389 = scmp.lt.s32.totalorder %s22, 2
        %s390 = scalar_select %p389, %s22, 2
        %s391 = scalar_lea.vmem %s4, %s390
        %p392 = scmp.lt.s32.totalorder %s22, 2
        %s393 = scalar_select %p392, %s22, 2
        %s394 = scalar_lea.vmem %s5, %s393
        %p395 = scmp.lt.s32.totalorder %s22, 2
        %s396 = scalar_select %p395, %s22, 2
        %s397 = scalar_lea.vmem %s6, %s396
        %v398 = vld [vmem:[%s329] sm:$0xff]
        %v399 = vld [vmem:[%s329 + $0x8] sm:$0x3]
        %v400 = vld [vmem:[%s336] sm:$0xff]
        %v401 = vld [vmem:[%s336 + $0x8] sm:$0x3]
        %v402 = vld [vmem:[%s344] sm:$0xff]
        %v403 = vld [vmem:[%s344 + $0x8] sm:$0xff]
        %v404 = vld [vmem:[%s344 + $0x10] sm:$0xff]
        %v405 = vld [vmem:[%s344 + $0x18] sm:$0xff]
        %v406 = vld [vmem:[%s344 + $0x20] sm:$0xff]
        %v407 = vld [vmem:[%s344 + $0x28] sm:$0xff]
        %v408 = vld [vmem:[%s344 + $0x30] sm:$0xff]
        %v409 = vld [vmem:[%s344 + $0x38] sm:$0xff]
        %v410 = vld [vmem:[%s344 + $0x40] sm:$0xff]
        %v411 = vld [vmem:[%s344 + $0x48] sm:$0xff]
        %v412 = vld [vmem:[%s344 + $0x50] sm:$0xff]
        %v413 = vld [vmem:[%s344 + $0x58] sm:$0xff]
        %v414 = vld [vmem:[%s344 + $0x60] sm:$0xff]
        %v415 = vld [vmem:[%s344 + $0x68] sm:$0xff]
        %v416 = vld [vmem:[%s344 + $0x70] sm:$0xff]
        %v417 = vld [vmem:[%s344 + $0x78] sm:$0xff]
        %v418 = vld [vmem:[%s344 + $0x80] sm:$0xff]
        %v419 = vld [vmem:[%s344 + $0x88] sm:$0xff]
        %v420 = vld [vmem:[%s344 + $0x90] sm:$0xff]
        %v421 = vld [vmem:[%s344 + $0x98] sm:$0xff]
        %v422 = vld [vmem:[%s344 + $0xa0] sm:$0xff]
        %v423 = vld [vmem:[%s344 + $0xa8] sm:$0xff]
        %v424 = vld [vmem:[%s344 + $0xb0] sm:$0xff]
        %v425 = vld [vmem:[%s344 + $0xb8] sm:$0xff]
        %v426 = vld [vmem:[%s344 + $0xc0] sm:$0xff]
        %v427 = vld [vmem:[%s344 + $0xc8] sm:$0xff]
        %v428 = vld [vmem:[%s344 + $0xd0] sm:$0xff]
        %v429 = vld [vmem:[%s344 + $0xd8] sm:$0xff]
        %v430 = vld [vmem:[%s344 + $0xe0] sm:$0xff]
        %v431 = vld [vmem:[%s344 + $0xe8] sm:$0xff]
        %v432 = vld [vmem:[%s344 + $0xf0] sm:$0xff]
        %v433 = vld [vmem:[%s344 + $0xf8] sm:$0xff]
        %v434 = vld [vmem:[%s344 + $0x100] sm:$0xff]
        %v435 = vld [vmem:[%s344 + $0x108] sm:$0xff]
        %v436 = vld [vmem:[%s344 + $0x110] sm:$0xff]
        %v437 = vld [vmem:[%s344 + $0x118] sm:$0xff]
        %v438 = vld [vmem:[%s344 + $0x120] sm:$0xff]
        %v439 = vld [vmem:[%s344 + $0x128] sm:$0xff]
        %v440 = vld [vmem:[%s344 + $0x130] sm:$0xff]
        %v441 = vld [vmem:[%s344 + $0x138] sm:$0xff]
        %v442 = vld [vmem:[%s344 + $0x140] sm:$0xff]
        %v443 = vld [vmem:[%s344 + $0x148] sm:$0xff]
        %v444 = vld [vmem:[%s344 + $0x150] sm:$0xff]
        %v445 = vld [vmem:[%s344 + $0x158] sm:$0xff]
        %v446 = vld [vmem:[%s344 + $0x160] sm:$0xff]
        %v447 = vld [vmem:[%s344 + $0x168] sm:$0xff]
        %v448 = vld [vmem:[%s344 + $0x170] sm:$0xff]
        %v449 = vld [vmem:[%s344 + $0x178] sm:$0xff]
        %v450 = vld [vmem:[%s344 + $0x180] sm:$0xff]
        %v451 = vld [vmem:[%s344 + $0x188] sm:$0xff]
        %v452 = vld [vmem:[%s344 + $0x190] sm:$0xff]
        %v453 = vld [vmem:[%s344 + $0x198] sm:$0xff]
        %v454 = vld [vmem:[%s344 + $0x1a0] sm:$0xff]
        %v455 = vld [vmem:[%s344 + $0x1a8] sm:$0xff]
        %v456 = vld [vmem:[%s344 + $0x1b0] sm:$0xff]
        %v457 = vld [vmem:[%s344 + $0x1b8] sm:$0xff]
        %v458 = vld [vmem:[%s344 + $0x1c0] sm:$0xff]
        %v459 = vld [vmem:[%s344 + $0x1c8] sm:$0xff]
        %v460 = vld [vmem:[%s344 + $0x1d0] sm:$0xff]
        %v461 = vld [vmem:[%s344 + $0x1d8] sm:$0xff]
        %v462 = vld [vmem:[%s344 + $0x1e0] sm:$0xff]
        %v463 = vld [vmem:[%s344 + $0x1e8] sm:$0xff]
        %v464 = vld [vmem:[%s344 + $0x1f0] sm:$0xff]
        %v465 = vld [vmem:[%s344 + $0x1f8] sm:$0xff]
        %v466 = vld [vmem:[%s344 + $0x200] sm:$0xff]
        %v467 = vld [vmem:[%s344 + $0x208] sm:$0xff]
        %v468 = vld [vmem:[%s344 + $0x210] sm:$0xff]
        %v469 = vld [vmem:[%s344 + $0x218] sm:$0xff]
        %v470 = vld [vmem:[%s344 + $0x220] sm:$0xff]
        %v471 = vld [vmem:[%s344 + $0x228] sm:$0xff]
        %v472 = vld [vmem:[%s344 + $0x230] sm:$0xff]
        %v473 = vld [vmem:[%s344 + $0x238] sm:$0xff]
        %v474 = vld [vmem:[%s344 + $0x240] sm:$0xff]
        %v475 = vld [vmem:[%s344 + $0x248] sm:$0xff]
        %v476 = vld [vmem:[%s344 + $0x250] sm:$0xff]
        %v477 = vld [vmem:[%s344 + $0x258] sm:$0xff]
        %v478 = vld [vmem:[%s344 + $0x260] sm:$0xff]
        %v479 = vld [vmem:[%s344 + $0x268] sm:$0xff]
        %v480 = vld [vmem:[%s344 + $0x270] sm:$0xff]
        %v481 = vld [vmem:[%s344 + $0x278] sm:$0xff]
        %v482 = vld [vmem:[%s344 + $0x280] sm:$0xff]
        %v483 = vld [vmem:[%s344 + $0x288] sm:$0xff]
        %v484 = vld [vmem:[%s344 + $0x290] sm:$0xff]
        %v485 = vld [vmem:[%s344 + $0x298] sm:$0xff]
        %v486 = vld [vmem:[%s344 + $0x2a0] sm:$0xff]
        %v487 = vld [vmem:[%s344 + $0x2a8] sm:$0xff]
        %v488 = vld [vmem:[%s344 + $0x2b0] sm:$0xff]
        %v489 = vld [vmem:[%s344 + $0x2b8] sm:$0xff]
        %v490 = vld [vmem:[%s344 + $0x2c0] sm:$0xff]
        %v491 = vld [vmem:[%s344 + $0x2c8] sm:$0xff]
        %v492 = vld [vmem:[%s344 + $0x2d0] sm:$0xff]
        %v493 = vld [vmem:[%s344 + $0x2d8] sm:$0xff]
        %v494 = vld [vmem:[%s344 + $0x2e0] sm:$0xff]
        %v495 = vld [vmem:[%s344 + $0x2e8] sm:$0xff]
        %v496 = vld [vmem:[%s344 + $0x2f0] sm:$0xff]
        %v497 = vld [vmem:[%s344 + $0x2f8] sm:$0xff]
        %v498 = vld [vmem:[%s344 + $0x300] sm:$0xff]
        %v499 = vld [vmem:[%s344 + $0x308] sm:$0xff]
        %v500 = vld [vmem:[%s344 + $0x310] sm:$0xff]
        %v501 = vld [vmem:[%s344 + $0x318] sm:$0xff]
        %v502 = vld [vmem:[%s344 + $0x320] sm:$0xff]
        %v503 = vld [vmem:[%s344 + $0x328] sm:$0xff]
        %v504 = vld [vmem:[%s344 + $0x330] sm:$0xff]
        %v505 = vld [vmem:[%s344 + $0x338] sm:$0xff]
        %v506 = vld [vmem:[%s344 + $0x340] sm:$0xff]
        %v507 = vld [vmem:[%s344 + $0x348] sm:$0xff]
        %v508 = vld [vmem:[%s344 + $0x350] sm:$0xff]
        %v509 = vld [vmem:[%s344 + $0x358] sm:$0xff]
        %v510 = vld [vmem:[%s344 + $0x360] sm:$0xff]
        %v511 = vld [vmem:[%s344 + $0x368] sm:$0xff]
        %v512 = vld [vmem:[%s344 + $0x370] sm:$0xff]
        %v513 = vld [vmem:[%s344 + $0x378] sm:$0xff]
        %v514 = vld [vmem:[%s344 + $0x380] sm:$0xff]
        %v515 = vld [vmem:[%s344 + $0x388] sm:$0xff]
        %v516 = vld [vmem:[%s344 + $0x390] sm:$0xff]
        %v517 = vld [vmem:[%s344 + $0x398] sm:$0xff]
        %v518 = vld [vmem:[%s344 + $0x3a0] sm:$0xff]
        %v519 = vld [vmem:[%s344 + $0x3a8] sm:$0xff]
        %v520 = vld [vmem:[%s344 + $0x3b0] sm:$0xff]
        %v521 = vld [vmem:[%s344 + $0x3b8] sm:$0xff]
        %v522 = vld [vmem:[%s344 + $0x3c0] sm:$0xff]
        %v523 = vld [vmem:[%s344 + $0x3c8] sm:$0xff]
        %v524 = vld [vmem:[%s344 + $0x3d0] sm:$0xff]
        %v525 = vld [vmem:[%s344 + $0x3d8] sm:$0xff]
        %v526 = vld [vmem:[%s344 + $0x3e0] sm:$0xff]
        %v527 = vld [vmem:[%s344 + $0x3e8] sm:$0xff]
        %v528 = vld [vmem:[%s344 + $0x3f0] sm:$0xff]
        %v529 = vld [vmem:[%s344 + $0x3f8] sm:$0xff]
        %v530 = vld [vmem:[%s344 + $0x400] sm:$0xff]
        %v531 = vld [vmem:[%s344 + $0x408] sm:$0xff]
        %v532 = vld [vmem:[%s344 + $0x410] sm:$0xff]
        %v533 = vld [vmem:[%s344 + $0x418] sm:$0xff]
        %v534 = vld [vmem:[%s344 + $0x420] sm:$0xff]
        %v535 = vld [vmem:[%s344 + $0x428] sm:$0xff]
        %v536 = vld [vmem:[%s344 + $0x430] sm:$0xff]
        %v537 = vld [vmem:[%s344 + $0x438] sm:$0xff]
        %v538 = vld [vmem:[%s344 + $0x440] sm:$0xff]
        %v539 = vld [vmem:[%s344 + $0x448] sm:$0xff]
        %v540 = vld [vmem:[%s344 + $0x450] sm:$0xff]
        %v541 = vld [vmem:[%s344 + $0x458] sm:$0xff]
        %v542 = vld [vmem:[%s344 + $0x460] sm:$0xff]
        %v543 = vld [vmem:[%s344 + $0x468] sm:$0xff]
        %v544 = vld [vmem:[%s344 + $0x470] sm:$0xff]
        %v545 = vld [vmem:[%s344 + $0x478] sm:$0xff]
        %v546 = vld [vmem:[%s344 + $0x480] sm:$0xff]
        %v547 = vld [vmem:[%s344 + $0x488] sm:$0xff]
        %v548 = vld [vmem:[%s344 + $0x490] sm:$0xff]
        %v549 = vld [vmem:[%s344 + $0x498] sm:$0xff]
        %v550 = vld [vmem:[%s344 + $0x4a0] sm:$0xff]
        %v551 = vld [vmem:[%s344 + $0x4a8] sm:$0xff]
        %v552 = vld [vmem:[%s344 + $0x4b0] sm:$0xff]
        %v553 = vld [vmem:[%s344 + $0x4b8] sm:$0xff]
        %v554 = vld [vmem:[%s344 + $0x4c0] sm:$0xff]
        %v555 = vld [vmem:[%s344 + $0x4c8] sm:$0xff]
        %v556 = vld [vmem:[%s344 + $0x4d0] sm:$0xff]
        %v557 = vld [vmem:[%s344 + $0x4d8] sm:$0xff]
        %v558 = vld [vmem:[%s344 + $0x4e0] sm:$0xff]
        %v559 = vld [vmem:[%s344 + $0x4e8] sm:$0xff]
        %v560 = vld [vmem:[%s344 + $0x4f0] sm:$0xff]
        %v561 = vld [vmem:[%s344 + $0x4f8] sm:$0xff]
        %v562 = vld [vmem:[%s344 + $0x500] sm:$0xff]
        %v563 = vld [vmem:[%s344 + $0x508] sm:$0xff]
        %v564 = vld [vmem:[%s344 + $0x510] sm:$0xff]
        %v565 = vld [vmem:[%s344 + $0x518] sm:$0xff]
        %v566 = vld [vmem:[%s344 + $0x520] sm:$0xff]
        %v567 = vld [vmem:[%s344 + $0x528] sm:$0xff]
        %v568 = vld [vmem:[%s344 + $0x530] sm:$0xff]
        %v569 = vld [vmem:[%s344 + $0x538] sm:$0xff]
        %v570 = vld [vmem:[%s344 + $0x540] sm:$0xff]
        %v571 = vld [vmem:[%s344 + $0x548] sm:$0xff]
        %v572 = vld [vmem:[%s344 + $0x550] sm:$0xff]
        %v573 = vld [vmem:[%s344 + $0x558] sm:$0xff]
        %v574 = vld [vmem:[%s344 + $0x560] sm:$0xff]
        %v575 = vld [vmem:[%s344 + $0x568] sm:$0xff]
        %v576 = vld [vmem:[%s344 + $0x570] sm:$0xff]
        %v577 = vld [vmem:[%s344 + $0x578] sm:$0xff]
        %v578 = vld [vmem:[%s344 + $0x580] sm:$0xff]
        %v579 = vld [vmem:[%s344 + $0x588] sm:$0xff]
        %v580 = vld [vmem:[%s344 + $0x590] sm:$0xff]
        %v581 = vld [vmem:[%s344 + $0x598] sm:$0xff]
        %v582 = vld [vmem:[%s344 + $0x5a0] sm:$0xff]
        %v583 = vld [vmem:[%s344 + $0x5a8] sm:$0xff]
        %v584 = vld [vmem:[%s344 + $0x5b0] sm:$0xff]
        %v585 = vld [vmem:[%s344 + $0x5b8] sm:$0xff]
        %v586 = vld [vmem:[%s344 + $0x5c0] sm:$0xff]
        %v587 = vld [vmem:[%s344 + $0x5c8] sm:$0xff]
        %v588 = vld [vmem:[%s344 + $0x5d0] sm:$0xff]
        %v589 = vld [vmem:[%s344 + $0x5d8] sm:$0xff]
        %v590 = vld [vmem:[%s344 + $0x5e0] sm:$0xff]
        %v591 = vld [vmem:[%s344 + $0x5e8] sm:$0xff]
        %v592 = vld [vmem:[%s344 + $0x5f0] sm:$0xff]
        %v593 = vld [vmem:[%s344 + $0x5f8] sm:$0xff]
        %v594 = vld [vmem:[%s344 + $0x600] sm:$0xff]
        %v595 = vld [vmem:[%s344 + $0x608] sm:$0xff]
        %v596 = vld [vmem:[%s344 + $0x610] sm:$0xff]
        %v597 = vld [vmem:[%s344 + $0x618] sm:$0xff]
        %v598 = vld [vmem:[%s344 + $0x620] sm:$0xff]
        %v599 = vld [vmem:[%s344 + $0x628] sm:$0xff]
        %v600 = vld [vmem:[%s344 + $0x630] sm:$0xff]
        %v601 = vld [vmem:[%s344 + $0x638] sm:$0xff]
        %v602 = vld [vmem:[%s344 + $0x640] sm:$0xff]
        %v603 = vld [vmem:[%s344 + $0x648] sm:$0xff]
        %v604 = vld [vmem:[%s344 + $0x650] sm:$0xff]
        %v605 = vld [vmem:[%s344 + $0x658] sm:$0xff]
        %v606 = vld [vmem:[%s344 + $0x660] sm:$0xff]
        %v607 = vld [vmem:[%s344 + $0x668] sm:$0xff]
        %v608 = vld [vmem:[%s344 + $0x670] sm:$0xff]
        %v609 = vld [vmem:[%s344 + $0x678] sm:$0xff]
        %v610 = vld [vmem:[%s344 + $0x680] sm:$0xff]
        %v611 = vld [vmem:[%s344 + $0x688] sm:$0xff]
        %v612 = vld [vmem:[%s344 + $0x690] sm:$0xff]
        %v613 = vld [vmem:[%s344 + $0x698] sm:$0xff]
        %v614 = vld [vmem:[%s344 + $0x6a0] sm:$0xff]
        %v615 = vld [vmem:[%s344 + $0x6a8] sm:$0xff]
        %v616 = vld [vmem:[%s344 + $0x6b0] sm:$0xff]
        %v617 = vld [vmem:[%s344 + $0x6b8] sm:$0xff]
        %v618 = vld [vmem:[%s344 + $0x6c0] sm:$0xff]
        %v619 = vld [vmem:[%s344 + $0x6c8] sm:$0xff]
        %v620 = vld [vmem:[%s344 + $0x6d0] sm:$0xff]
        %v621 = vld [vmem:[%s344 + $0x6d8] sm:$0xff]
        %v622 = vld [vmem:[%s344 + $0x6e0] sm:$0xff]
        %v623 = vld [vmem:[%s344 + $0x6e8] sm:$0xff]
        %v624 = vld [vmem:[%s344 + $0x6f0] sm:$0xff]
        %v625 = vld [vmem:[%s344 + $0x6f8] sm:$0xff]
        %v626 = vld [vmem:[%s344 + $0x700] sm:$0xff]
        %v627 = vld [vmem:[%s344 + $0x708] sm:$0xff]
        %v628 = vld [vmem:[%s344 + $0x710] sm:$0xff]
        %v629 = vld [vmem:[%s344 + $0x718] sm:$0xff]
        %v630 = vld [vmem:[%s344 + $0x720] sm:$0xff]
        %v631 = vld [vmem:[%s344 + $0x728] sm:$0xff]
        %v632 = vld [vmem:[%s344 + $0x730] sm:$0xff]
        %v633 = vld [vmem:[%s344 + $0x738] sm:$0xff]
        %v634 = vld [vmem:[%s344 + $0x740] sm:$0xff]
        %v635 = vld [vmem:[%s344 + $0x748] sm:$0xff]
        %v636 = vld [vmem:[%s344 + $0x750] sm:$0xff]
        %v637 = vld [vmem:[%s344 + $0x758] sm:$0xff]
        %v638 = vld [vmem:[%s344 + $0x760] sm:$0xff]
        %v639 = vld [vmem:[%s344 + $0x768] sm:$0xff]
        %v640 = vld [vmem:[%s344 + $0x770] sm:$0xff]
        %v641 = vld [vmem:[%s344 + $0x778] sm:$0xff]
        %v642 = vld [vmem:[%s344 + $0x780] sm:$0xff]
        %v643 = vld [vmem:[%s344 + $0x788] sm:$0xff]
        %v644 = vld [vmem:[%s344 + $0x790] sm:$0xff]
        %v645 = vld [vmem:[%s344 + $0x798] sm:$0xff]
        %v646 = vld [vmem:[%s344 + $0x7a0] sm:$0xff]
        %v647 = vld [vmem:[%s344 + $0x7a8] sm:$0xff]
        %v648 = vld [vmem:[%s344 + $0x7b0] sm:$0xff]
        %v649 = vld [vmem:[%s344 + $0x7b8] sm:$0xff]
        %v650 = vld [vmem:[%s344 + $0x7c0] sm:$0xff]
        %v651 = vld [vmem:[%s344 + $0x7c8] sm:$0xff]
        %v652 = vld [vmem:[%s344 + $0x7d0] sm:$0xff]
        %v653 = vld [vmem:[%s344 + $0x7d8] sm:$0xff]
        %v654 = vld [vmem:[%s344 + $0x7e0] sm:$0xff]
        %v655 = vld [vmem:[%s344 + $0x7e8] sm:$0xff]
        %v656 = vld [vmem:[%s344 + $0x7f0] sm:$0xff]
        %v657 = vld [vmem:[%s344 + $0x7f8] sm:$0xff]
        %v658 = vld [vmem:[%s391] sm:$0x1]
        %v659 = vlaneseq
        %v660 = vshrl.u32 %v659, 7
        %v661 = vadd.s32 %v660, 8
        %vm662 = vcmask 1041408
        %v663 = vsel %vm662, %v399, -inf
        %v664 = vmax.f32 %v398, %v663
        %v665 = vrot.slane %v664, 4
        %v666 = vmax.f32 %v664, %v665
        %v667 = vrot.slane %v666, 2
        %v668 = vmax.f32 %v666, %v667
        %v669 = vrot.slane %v668, 1
        %v670 = vmax.f32 %v668, %v669
        %vm671 = vcmp.eq.f32.partialorder %v398, %v670
        %vm672 = vcmp.eq.f32.partialorder %v399, %v670
        %v673 = vsel %vm671, %v660, 10
        %v674 = vsel %vm672, %v661, 10
        %v675 = vsel %vm662, %v674, 2147483647
        %vm676 = vcmp.lt.s32.totalorder %v673, %v675
        %v677 = vsel %vm676, %v673, %v675
        %v678 = vrot.slane %v677, 4
        %vm679 = vcmp.lt.s32.totalorder %v677, %v678
        %v680 = vsel %vm679, %v677, %v678
        %v681 = vrot.slane %v680, 2
        %vm682 = vcmp.lt.s32.totalorder %v680, %v681
        %v683 = vsel %vm682, %v680, %v681
        %v684 = vrot.slane %v683, 1
        %vm685 = vcmp.lt.s32.totalorder %v683, %v684
        %v686 = vsel %vm685, %v683, %v684
        %v687 = vsel %vm662, %v401, -inf
        %v688 = vmax.f32 %v400, %v687
        %v689 = vrot.slane %v688, 4
        %v690 = vmax.f32 %v688, %v689
        %v691 = vrot.slane %v690, 2
        %v692 = vmax.f32 %v690, %v691
        %v693 = vrot.slane %v692, 1
        %v694 = vmax.f32 %v692, %v693
        %vm695 = vcmp.eq.f32.partialorder %v400, %v694
        %vm696 = vcmp.eq.f32.partialorder %v401, %v694
        %v697 = vsel %vm695, %v660, 10
        %v698 = vsel %vm696, %v661, 10
        %v699 = vsel %vm662, %v698, 2147483647
        %vm700 = vcmp.lt.s32.totalorder %v697, %v699
        %v701 = vsel %vm700, %v697, %v699
        %v702 = vrot.slane %v701, 4
        %vm703 = vcmp.lt.s32.totalorder %v701, %v702
        %v704 = vsel %vm703, %v701, %v702
        %v705 = vrot.slane %v704, 2
        %vm706 = vcmp.lt.s32.totalorder %v704, %v705
        %v707 = vsel %vm706, %v704, %v705
        %v708 = vrot.slane %v707, 1
        %vm709 = vcmp.lt.s32.totalorder %v707, %v708
        %v710 = vsel %vm709, %v707, %v708
        %vm711 = vcmp.eq.s32.totalorder %v686, %v710
        %v712 = vsel %vm711, 1, 0
        %v713 = vcvt.s32.f32 %v712
        %v714 = vmul.f32 %v402, 1.442695
        %v715 = vpow.pop %v714
        %v716 = vmul.f32 %v403, 1.442695
        %v717 = vpow.pop %v716
        %v718 = vmul.f32 %v404, 1.442695
        %v719 = vpow.pop %v718
        %v720 = vmul.f32 %v405, 1.442695
        %v721 = vpow.pop %v720
        %v722 = vmul.f32 %v406, 1.442695
        %v723 = vpow.pop %v722
        %v724 = vmul.f32 %v407, 1.442695
        %v725 = vpow.pop %v724
        %v726 = vmul.f32 %v408, 1.442695
        %v727 = vpow.pop %v726
        %v728 = vmul.f32 %v409, 1.442695
        %v729 = vpow.pop %v728
        %v730 = vmul.f32 %v410, 1.442695
        %v731 = vpow.pop %v730
        %v732 = vmul.f32 %v411, 1.442695
        %v733 = vpow.pop %v732
        %v734 = vmul.f32 %v412, 1.442695
        %v735 = vpow.pop %v734
        %v736 = vmul.f32 %v413, 1.442695
        %v737 = vpow.pop %v736
        %v738 = vmul.f32 %v414, 1.442695
        %v739 = vpow.pop %v738
        %v740 = vmul.f32 %v415, 1.442695
        %v741 = vpow.pop %v740
        %v742 = vmul.f32 %v416, 1.442695
        %v743 = vpow.pop %v742
        %v744 = vmul.f32 %v417, 1.442695
        %v745 = vpow.pop %v744
        %v746 = vmul.f32 %v418, 1.442695
        %v747 = vpow.pop %v746
        %v748 = vmul.f32 %v419, 1.442695
        %v749 = vpow.pop %v748
        %v750 = vmul.f32 %v420, 1.442695
        %v751 = vpow.pop %v750
        %v752 = vmul.f32 %v421, 1.442695
        %v753 = vpow.pop %v752
        %v754 = vmul.f32 %v422, 1.442695
        %v755 = vpow.pop %v754
        %v756 = vmul.f32 %v423, 1.442695
        %v757 = vpow.pop %v756
        %v758 = vmul.f32 %v424, 1.442695
        %v759 = vpow.pop %v758
        %v760 = vmul.f32 %v425, 1.442695
        %v761 = vpow.pop %v760
        %v762 = vmul.f32 %v426, 1.442695
        %v763 = vpow.pop %v762
        %v764 = vmul.f32 %v427, 1.442695
        %v765 = vpow.pop %v764
        %v766 = vmul.f32 %v428, 1.442695
        %v767 = vpow.pop %v766
        %v768 = vmul.f32 %v429, 1.442695
        %v769 = vpow.pop %v768
        %v770 = vmul.f32 %v430, 1.442695
        %v771 = vpow.pop %v770
        %v772 = vmul.f32 %v431, 1.442695
        %v773 = vpow.pop %v772
        %v774 = vmul.f32 %v432, 1.442695
        %v775 = vpow.pop %v774
        %v776 = vmul.f32 %v433, 1.442695
        %v777 = vpow.pop %v776
        %v778 = vmul.f32 %v434, 1.442695
        %v779 = vpow.pop %v778
        %v780 = vmul.f32 %v435, 1.442695
        %v781 = vpow.pop %v780
        %v782 = vmul.f32 %v436, 1.442695
        %v783 = vpow.pop %v782
        %v784 = vmul.f32 %v437, 1.442695
        %v785 = vpow.pop %v784
        %v786 = vmul.f32 %v438, 1.442695
        %v787 = vpow.pop %v786
        %v788 = vmul.f32 %v439, 1.442695
        %v789 = vpow.pop %v788
        %v790 = vmul.f32 %v440, 1.442695
        %v791 = vpow.pop %v790
        %v792 = vmul.f32 %v441, 1.442695
        %v793 = vpow.pop %v792
        %v794 = vmul.f32 %v442, 1.442695
        %v795 = vpow.pop %v794
        %v796 = vmul.f32 %v443, 1.442695
        %v797 = vpow.pop %v796
        %v798 = vmul.f32 %v444, 1.442695
        %v799 = vpow.pop %v798
        %v800 = vmul.f32 %v445, 1.442695
        %v801 = vpow.pop %v800
        %v802 = vmul.f32 %v446, 1.442695
        %v803 = vpow.pop %v802
        %v804 = vmul.f32 %v447, 1.442695
        %v805 = vpow.pop %v804
        %v806 = vmul.f32 %v448, 1.442695
        %v807 = vpow.pop %v806
        %v808 = vmul.f32 %v449, 1.442695
        %v809 = vpow.pop %v808
        %v810 = vmul.f32 %v450, 1.442695
        %v811 = vpow.pop %v810
        %v812 = vmul.f32 %v451, 1.442695
        %v813 = vpow.pop %v812
        %v814 = vmul.f32 %v452, 1.442695
        %v815 = vpow.pop %v814
        %v816 = vmul.f32 %v453, 1.442695
        %v817 = vpow.pop %v816
        %v818 = vmul.f32 %v454, 1.442695
        %v819 = vpow.pop %v818
        %v820 = vmul.f32 %v455, 1.442695
        %v821 = vpow.pop %v820
        %v822 = vmul.f32 %v456, 1.442695
        %v823 = vpow.pop %v822
        %v824 = vmul.f32 %v457, 1.442695
        %v825 = vpow.pop %v824
        %v826 = vmul.f32 %v458, 1.442695
        %v827 = vpow.pop %v826
        %v828 = vmul.f32 %v459, 1.442695
        %v829 = vpow.pop %v828
        %v830 = vmul.f32 %v460, 1.442695
        %v831 = vpow.pop %v830
        %v832 = vmul.f32 %v461, 1.442695
        %v833 = vpow.pop %v832
        %v834 = vmul.f32 %v462, 1.442695
        %v835 = vpow.pop %v834
        %v836 = vmul.f32 %v463, 1.442695
        %v837 = vpow.pop %v836
        %v838 = vmul.f32 %v464, 1.442695
        %v839 = vpow.pop %v838
        %v840 = vmul.f32 %v465, 1.442695
        %v841 = vpow.pop %v840
        %v842 = vmul.f32 %v466, 1.442695
        %v843 = vpow.pop %v842
        %v844 = vmul.f32 %v467, 1.442695
        %v845 = vpow.pop %v844
        %v846 = vmul.f32 %v468, 1.442695
        %v847 = vpow.pop %v846
        %v848 = vmul.f32 %v469, 1.442695
        %v849 = vpow.pop %v848
        %v850 = vmul.f32 %v470, 1.442695
        %v851 = vpow.pop %v850
        %v852 = vmul.f32 %v471, 1.442695
        %v853 = vpow.pop %v852
        %v854 = vmul.f32 %v472, 1.442695
        %v855 = vpow.pop %v854
        %v856 = vmul.f32 %v473, 1.442695
        %v857 = vpow.pop %v856
        %v858 = vmul.f32 %v474, 1.442695
        %v859 = vpow.pop %v858
        %v860 = vmul.f32 %v475, 1.442695
        %v861 = vpow.pop %v860
        %v862 = vmul.f32 %v476, 1.442695
        %v863 = vpow.pop %v862
        %v864 = vmul.f32 %v477, 1.442695
        %v865 = vpow.pop %v864
        %v866 = vmul.f32 %v478, 1.442695
        %v867 = vpow.pop %v866
        %v868 = vmul.f32 %v479, 1.442695
        %v869 = vpow.pop %v868
        %v870 = vmul.f32 %v480, 1.442695
        %v871 = vpow.pop %v870
        %v872 = vmul.f32 %v481, 1.442695
        %v873 = vpow.pop %v872
        %v874 = vmul.f32 %v482, 1.442695
        %v875 = vpow.pop %v874
        %v876 = vmul.f32 %v483, 1.442695
        %v877 = vpow.pop %v876
        %v878 = vmul.f32 %v484, 1.442695
        %v879 = vpow.pop %v878
        %v880 = vmul.f32 %v485, 1.442695
        %v881 = vpow.pop %v880
        %v882 = vmul.f32 %v486, 1.442695
        %v883 = vpow.pop %v882
        %v884 = vmul.f32 %v487, 1.442695
        %v885 = vpow.pop %v884
        %v886 = vmul.f32 %v488, 1.442695
        %v887 = vpow.pop %v886
        %v888 = vmul.f32 %v489, 1.442695
        %v889 = vpow.pop %v888
        %v890 = vmul.f32 %v490, 1.442695
        %v891 = vpow.pop %v890
        %v892 = vmul.f32 %v491, 1.442695
        %v893 = vpow.pop %v892
        %v894 = vmul.f32 %v492, 1.442695
        %v895 = vpow.pop %v894
        %v896 = vmul.f32 %v493, 1.442695
        %v897 = vpow.pop %v896
        %v898 = vmul.f32 %v494, 1.442695
        %v899 = vpow.pop %v898
        %v900 = vmul.f32 %v495, 1.442695
        %v901 = vpow.pop %v900
        %v902 = vmul.f32 %v496, 1.442695
        %v903 = vpow.pop %v902
        %v904 = vmul.f32 %v497, 1.442695
        %v905 = vpow.pop %v904
        %v906 = vmul.f32 %v498, 1.442695
        %v907 = vpow.pop %v906
        %v908 = vmul.f32 %v499, 1.442695
        %v909 = vpow.pop %v908
        %v910 = vmul.f32 %v500, 1.442695
        %v911 = vpow.pop %v910
        %v912 = vmul.f32 %v501, 1.442695
        %v913 = vpow.pop %v912
        %v914 = vmul.f32 %v502, 1.442695
        %v915 = vpow.pop %v914
        %v916 = vmul.f32 %v503, 1.442695
        %v917 = vpow.pop %v916
        %v918 = vmul.f32 %v504, 1.442695
        %v919 = vpow.pop %v918
        %v920 = vmul.f32 %v505, 1.442695
        %v921 = vpow.pop %v920
        %v922 = vmul.f32 %v506, 1.442695
        %v923 = vpow.pop %v922
        %v924 = vmul.f32 %v507, 1.442695
        %v925 = vpow.pop %v924
        %v926 = vmul.f32 %v508, 1.442695
        %v927 = vpow.pop %v926
        %v928 = vmul.f32 %v509, 1.442695
        %v929 = vpow.pop %v928
        %v930 = vmul.f32 %v510, 1.442695
        %v931 = vpow.pop %v930
        %v932 = vmul.f32 %v511, 1.442695
        %v933 = vpow.pop %v932
        %v934 = vmul.f32 %v512, 1.442695
        %v935 = vpow.pop %v934
        %v936 = vmul.f32 %v513, 1.442695
        %v937 = vpow.pop %v936
        %v938 = vmul.f32 %v514, 1.442695
        %v939 = vpow.pop %v938
        %v940 = vmul.f32 %v515, 1.442695
        %v941 = vpow.pop %v940
        %v942 = vmul.f32 %v516, 1.442695
        %v943 = vpow.pop %v942
        %v944 = vmul.f32 %v517, 1.442695
        %v945 = vpow.pop %v944
        %v946 = vmul.f32 %v518, 1.442695
        %v947 = vpow.pop %v946
        %v948 = vmul.f32 %v519, 1.442695
        %v949 = vpow.pop %v948
        %v950 = vmul.f32 %v520, 1.442695
        %v951 = vpow.pop %v950
        %v952 = vmul.f32 %v521, 1.442695
        %v953 = vpow.pop %v952
        %v954 = vmul.f32 %v522, 1.442695
        %v955 = vpow.pop %v954
        %v956 = vmul.f32 %v523, 1.442695
        %v957 = vpow.pop %v956
        %v958 = vmul.f32 %v524, 1.442695
        %v959 = vpow.pop %v958
        %v960 = vmul.f32 %v525, 1.442695
        %v961 = vpow.pop %v960
        %v962 = vmul.f32 %v526, 1.442695
        %v963 = vpow.pop %v962
        %v964 = vmul.f32 %v527, 1.442695
        %v965 = vpow.pop %v964
        %v966 = vmul.f32 %v528, 1.442695
        %v967 = vpow.pop %v966
        %v968 = vmul.f32 %v529, 1.442695
        %v969 = vpow.pop %v968
        %v970 = vmul.f32 %v530, 1.442695
        %v971 = vpow.pop %v970
        %v972 = vmul.f32 %v531, 1.442695
        %v973 = vpow.pop %v972
        %v974 = vmul.f32 %v532, 1.442695
        %v975 = vpow.pop %v974
        %v976 = vmul.f32 %v533, 1.442695
        %v977 = vpow.pop %v976
        %v978 = vmul.f32 %v534, 1.442695
        %v979 = vpow.pop %v978
        %v980 = vmul.f32 %v535, 1.442695
        %v981 = vpow.pop %v980
        %v982 = vmul.f32 %v536, 1.442695
        %v983 = vpow.pop %v982
        %v984 = vmul.f32 %v537, 1.442695
        %v985 = vpow.pop %v984
        %v986 = vmul.f32 %v538, 1.442695
        %v987 = vpow.pop %v986
        %v988 = vmul.f32 %v539, 1.442695
        %v989 = vpow.pop %v988
        %v990 = vmul.f32 %v540, 1.442695
        %v991 = vpow.pop %v990
        %v992 = vmul.f32 %v541, 1.442695
        %v993 = vpow.pop %v992
        %v994 = vmul.f32 %v542, 1.442695
        %v995 = vpow.pop %v994
        %v996 = vmul.f32 %v543, 1.442695
        %v997 = vpow.pop %v996
        %v998 = vmul.f32 %v544, 1.442695
        %v999 = vpow.pop %v998
        %v1000 = vmul.f32 %v545, 1.442695
        %v1001 = vpow.pop %v1000
        %v1002 = vmul.f32 %v546, 1.442695
        %v1003 = vpow.pop %v1002
        %v1004 = vmul.f32 %v547, 1.442695
        %v1005 = vpow.pop %v1004
        %v1006 = vmul.f32 %v548, 1.442695
        %v1007 = vpow.pop %v1006
        %v1008 = vmul.f32 %v549, 1.442695
        %v1009 = vpow.pop %v1008
        %v1010 = vmul.f32 %v550, 1.442695
        %v1011 = vpow.pop %v1010
        %v1012 = vmul.f32 %v551, 1.442695
        %v1013 = vpow.pop %v1012
        %v1014 = vmul.f32 %v552, 1.442695
        %v1015 = vpow.pop %v1014
        %v1016 = vmul.f32 %v553, 1.442695
        %v1017 = vpow.pop %v1016
        %v1018 = vmul.f32 %v554, 1.442695
        %v1019 = vpow.pop %v1018
        %v1020 = vmul.f32 %v555, 1.442695
        %v1021 = vpow.pop %v1020
        %v1022 = vmul.f32 %v556, 1.442695
        %v1023 = vpow.pop %v1022
        %v1024 = vmul.f32 %v557, 1.442695
        %v1025 = vpow.pop %v1024
        %v1026 = vmul.f32 %v558, 1.442695
        %v1027 = vpow.pop %v1026
        %v1028 = vmul.f32 %v559, 1.442695
        %v1029 = vpow.pop %v1028
        %v1030 = vmul.f32 %v560, 1.442695
        %v1031 = vpow.pop %v1030
        %v1032 = vmul.f32 %v561, 1.442695
        %v1033 = vpow.pop %v1032
        %v1034 = vmul.f32 %v562, 1.442695
        %v1035 = vpow.pop %v1034
        %v1036 = vmul.f32 %v563, 1.442695
        %v1037 = vpow.pop %v1036
        %v1038 = vmul.f32 %v564, 1.442695
        %v1039 = vpow.pop %v1038
        %v1040 = vmul.f32 %v565, 1.442695
        %v1041 = vpow.pop %v1040
        %v1042 = vmul.f32 %v566, 1.442695
        %v1043 = vpow.pop %v1042
        %v1044 = vmul.f32 %v567, 1.442695
        %v1045 = vpow.pop %v1044
        %v1046 = vmul.f32 %v568, 1.442695
        %v1047 = vpow.pop %v1046
        %v1048 = vmul.f32 %v569, 1.442695
        %v1049 = vpow.pop %v1048
        %v1050 = vmul.f32 %v570, 1.442695
        %v1051 = vpow.pop %v1050
        %v1052 = vmul.f32 %v571, 1.442695
        %v1053 = vpow.pop %v1052
        %v1054 = vmul.f32 %v572, 1.442695
        %v1055 = vpow.pop %v1054
        %v1056 = vmul.f32 %v573, 1.442695
        %v1057 = vpow.pop %v1056
        %v1058 = vmul.f32 %v574, 1.442695
        %v1059 = vpow.pop %v1058
        %v1060 = vmul.f32 %v575, 1.442695
        %v1061 = vpow.pop %v1060
        %v1062 = vmul.f32 %v576, 1.442695
        %v1063 = vpow.pop %v1062
        %v1064 = vmul.f32 %v577, 1.442695
        %v1065 = vpow.pop %v1064
        %v1066 = vmul.f32 %v578, 1.442695
        %v1067 = vpow.pop %v1066
        %v1068 = vmul.f32 %v579, 1.442695
        %v1069 = vpow.pop %v1068
        %v1070 = vmul.f32 %v580, 1.442695
        %v1071 = vpow.pop %v1070
        %v1072 = vmul.f32 %v581, 1.442695
        %v1073 = vpow.pop %v1072
        %v1074 = vmul.f32 %v582, 1.442695
        %v1075 = vpow.pop %v1074
        %v1076 = vmul.f32 %v583, 1.442695
        %v1077 = vpow.pop %v1076
        %v1078 = vmul.f32 %v584, 1.442695
        %v1079 = vpow.pop %v1078
        %v1080 = vmul.f32 %v585, 1.442695
        %v1081 = vpow.pop %v1080
        %v1082 = vmul.f32 %v586, 1.442695
        %v1083 = vpow.pop %v1082
        %v1084 = vmul.f32 %v587, 1.442695
        %v1085 = vpow.pop %v1084
        %v1086 = vmul.f32 %v588, 1.442695
        %v1087 = vpow.pop %v1086
        %v1088 = vmul.f32 %v589, 1.442695
        %v1089 = vpow.pop %v1088
        %v1090 = vmul.f32 %v590, 1.442695
        %v1091 = vpow.pop %v1090
        %v1092 = vmul.f32 %v591, 1.442695
        %v1093 = vpow.pop %v1092
        %v1094 = vmul.f32 %v592, 1.442695
        %v1095 = vpow.pop %v1094
        %v1096 = vmul.f32 %v593, 1.442695
        %v1097 = vpow.pop %v1096
        %v1098 = vmul.f32 %v594, 1.442695
        %v1099 = vpow.pop %v1098
        %v1100 = vmul.f32 %v595, 1.442695
        %v1101 = vpow.pop %v1100
        %v1102 = vmul.f32 %v596, 1.442695
        %v1103 = vpow.pop %v1102
        %v1104 = vmul.f32 %v597, 1.442695
        %v1105 = vpow.pop %v1104
        %v1106 = vmul.f32 %v598, 1.442695
        %v1107 = vpow.pop %v1106
        %v1108 = vmul.f32 %v599, 1.442695
        %v1109 = vpow.pop %v1108
        %v1110 = vmul.f32 %v600, 1.442695
        %v1111 = vpow.pop %v1110
        %v1112 = vmul.f32 %v601, 1.442695
        %v1113 = vpow.pop %v1112
        %v1114 = vmul.f32 %v602, 1.442695
        %v1115 = vpow.pop %v1114
        %v1116 = vmul.f32 %v603, 1.442695
        %v1117 = vpow.pop %v1116
        %v1118 = vmul.f32 %v604, 1.442695
        %v1119 = vpow.pop %v1118
        %v1120 = vmul.f32 %v605, 1.442695
        %v1121 = vpow.pop %v1120
        %v1122 = vmul.f32 %v606, 1.442695
        %v1123 = vpow.pop %v1122
        %v1124 = vmul.f32 %v607, 1.442695
        %v1125 = vpow.pop %v1124
        %v1126 = vmul.f32 %v608, 1.442695
        %v1127 = vpow.pop %v1126
        %v1128 = vmul.f32 %v609, 1.442695
        %v1129 = vpow.pop %v1128
        %v1130 = vmul.f32 %v610, 1.442695
        %v1131 = vpow.pop %v1130
        %v1132 = vmul.f32 %v611, 1.442695
        %v1133 = vpow.pop %v1132
        %v1134 = vmul.f32 %v612, 1.442695
        %v1135 = vpow.pop %v1134
        %v1136 = vmul.f32 %v613, 1.442695
        %v1137 = vpow.pop %v1136
        %v1138 = vmul.f32 %v614, 1.442695
        %v1139 = vpow.pop %v1138
        %v1140 = vmul.f32 %v615, 1.442695
        %v1141 = vpow.pop %v1140
        %v1142 = vmul.f32 %v616, 1.442695
        %v1143 = vpow.pop %v1142
        %v1144 = vmul.f32 %v617, 1.442695
        %v1145 = vpow.pop %v1144
        %v1146 = vmul.f32 %v618, 1.442695
        %v1147 = vpow.pop %v1146
        %v1148 = vmul.f32 %v619, 1.442695
        %v1149 = vpow.pop %v1148
        %v1150 = vmul.f32 %v620, 1.442695
        %v1151 = vpow.pop %v1150
        %v1152 = vmul.f32 %v621, 1.442695
        %v1153 = vpow.pop %v1152
        %v1154 = vmul.f32 %v622, 1.442695
        %v1155 = vpow.pop %v1154
        %v1156 = vmul.f32 %v623, 1.442695
        %v1157 = vpow.pop %v1156
        %v1158 = vmul.f32 %v624, 1.442695
        %v1159 = vpow.pop %v1158
        %v1160 = vmul.f32 %v625, 1.442695
        %v1161 = vpow.pop %v1160
        %v1162 = vmul.f32 %v626, 1.442695
        %v1163 = vpow.pop %v1162
        %v1164 = vmul.f32 %v627, 1.442695
        %v1165 = vpow.pop %v1164
        %v1166 = vmul.f32 %v628, 1.442695
        %v1167 = vpow.pop %v1166
        %v1168 = vmul.f32 %v629, 1.442695
        %v1169 = vpow.pop %v1168
        %v1170 = vmul.f32 %v630, 1.442695
        %v1171 = vpow.pop %v1170
        %v1172 = vmul.f32 %v631, 1.442695
        %v1173 = vpow.pop %v1172
        %v1174 = vmul.f32 %v632, 1.442695
        %v1175 = vpow.pop %v1174
        %v1176 = vmul.f32 %v633, 1.442695
        %v1177 = vpow.pop %v1176
        %v1178 = vmul.f32 %v634, 1.442695
        %v1179 = vpow.pop %v1178
        %v1180 = vmul.f32 %v635, 1.442695
        %v1181 = vpow.pop %v1180
        %v1182 = vmul.f32 %v636, 1.442695
        %v1183 = vpow.pop %v1182
        %v1184 = vmul.f32 %v637, 1.442695
        %v1185 = vpow.pop %v1184
        %v1186 = vmul.f32 %v638, 1.442695
        %v1187 = vpow.pop %v1186
        %v1188 = vmul.f32 %v639, 1.442695
        %v1189 = vpow.pop %v1188
        %v1190 = vmul.f32 %v640, 1.442695
        %v1191 = vpow.pop %v1190
        %v1192 = vmul.f32 %v641, 1.442695
        %v1193 = vpow.pop %v1192
        %v1194 = vmul.f32 %v642, 1.442695
        %v1195 = vpow.pop %v1194
        %v1196 = vmul.f32 %v643, 1.442695
        %v1197 = vpow.pop %v1196
        %v1198 = vmul.f32 %v644, 1.442695
        %v1199 = vpow.pop %v1198
        %v1200 = vmul.f32 %v645, 1.442695
        %v1201 = vpow.pop %v1200
        %v1202 = vmul.f32 %v646, 1.442695
        %v1203 = vpow.pop %v1202
        %v1204 = vmul.f32 %v647, 1.442695
        %v1205 = vpow.pop %v1204
        %v1206 = vmul.f32 %v648, 1.442695
        %v1207 = vpow.pop %v1206
        %v1208 = vmul.f32 %v649, 1.442695
        %v1209 = vpow.pop %v1208
        %v1210 = vmul.f32 %v650, 1.442695
        %v1211 = vpow.pop %v1210
        %v1212 = vmul.f32 %v651, 1.442695
        %v1213 = vpow.pop %v1212
        %v1214 = vmul.f32 %v652, 1.442695
        %v1215 = vpow.pop %v1214
        %v1216 = vmul.f32 %v653, 1.442695
        %v1217 = vpow.pop %v1216
        %v1218 = vmul.f32 %v654, 1.442695
        %v1219 = vpow.pop %v1218
        %v1220 = vmul.f32 %v655, 1.442695
        %v1221 = vpow.pop %v1220
        %v1222 = vmul.f32 %v656, 1.442695
        %v1223 = vpow.pop %v1222
        %v1224 = vmul.f32 %v657, 1.442695
        %v1225 = vpow.pop %v1224
        %1226 = vmatprep.subr.mxu0 0.0
        %1227 = vmatpush1.msra.mxu0 1.0
        %1228 = vmatprep.subr.mxu0 0.0
        %1229 = vmatpush1.msra.mxu0 1.0
        %1230 = vmatprep.subr.mxu0 0.0
        %1231 = vmatpush1.msra.mxu0 1.0
        %1232 = vmatprep.subr.mxu0 0.0
        %1233 = vmatpush1.msra.mxu0 1.0
        %1234 = vmatprep.subr.mxu0 0.0
        %1235 = vmatpush1.msra.mxu0 1.0
        %1236 = vmatprep.subr.mxu0 0.0
        %1237 = vmatpush1.msra.mxu0 1.0
        %1238 = vmatprep.subr.mxu0 0.0
        %1239 = vmatpush1.msra.mxu0 1.0
        %1240 = vmatprep.subr.mxu0 0.0
        %1241 = vmatpush1.msra.mxu0 1.0
        %1242 = vmatprep.subr.mxu0 0.0
        %1243 = vmatpush1.msra.mxu0 1.0
        %1244 = vmatprep.subr.mxu0 0.0
        %1245 = vmatpush1.msra.mxu0 1.0
        %1246 = vmatprep.subr.mxu0 0.0
        %1247 = vmatpush1.msra.mxu0 1.0
        %1248 = vmatprep.subr.mxu0 0.0
        %1249 = vmatpush1.msra.mxu0 1.0
        %1250 = vmatprep.subr.mxu0 0.0
        %1251 = vmatpush1.msra.mxu0 1.0
        %1252 = vmatprep.subr.mxu0 0.0
        %1253 = vmatpush1.msra.mxu0 1.0
        %1254 = vmatprep.subr.mxu0 0.0
        %1255 = vmatpush1.msra.mxu0 1.0
        %1256 = vmatprep.subr.mxu0 0.0
        %1257 = vmatpush1.msra.mxu0 1.0
        %1258 = vmatprep.subr.mxu0 0.0
        %1259 = vmatpush2.msra.mxu0 1.0
        %1260 = vmatprep.subr.mxu0 0.0
        %1261 = vmatpush2.msra.mxu0 1.0
        %1262 = vmatprep.subr.mxu0 0.0
        %1263 = vmatpush2.msra.mxu0 1.0
        %1264 = vmatprep.subr.mxu0 0.0
        %1265 = vmatpush2.msra.mxu0 1.0
        %1266 = vmatprep.subr.mxu0 0.0
        %1267 = vmatpush2.msra.mxu0 1.0
        %1268 = vmatprep.subr.mxu0 0.0
        %1269 = vmatpush2.msra.mxu0 1.0
        %1270 = vmatprep.subr.mxu0 0.0
        %1271 = vmatpush2.msra.mxu0 1.0
        %1272 = vmatprep.subr.mxu0 0.0
        %1273 = vmatpush2.msra.mxu0 1.0
        %1274 = vmatprep.subr.mxu0 0.0
        %1275 = vmatpush2.msra.mxu0 1.0
        %1276 = vmatprep.subr.mxu0 0.0
        %1277 = vmatpush2.msra.mxu0 1.0
        %1278 = vmatprep.subr.mxu0 0.0
        %1279 = vmatpush2.msra.mxu0 1.0
        %1280 = vmatprep.subr.mxu0 0.0
        %1281 = vmatpush2.msra.mxu0 1.0
        %1282 = vmatprep.subr.mxu0 0.0
        %1283 = vmatpush2.msra.mxu0 1.0
        %1284 = vmatprep.subr.mxu0 0.0
        %1285 = vmatpush2.msra.mxu0 1.0
        %1286 = vmatprep.subr.mxu0 0.0
        %1287 = vmatpush2.msra.mxu0 1.0
        %1288 = vmatprep.subr.mxu0 0.0
        %1289 = vmatpush2.msra.mxu0 1.0
        %1290 = vmatprep.mubr.f32.mxu0 %v717
        %1291 = vmatmul.mubr.f32.gmra.mxu0 %v715
        %v1292 = vpop.f32.mrf.mxu0
        %v1293 = vadd.f32 0.0, %v1292
        %v1294 = vpop.f32.mrf.mxu0
        %1295 = vmatprep.mubr.f32.mxu0 %v721
        %1296 = vmatmul.mubr.f32.gmra.mxu0 %v719
        %v1297 = vpop.f32.mrf.mxu0
        %v1298 = vadd.f32 0.0, %v1297
        %v1299 = vpop.f32.mrf.mxu0
        %1300 = vmatprep.mubr.f32.mxu0 %v725
        %1301 = vmatmul.mubr.f32.gmra.mxu0 %v723
        %v1302 = vpop.f32.mrf.mxu0
        %v1303 = vadd.f32 0.0, %v1302
        %v1304 = vpop.f32.mrf.mxu0
        %1305 = vmatprep.mubr.f32.mxu0 %v729
        %1306 = vmatmul.mubr.f32.gmra.mxu0 %v727
        %v1307 = vpop.f32.mrf.mxu0
        %v1308 = vadd.f32 0.0, %v1307
        %v1309 = vpop.f32.mrf.mxu0
        %1310 = vmatprep.mubr.f32.mxu0 %v733
        %1311 = vmatmul.mubr.f32.gmra.mxu0 %v731
        %v1312 = vpop.f32.mrf.mxu0
        %v1313 = vadd.f32 0.0, %v1312
        %v1314 = vpop.f32.mrf.mxu0
        %1315 = vmatprep.mubr.f32.mxu0 %v737
        %1316 = vmatmul.mubr.f32.gmra.mxu0 %v735
        %v1317 = vpop.f32.mrf.mxu0
        %v1318 = vadd.f32 0.0, %v1317
        %v1319 = vpop.f32.mrf.mxu0
        %1320 = vmatprep.mubr.f32.mxu0 %v741
        %1321 = vmatmul.mubr.f32.gmra.mxu0 %v739
        %v1322 = vpop.f32.mrf.mxu0
        %v1323 = vadd.f32 0.0, %v1322
        %v1324 = vpop.f32.mrf.mxu0
        %1325 = vmatprep.mubr.f32.mxu0 %v745
        %1326 = vmatmul.mubr.f32.gmra.mxu0 %v743
        %v1327 = vpop.f32.mrf.mxu0
        %v1328 = vadd.f32 0.0, %v1327
        %v1329 = vpop.f32.mrf.mxu0
        %1330 = vmatprep.mubr.f32.mxu0 %v749
        %1331 = vmatmul.mubr.f32.gmra.mxu0 %v747
        %v1332 = vpop.f32.mrf.mxu0
        %v1333 = vadd.f32 0.0, %v1332
        %v1334 = vpop.f32.mrf.mxu0
        %1335 = vmatprep.mubr.f32.mxu0 %v753
        %1336 = vmatmul.mubr.f32.gmra.mxu0 %v751
        %v1337 = vpop.f32.mrf.mxu0
        %v1338 = vadd.f32 0.0, %v1337
        %v1339 = vpop.f32.mrf.mxu0
        %1340 = vmatprep.mubr.f32.mxu0 %v757
        %1341 = vmatmul.mubr.f32.gmra.mxu0 %v755
        %v1342 = vpop.f32.mrf.mxu0
        %v1343 = vadd.f32 0.0, %v1342
        %v1344 = vpop.f32.mrf.mxu0
        %1345 = vmatprep.mubr.f32.mxu0 %v761
        %1346 = vmatmul.mubr.f32.gmra.mxu0 %v759
        %v1347 = vpop.f32.mrf.mxu0
        %v1348 = vadd.f32 0.0, %v1347
        %v1349 = vpop.f32.mrf.mxu0
        %1350 = vmatprep.mubr.f32.mxu0 %v765
        %1351 = vmatmul.mubr.f32.gmra.mxu0 %v763
        %v1352 = vpop.f32.mrf.mxu0
        %v1353 = vadd.f32 0.0, %v1352
        %v1354 = vpop.f32.mrf.mxu0
        %1355 = vmatprep.mubr.f32.mxu0 %v769
        %1356 = vmatmul.mubr.f32.gmra.mxu0 %v767
        %v1357 = vpop.f32.mrf.mxu0
        %v1358 = vadd.f32 0.0, %v1357
        %v1359 = vpop.f32.mrf.mxu0
        %1360 = vmatprep.mubr.f32.mxu0 %v773
        %1361 = vmatmul.mubr.f32.gmra.mxu0 %v771
        %v1362 = vpop.f32.mrf.mxu0
        %v1363 = vadd.f32 0.0, %v1362
        %v1364 = vpop.f32.mrf.mxu0
        %1365 = vmatprep.mubr.f32.mxu0 %v777
        %1366 = vmatmul.mubr.f32.gmra.mxu0 %v775
        %v1367 = vpop.f32.mrf.mxu0
        %v1368 = vadd.f32 0.0, %v1367
        %v1369 = vpop.f32.mrf.mxu0
        %1370 = vmatprep.mubr.f32.mxu0 %v781
        %1371 = vmatmul.mubr.f32.gmra.mxu0 %v779
        %v1372 = vpop.f32.mrf.mxu0
        %v1373 = vadd.f32 0.0, %v1372
        %v1374 = vpop.f32.mrf.mxu0
        %1375 = vmatprep.mubr.f32.mxu0 %v785
        %1376 = vmatmul.mubr.f32.gmra.mxu0 %v783
        %v1377 = vpop.f32.mrf.mxu0
        %v1378 = vadd.f32 0.0, %v1377
        %v1379 = vpop.f32.mrf.mxu0
        %1380 = vmatprep.mubr.f32.mxu0 %v789
        %1381 = vmatmul.mubr.f32.gmra.mxu0 %v787
        %v1382 = vpop.f32.mrf.mxu0
        %v1383 = vadd.f32 0.0, %v1382
        %v1384 = vpop.f32.mrf.mxu0
        %1385 = vmatprep.mubr.f32.mxu0 %v793
        %1386 = vmatmul.mubr.f32.gmra.mxu0 %v791
        %v1387 = vpop.f32.mrf.mxu0
        %v1388 = vadd.f32 0.0, %v1387
        %v1389 = vpop.f32.mrf.mxu0
        %1390 = vmatprep.mubr.f32.mxu0 %v797
        %1391 = vmatmul.mubr.f32.gmra.mxu0 %v795
        %v1392 = vpop.f32.mrf.mxu0
        %v1393 = vadd.f32 0.0, %v1392
        %v1394 = vpop.f32.mrf.mxu0
        %1395 = vmatprep.mubr.f32.mxu0 %v801
        %1396 = vmatmul.mubr.f32.gmra.mxu0 %v799
        %v1397 = vpop.f32.mrf.mxu0
        %v1398 = vadd.f32 0.0, %v1397
        %v1399 = vpop.f32.mrf.mxu0
        %1400 = vmatprep.mubr.f32.mxu0 %v805
        %1401 = vmatmul.mubr.f32.gmra.mxu0 %v803
        %v1402 = vpop.f32.mrf.mxu0
        %v1403 = vadd.f32 0.0, %v1402
        %v1404 = vpop.f32.mrf.mxu0
        %1405 = vmatprep.mubr.f32.mxu0 %v809
        %1406 = vmatmul.mubr.f32.gmra.mxu0 %v807
        %v1407 = vpop.f32.mrf.mxu0
        %v1408 = vadd.f32 0.0, %v1407
        %v1409 = vpop.f32.mrf.mxu0
        %1410 = vmatprep.mubr.f32.mxu0 %v813
        %1411 = vmatmul.mubr.f32.gmra.mxu0 %v811
        %v1412 = vpop.f32.mrf.mxu0
        %v1413 = vadd.f32 0.0, %v1412
        %v1414 = vpop.f32.mrf.mxu0
        %1415 = vmatprep.mubr.f32.mxu0 %v817
        %1416 = vmatmul.mubr.f32.gmra.mxu0 %v815
        %v1417 = vpop.f32.mrf.mxu0
        %v1418 = vadd.f32 0.0, %v1417
        %v1419 = vpop.f32.mrf.mxu0
        %1420 = vmatprep.mubr.f32.mxu0 %v821
        %1421 = vmatmul.mubr.f32.gmra.mxu0 %v819
        %v1422 = vpop.f32.mrf.mxu0
        %v1423 = vadd.f32 0.0, %v1422
        %v1424 = vpop.f32.mrf.mxu0
        %1425 = vmatprep.mubr.f32.mxu0 %v825
        %1426 = vmatmul.mubr.f32.gmra.mxu0 %v823
        %v1427 = vpop.f32.mrf.mxu0
        %v1428 = vadd.f32 0.0, %v1427
        %v1429 = vpop.f32.mrf.mxu0
        %1430 = vmatprep.mubr.f32.mxu0 %v829
        %1431 = vmatmul.mubr.f32.gmra.mxu0 %v827
        %v1432 = vpop.f32.mrf.mxu0
        %v1433 = vadd.f32 0.0, %v1432
        %v1434 = vpop.f32.mrf.mxu0
        %1435 = vmatprep.mubr.f32.mxu0 %v833
        %1436 = vmatmul.mubr.f32.gmra.mxu0 %v831
        %v1437 = vpop.f32.mrf.mxu0
        %v1438 = vadd.f32 0.0, %v1437
        %v1439 = vpop.f32.mrf.mxu0
        %1440 = vmatprep.mubr.f32.mxu0 %v837
        %1441 = vmatmul.mubr.f32.gmra.mxu0 %v835
        %v1442 = vpop.f32.mrf.mxu0
        %v1443 = vadd.f32 0.0, %v1442
        %v1444 = vpop.f32.mrf.mxu0
        %1445 = vmatprep.mubr.f32.mxu0 %v841
        %1446 = vmatmul.mubr.f32.gmra.mxu0 %v839
        %v1447 = vpop.f32.mrf.mxu0
        %v1448 = vadd.f32 0.0, %v1447
        %v1449 = vpop.f32.mrf.mxu0
        %1450 = vmatprep.mubr.f32.mxu0 %v845
        %1451 = vmatmul.mubr.f32.gmra.mxu0 %v843
        %v1452 = vpop.f32.mrf.mxu0
        %v1453 = vadd.f32 0.0, %v1452
        %v1454 = vpop.f32.mrf.mxu0
        %1455 = vmatprep.mubr.f32.mxu0 %v849
        %1456 = vmatmul.mubr.f32.gmra.mxu0 %v847
        %v1457 = vpop.f32.mrf.mxu0
        %v1458 = vadd.f32 0.0, %v1457
        %v1459 = vpop.f32.mrf.mxu0
        %1460 = vmatprep.mubr.f32.mxu0 %v853
        %1461 = vmatmul.mubr.f32.gmra.mxu0 %v851
        %v1462 = vpop.f32.mrf.mxu0
        %v1463 = vadd.f32 0.0, %v1462
        %v1464 = vpop.f32.mrf.mxu0
        %1465 = vmatprep.mubr.f32.mxu0 %v857
        %1466 = vmatmul.mubr.f32.gmra.mxu0 %v855
        %v1467 = vpop.f32.mrf.mxu0
        %v1468 = vadd.f32 0.0, %v1467
        %v1469 = vpop.f32.mrf.mxu0
        %1470 = vmatprep.mubr.f32.mxu0 %v861
        %1471 = vmatmul.mubr.f32.gmra.mxu0 %v859
        %v1472 = vpop.f32.mrf.mxu0
        %v1473 = vadd.f32 0.0, %v1472
        %v1474 = vpop.f32.mrf.mxu0
        %1475 = vmatprep.mubr.f32.mxu0 %v865
        %1476 = vmatmul.mubr.f32.gmra.mxu0 %v863
        %v1477 = vpop.f32.mrf.mxu0
        %v1478 = vadd.f32 0.0, %v1477
        %v1479 = vpop.f32.mrf.mxu0
        %1480 = vmatprep.mubr.f32.mxu0 %v869
        %1481 = vmatmul.mubr.f32.gmra.mxu0 %v867
        %v1482 = vpop.f32.mrf.mxu0
        %v1483 = vadd.f32 0.0, %v1482
        %v1484 = vpop.f32.mrf.mxu0
        %1485 = vmatprep.mubr.f32.mxu0 %v873
        %1486 = vmatmul.mubr.f32.gmra.mxu0 %v871
        %v1487 = vpop.f32.mrf.mxu0
        %v1488 = vadd.f32 0.0, %v1487
        %v1489 = vpop.f32.mrf.mxu0
        %1490 = vmatprep.mubr.f32.mxu0 %v877
        %1491 = vmatmul.mubr.f32.gmra.mxu0 %v875
        %v1492 = vpop.f32.mrf.mxu0
        %v1493 = vadd.f32 0.0, %v1492
        %v1494 = vpop.f32.mrf.mxu0
        %1495 = vmatprep.mubr.f32.mxu0 %v881
        %1496 = vmatmul.mubr.f32.gmra.mxu0 %v879
        %v1497 = vpop.f32.mrf.mxu0
        %v1498 = vadd.f32 0.0, %v1497
        %v1499 = vpop.f32.mrf.mxu0
        %1500 = vmatprep.mubr.f32.mxu0 %v885
        %1501 = vmatmul.mubr.f32.gmra.mxu0 %v883
        %v1502 = vpop.f32.mrf.mxu0
        %v1503 = vadd.f32 0.0, %v1502
        %v1504 = vpop.f32.mrf.mxu0
        %1505 = vmatprep.mubr.f32.mxu0 %v889
        %1506 = vmatmul.mubr.f32.gmra.mxu0 %v887
        %v1507 = vpop.f32.mrf.mxu0
        %v1508 = vadd.f32 0.0, %v1507
        %v1509 = vpop.f32.mrf.mxu0
        %1510 = vmatprep.mubr.f32.mxu0 %v893
        %1511 = vmatmul.mubr.f32.gmra.mxu0 %v891
        %v1512 = vpop.f32.mrf.mxu0
        %v1513 = vadd.f32 0.0, %v1512
        %v1514 = vpop.f32.mrf.mxu0
        %1515 = vmatprep.mubr.f32.mxu0 %v897
        %1516 = vmatmul.mubr.f32.gmra.mxu0 %v895
        %v1517 = vpop.f32.mrf.mxu0
        %v1518 = vadd.f32 0.0, %v1517
        %v1519 = vpop.f32.mrf.mxu0
        %1520 = vmatprep.mubr.f32.mxu0 %v901
        %1521 = vmatmul.mubr.f32.gmra.mxu0 %v899
        %v1522 = vpop.f32.mrf.mxu0
        %v1523 = vadd.f32 0.0, %v1522
        %v1524 = vpop.f32.mrf.mxu0
        %1525 = vmatprep.mubr.f32.mxu0 %v905
        %1526 = vmatmul.mubr.f32.gmra.mxu0 %v903
        %v1527 = vpop.f32.mrf.mxu0
        %v1528 = vadd.f32 0.0, %v1527
        %v1529 = vpop.f32.mrf.mxu0
        %1530 = vmatprep.mubr.f32.mxu0 %v909
        %1531 = vmatmul.mubr.f32.gmra.mxu0 %v907
        %v1532 = vpop.f32.mrf.mxu0
        %v1533 = vadd.f32 0.0, %v1532
        %v1534 = vpop.f32.mrf.mxu0
        %1535 = vmatprep.mubr.f32.mxu0 %v913
        %1536 = vmatmul.mubr.f32.gmra.mxu0 %v911
        %v1537 = vpop.f32.mrf.mxu0
        %v1538 = vadd.f32 0.0, %v1537
        %v1539 = vpop.f32.mrf.mxu0
        %1540 = vmatprep.mubr.f32.mxu0 %v917
        %1541 = vmatmul.mubr.f32.gmra.mxu0 %v915
        %v1542 = vpop.f32.mrf.mxu0
        %v1543 = vadd.f32 0.0, %v1542
        %v1544 = vpop.f32.mrf.mxu0
        %1545 = vmatprep.mubr.f32.mxu0 %v921
        %1546 = vmatmul.mubr.f32.gmra.mxu0 %v919
        %v1547 = vpop.f32.mrf.mxu0
        %v1548 = vadd.f32 0.0, %v1547
        %v1549 = vpop.f32.mrf.mxu0
        %1550 = vmatprep.mubr.f32.mxu0 %v925
        %1551 = vmatmul.mubr.f32.gmra.mxu0 %v923
        %v1552 = vpop.f32.mrf.mxu0
        %v1553 = vadd.f32 0.0, %v1552
        %v1554 = vpop.f32.mrf.mxu0
        %1555 = vmatprep.mubr.f32.mxu0 %v929
        %1556 = vmatmul.mubr.f32.gmra.mxu0 %v927
        %v1557 = vpop.f32.mrf.mxu0
        %v1558 = vadd.f32 0.0, %v1557
        %v1559 = vpop.f32.mrf.mxu0
        %1560 = vmatprep.mubr.f32.mxu0 %v933
        %1561 = vmatmul.mubr.f32.gmra.mxu0 %v931
        %v1562 = vpop.f32.mrf.mxu0
        %v1563 = vadd.f32 0.0, %v1562
        %v1564 = vpop.f32.mrf.mxu0
        %1565 = vmatprep.mubr.f32.mxu0 %v937
        %1566 = vmatmul.mubr.f32.gmra.mxu0 %v935
        %v1567 = vpop.f32.mrf.mxu0
        %v1568 = vadd.f32 0.0, %v1567
        %v1569 = vpop.f32.mrf.mxu0
        %1570 = vmatprep.mubr.f32.mxu0 %v941
        %1571 = vmatmul.mubr.f32.gmra.mxu0 %v939
        %v1572 = vpop.f32.mrf.mxu0
        %v1573 = vadd.f32 0.0, %v1572
        %v1574 = vpop.f32.mrf.mxu0
        %1575 = vmatprep.mubr.f32.mxu0 %v945
        %1576 = vmatmul.mubr.f32.gmra.mxu0 %v943
        %v1577 = vpop.f32.mrf.mxu0
        %v1578 = vadd.f32 0.0, %v1577
        %v1579 = vpop.f32.mrf.mxu0
        %1580 = vmatprep.mubr.f32.mxu0 %v949
        %1581 = vmatmul.mubr.f32.gmra.mxu0 %v947
        %v1582 = vpop.f32.mrf.mxu0
        %v1583 = vadd.f32 0.0, %v1582
        %v1584 = vpop.f32.mrf.mxu0
        %1585 = vmatprep.mubr.f32.mxu0 %v953
        %1586 = vmatmul.mubr.f32.gmra.mxu0 %v951
        %v1587 = vpop.f32.mrf.mxu0
        %v1588 = vadd.f32 0.0, %v1587
        %v1589 = vpop.f32.mrf.mxu0
        %1590 = vmatprep.mubr.f32.mxu0 %v957
        %1591 = vmatmul.mubr.f32.gmra.mxu0 %v955
        %v1592 = vpop.f32.mrf.mxu0
        %v1593 = vadd.f32 0.0, %v1592
        %v1594 = vpop.f32.mrf.mxu0
        %1595 = vmatprep.mubr.f32.mxu0 %v961
        %1596 = vmatmul.mubr.f32.gmra.mxu0 %v959
        %v1597 = vpop.f32.mrf.mxu0
        %v1598 = vadd.f32 0.0, %v1597
        %v1599 = vpop.f32.mrf.mxu0
        %1600 = vmatprep.mubr.f32.mxu0 %v965
        %1601 = vmatmul.mubr.f32.gmra.mxu0 %v963
        %v1602 = vpop.f32.mrf.mxu0
        %v1603 = vadd.f32 0.0, %v1602
        %v1604 = vpop.f32.mrf.mxu0
        %1605 = vmatprep.mubr.f32.mxu0 %v969
        %1606 = vmatmul.mubr.f32.gmra.mxu0 %v967
        %v1607 = vpop.f32.mrf.mxu0
        %v1608 = vadd.f32 0.0, %v1607
        %v1609 = vpop.f32.mrf.mxu0
        %1610 = vmatprep.mubr.f32.mxu0 %v973
        %1611 = vmatmul.mubr.f32.gmra.mxu0 %v971
        %v1612 = vpop.f32.mrf.mxu0
        %v1613 = vadd.f32 0.0, %v1612
        %v1614 = vpop.f32.mrf.mxu0
        %1615 = vmatprep.mubr.f32.mxu0 %v977
        %1616 = vmatmul.mubr.f32.gmra.mxu0 %v975
        %v1617 = vpop.f32.mrf.mxu0
        %v1618 = vadd.f32 0.0, %v1617
        %v1619 = vpop.f32.mrf.mxu0
        %1620 = vmatprep.mubr.f32.mxu0 %v981
        %1621 = vmatmul.mubr.f32.gmra.mxu0 %v979
        %v1622 = vpop.f32.mrf.mxu0
        %v1623 = vadd.f32 0.0, %v1622
        %v1624 = vpop.f32.mrf.mxu0
        %1625 = vmatprep.mubr.f32.mxu0 %v985
        %1626 = vmatmul.mubr.f32.gmra.mxu0 %v983
        %v1627 = vpop.f32.mrf.mxu0
        %v1628 = vadd.f32 0.0, %v1627
        %v1629 = vpop.f32.mrf.mxu0
        %1630 = vmatprep.mubr.f32.mxu0 %v989
        %1631 = vmatmul.mubr.f32.gmra.mxu0 %v987
        %v1632 = vpop.f32.mrf.mxu0
        %v1633 = vadd.f32 0.0, %v1632
        %v1634 = vpop.f32.mrf.mxu0
        %1635 = vmatprep.mubr.f32.mxu0 %v993
        %1636 = vmatmul.mubr.f32.gmra.mxu0 %v991
        %v1637 = vpop.f32.mrf.mxu0
        %v1638 = vadd.f32 0.0, %v1637
        %v1639 = vpop.f32.mrf.mxu0
        %1640 = vmatprep.mubr.f32.mxu0 %v997
        %1641 = vmatmul.mubr.f32.gmra.mxu0 %v995
        %v1642 = vpop.f32.mrf.mxu0
        %v1643 = vadd.f32 0.0, %v1642
        %v1644 = vpop.f32.mrf.mxu0
        %1645 = vmatprep.mubr.f32.mxu0 %v1001
        %1646 = vmatmul.mubr.f32.gmra.mxu0 %v999
        %v1647 = vpop.f32.mrf.mxu0
        %v1648 = vadd.f32 0.0, %v1647
        %v1649 = vpop.f32.mrf.mxu0
        %1650 = vmatprep.mubr.f32.mxu0 %v1005
        %1651 = vmatmul.mubr.f32.gmra.mxu0 %v1003
        %v1652 = vpop.f32.mrf.mxu0
        %v1653 = vadd.f32 0.0, %v1652
        %v1654 = vpop.f32.mrf.mxu0
        %1655 = vmatprep.mubr.f32.mxu0 %v1009
        %1656 = vmatmul.mubr.f32.gmra.mxu0 %v1007
        %v1657 = vpop.f32.mrf.mxu0
        %v1658 = vadd.f32 0.0, %v1657
        %v1659 = vpop.f32.mrf.mxu0
        %1660 = vmatprep.mubr.f32.mxu0 %v1013
        %1661 = vmatmul.mubr.f32.gmra.mxu0 %v1011
        %v1662 = vpop.f32.mrf.mxu0
        %v1663 = vadd.f32 0.0, %v1662
        %v1664 = vpop.f32.mrf.mxu0
        %1665 = vmatprep.mubr.f32.mxu0 %v1017
        %1666 = vmatmul.mubr.f32.gmra.mxu0 %v1015
        %v1667 = vpop.f32.mrf.mxu0
        %v1668 = vadd.f32 0.0, %v1667
        %v1669 = vpop.f32.mrf.mxu0
        %1670 = vmatprep.mubr.f32.mxu0 %v1021
        %1671 = vmatmul.mubr.f32.gmra.mxu0 %v1019
        %v1672 = vpop.f32.mrf.mxu0
        %v1673 = vadd.f32 0.0, %v1672
        %v1674 = vpop.f32.mrf.mxu0
        %1675 = vmatprep.mubr.f32.mxu0 %v1025
        %1676 = vmatmul.mubr.f32.gmra.mxu0 %v1023
        %v1677 = vpop.f32.mrf.mxu0
        %v1678 = vadd.f32 0.0, %v1677
        %v1679 = vpop.f32.mrf.mxu0
        %1680 = vmatprep.mubr.f32.mxu0 %v1029
        %1681 = vmatmul.mubr.f32.gmra.mxu0 %v1027
        %v1682 = vpop.f32.mrf.mxu0
        %v1683 = vadd.f32 0.0, %v1682
        %v1684 = vpop.f32.mrf.mxu0
        %1685 = vmatprep.mubr.f32.mxu0 %v1033
        %1686 = vmatmul.mubr.f32.gmra.mxu0 %v1031
        %v1687 = vpop.f32.mrf.mxu0
        %v1688 = vadd.f32 0.0, %v1687
        %v1689 = vpop.f32.mrf.mxu0
        %1690 = vmatprep.mubr.f32.mxu0 %v1037
        %1691 = vmatmul.mubr.f32.gmra.mxu0 %v1035
        %v1692 = vpop.f32.mrf.mxu0
        %v1693 = vadd.f32 0.0, %v1692
        %v1694 = vpop.f32.mrf.mxu0
        %1695 = vmatprep.mubr.f32.mxu0 %v1041
        %1696 = vmatmul.mubr.f32.gmra.mxu0 %v1039
        %v1697 = vpop.f32.mrf.mxu0
        %v1698 = vadd.f32 0.0, %v1697
        %v1699 = vpop.f32.mrf.mxu0
        %1700 = vmatprep.mubr.f32.mxu0 %v1045
        %1701 = vmatmul.mubr.f32.gmra.mxu0 %v1043
        %v1702 = vpop.f32.mrf.mxu0
        %v1703 = vadd.f32 0.0, %v1702
        %v1704 = vpop.f32.mrf.mxu0
        %1705 = vmatprep.mubr.f32.mxu0 %v1049
        %1706 = vmatmul.mubr.f32.gmra.mxu0 %v1047
        %v1707 = vpop.f32.mrf.mxu0
        %v1708 = vadd.f32 0.0, %v1707
        %v1709 = vpop.f32.mrf.mxu0
        %1710 = vmatprep.mubr.f32.mxu0 %v1053
        %1711 = vmatmul.mubr.f32.gmra.mxu0 %v1051
        %v1712 = vpop.f32.mrf.mxu0
        %v1713 = vadd.f32 0.0, %v1712
        %v1714 = vpop.f32.mrf.mxu0
        %1715 = vmatprep.mubr.f32.mxu0 %v1057
        %1716 = vmatmul.mubr.f32.gmra.mxu0 %v1055
        %v1717 = vpop.f32.mrf.mxu0
        %v1718 = vadd.f32 0.0, %v1717
        %v1719 = vpop.f32.mrf.mxu0
        %1720 = vmatprep.mubr.f32.mxu0 %v1061
        %1721 = vmatmul.mubr.f32.gmra.mxu0 %v1059
        %v1722 = vpop.f32.mrf.mxu0
        %v1723 = vadd.f32 0.0, %v1722
        %v1724 = vpop.f32.mrf.mxu0
        %1725 = vmatprep.mubr.f32.mxu0 %v1065
        %1726 = vmatmul.mubr.f32.gmra.mxu0 %v1063
        %v1727 = vpop.f32.mrf.mxu0
        %v1728 = vadd.f32 0.0, %v1727
        %v1729 = vpop.f32.mrf.mxu0
        %1730 = vmatprep.mubr.f32.mxu0 %v1069
        %1731 = vmatmul.mubr.f32.gmra.mxu0 %v1067
        %v1732 = vpop.f32.mrf.mxu0
        %v1733 = vadd.f32 0.0, %v1732
        %v1734 = vpop.f32.mrf.mxu0
        %1735 = vmatprep.mubr.f32.mxu0 %v1073
        %1736 = vmatmul.mubr.f32.gmra.mxu0 %v1071
        %v1737 = vpop.f32.mrf.mxu0
        %v1738 = vadd.f32 0.0, %v1737
        %v1739 = vpop.f32.mrf.mxu0
        %1740 = vmatprep.mubr.f32.mxu0 %v1077
        %1741 = vmatmul.mubr.f32.gmra.mxu0 %v1075
        %v1742 = vpop.f32.mrf.mxu0
        %v1743 = vadd.f32 0.0, %v1742
        %v1744 = vpop.f32.mrf.mxu0
        %1745 = vmatprep.mubr.f32.mxu0 %v1081
        %1746 = vmatmul.mubr.f32.gmra.mxu0 %v1079
        %v1747 = vpop.f32.mrf.mxu0
        %v1748 = vadd.f32 0.0, %v1747
        %v1749 = vpop.f32.mrf.mxu0
        %1750 = vmatprep.mubr.f32.mxu0 %v1085
        %1751 = vmatmul.mubr.f32.gmra.mxu0 %v1083
        %v1752 = vpop.f32.mrf.mxu0
        %v1753 = vadd.f32 0.0, %v1752
        %v1754 = vpop.f32.mrf.mxu0
        %1755 = vmatprep.mubr.f32.mxu0 %v1089
        %1756 = vmatmul.mubr.f32.gmra.mxu0 %v1087
        %v1757 = vpop.f32.mrf.mxu0
        %v1758 = vadd.f32 0.0, %v1757
        %v1759 = vpop.f32.mrf.mxu0
        %1760 = vmatprep.mubr.f32.mxu0 %v1093
        %1761 = vmatmul.mubr.f32.gmra.mxu0 %v1091
        %v1762 = vpop.f32.mrf.mxu0
        %v1763 = vadd.f32 0.0, %v1762
        %v1764 = vpop.f32.mrf.mxu0
        %1765 = vmatprep.mubr.f32.mxu0 %v1097
        %1766 = vmatmul.mubr.f32.gmra.mxu0 %v1095
        %v1767 = vpop.f32.mrf.mxu0
        %v1768 = vadd.f32 0.0, %v1767
        %v1769 = vpop.f32.mrf.mxu0
        %1770 = vmatprep.mubr.f32.mxu0 %v1101
        %1771 = vmatmul.mubr.f32.gmra.mxu0 %v1099
        %v1772 = vpop.f32.mrf.mxu0
        %v1773 = vadd.f32 0.0, %v1772
        %v1774 = vpop.f32.mrf.mxu0
        %1775 = vmatprep.mubr.f32.mxu0 %v1105
        %1776 = vmatmul.mubr.f32.gmra.mxu0 %v1103
        %v1777 = vpop.f32.mrf.mxu0
        %v1778 = vadd.f32 0.0, %v1777
        %v1779 = vpop.f32.mrf.mxu0
        %1780 = vmatprep.mubr.f32.mxu0 %v1109
        %1781 = vmatmul.mubr.f32.gmra.mxu0 %v1107
        %v1782 = vpop.f32.mrf.mxu0
        %v1783 = vadd.f32 0.0, %v1782
        %v1784 = vpop.f32.mrf.mxu0
        %1785 = vmatprep.mubr.f32.mxu0 %v1113
        %1786 = vmatmul.mubr.f32.gmra.mxu0 %v1111
        %v1787 = vpop.f32.mrf.mxu0
        %v1788 = vadd.f32 0.0, %v1787
        %v1789 = vpop.f32.mrf.mxu0
        %1790 = vmatprep.mubr.f32.mxu0 %v1117
        %1791 = vmatmul.mubr.f32.gmra.mxu0 %v1115
        %v1792 = vpop.f32.mrf.mxu0
        %v1793 = vadd.f32 0.0, %v1792
        %v1794 = vpop.f32.mrf.mxu0
        %1795 = vmatprep.mubr.f32.mxu0 %v1121
        %1796 = vmatmul.mubr.f32.gmra.mxu0 %v1119
        %v1797 = vpop.f32.mrf.mxu0
        %v1798 = vadd.f32 0.0, %v1797
        %v1799 = vpop.f32.mrf.mxu0
        %1800 = vmatprep.mubr.f32.mxu0 %v1125
        %1801 = vmatmul.mubr.f32.gmra.mxu0 %v1123
        %v1802 = vpop.f32.mrf.mxu0
        %v1803 = vadd.f32 0.0, %v1802
        %v1804 = vpop.f32.mrf.mxu0
        %1805 = vmatprep.mubr.f32.mxu0 %v1129
        %1806 = vmatmul.mubr.f32.gmra.mxu0 %v1127
        %v1807 = vpop.f32.mrf.mxu0
        %v1808 = vadd.f32 0.0, %v1807
        %v1809 = vpop.f32.mrf.mxu0
        %1810 = vmatprep.mubr.f32.mxu0 %v1133
        %1811 = vmatmul.mubr.f32.gmra.mxu0 %v1131
        %v1812 = vpop.f32.mrf.mxu0
        %v1813 = vadd.f32 0.0, %v1812
        %v1814 = vpop.f32.mrf.mxu0
        %1815 = vmatprep.mubr.f32.mxu0 %v1137
        %1816 = vmatmul.mubr.f32.gmra.mxu0 %v1135
        %v1817 = vpop.f32.mrf.mxu0
        %v1818 = vadd.f32 0.0, %v1817
        %v1819 = vpop.f32.mrf.mxu0
        %1820 = vmatprep.mubr.f32.mxu0 %v1141
        %1821 = vmatmul.mubr.f32.gmra.mxu0 %v1139
        %v1822 = vpop.f32.mrf.mxu0
        %v1823 = vadd.f32 0.0, %v1822
        %v1824 = vpop.f32.mrf.mxu0
        %1825 = vmatprep.mubr.f32.mxu0 %v1145
        %1826 = vmatmul.mubr.f32.gmra.mxu0 %v1143
        %v1827 = vpop.f32.mrf.mxu0
        %v1828 = vadd.f32 0.0, %v1827
        %v1829 = vpop.f32.mrf.mxu0
        %1830 = vmatprep.mubr.f32.mxu0 %v1149
        %1831 = vmatmul.mubr.f32.gmra.mxu0 %v1147
        %v1832 = vpop.f32.mrf.mxu0
        %v1833 = vadd.f32 0.0, %v1832
        %v1834 = vpop.f32.mrf.mxu0
        %1835 = vmatprep.mubr.f32.mxu0 %v1153
        %1836 = vmatmul.mubr.f32.gmra.mxu0 %v1151
        %v1837 = vpop.f32.mrf.mxu0
        %v1838 = vadd.f32 0.0, %v1837
        %v1839 = vpop.f32.mrf.mxu0
        %1840 = vmatprep.mubr.f32.mxu0 %v1157
        %1841 = vmatmul.mubr.f32.gmra.mxu0 %v1155
        %v1842 = vpop.f32.mrf.mxu0
        %v1843 = vadd.f32 0.0, %v1842
        %v1844 = vpop.f32.mrf.mxu0
        %1845 = vmatprep.mubr.f32.mxu0 %v1161
        %1846 = vmatmul.mubr.f32.gmra.mxu0 %v1159
        %v1847 = vpop.f32.mrf.mxu0
        %v1848 = vadd.f32 0.0, %v1847
        %v1849 = vpop.f32.mrf.mxu0
        %1850 = vmatprep.mubr.f32.mxu0 %v1165
        %1851 = vmatmul.mubr.f32.gmra.mxu0 %v1163
        %v1852 = vpop.f32.mrf.mxu0
        %v1853 = vadd.f32 0.0, %v1852
        %v1854 = vpop.f32.mrf.mxu0
        %1855 = vmatprep.mubr.f32.mxu0 %v1169
        %1856 = vmatmul.mubr.f32.gmra.mxu0 %v1167
        %v1857 = vpop.f32.mrf.mxu0
        %v1858 = vadd.f32 0.0, %v1857
        %v1859 = vpop.f32.mrf.mxu0
        %1860 = vmatprep.mubr.f32.mxu0 %v1173
        %1861 = vmatmul.mubr.f32.gmra.mxu0 %v1171
        %v1862 = vpop.f32.mrf.mxu0
        %v1863 = vadd.f32 0.0, %v1862
        %v1864 = vpop.f32.mrf.mxu0
        %1865 = vmatprep.mubr.f32.mxu0 %v1177
        %1866 = vmatmul.mubr.f32.gmra.mxu0 %v1175
        %v1867 = vpop.f32.mrf.mxu0
        %v1868 = vadd.f32 0.0, %v1867
        %v1869 = vpop.f32.mrf.mxu0
        %1870 = vmatprep.mubr.f32.mxu0 %v1181
        %1871 = vmatmul.mubr.f32.gmra.mxu0 %v1179
        %v1872 = vpop.f32.mrf.mxu0
        %v1873 = vadd.f32 0.0, %v1872
        %v1874 = vpop.f32.mrf.mxu0
        %1875 = vmatprep.mubr.f32.mxu0 %v1185
        %1876 = vmatmul.mubr.f32.gmra.mxu0 %v1183
        %v1877 = vpop.f32.mrf.mxu0
        %v1878 = vadd.f32 0.0, %v1877
        %v1879 = vpop.f32.mrf.mxu0
        %1880 = vmatprep.mubr.f32.mxu0 %v1189
        %1881 = vmatmul.mubr.f32.gmra.mxu0 %v1187
        %v1882 = vpop.f32.mrf.mxu0
        %v1883 = vadd.f32 0.0, %v1882
        %v1884 = vpop.f32.mrf.mxu0
        %1885 = vmatprep.mubr.f32.mxu0 %v1193
        %1886 = vmatmul.mubr.f32.gmra.mxu0 %v1191
        %v1887 = vpop.f32.mrf.mxu0
        %v1888 = vadd.f32 0.0, %v1887
        %v1889 = vpop.f32.mrf.mxu0
        %1890 = vmatprep.mubr.f32.mxu0 %v1197
        %1891 = vmatmul.mubr.f32.gmra.mxu0 %v1195
        %v1892 = vpop.f32.mrf.mxu0
        %v1893 = vadd.f32 0.0, %v1892
        %v1894 = vpop.f32.mrf.mxu0
        %1895 = vmatprep.mubr.f32.mxu0 %v1201
        %1896 = vmatmul.mubr.f32.gmra.mxu0 %v1199
        %v1897 = vpop.f32.mrf.mxu0
        %v1898 = vadd.f32 0.0, %v1897
        %v1899 = vpop.f32.mrf.mxu0
        %1900 = vmatprep.mubr.f32.mxu0 %v1205
        %1901 = vmatmul.mubr.f32.gmra.mxu0 %v1203
        %v1902 = vpop.f32.mrf.mxu0
        %v1903 = vadd.f32 0.0, %v1902
        %v1904 = vpop.f32.mrf.mxu0
        %1905 = vmatprep.mubr.f32.mxu0 %v1209
        %1906 = vmatmul.mubr.f32.gmra.mxu0 %v1207
        %v1907 = vpop.f32.mrf.mxu0
        %v1908 = vadd.f32 0.0, %v1907
        %v1909 = vpop.f32.mrf.mxu0
        %1910 = vmatprep.mubr.f32.mxu0 %v1213
        %1911 = vmatmul.mubr.f32.gmra.mxu0 %v1211
        %v1912 = vpop.f32.mrf.mxu0
        %v1913 = vadd.f32 0.0, %v1912
        %v1914 = vpop.f32.mrf.mxu0
        %1915 = vmatprep.mubr.f32.mxu0 %v1217
        %1916 = vmatmul.mubr.f32.gmra.mxu0 %v1215
        %v1917 = vpop.f32.mrf.mxu0
        %v1918 = vadd.f32 0.0, %v1917
        %v1919 = vpop.f32.mrf.mxu0
        %1920 = vmatprep.mubr.f32.mxu0 %v1221
        %1921 = vmatmul.mubr.f32.gmra.mxu0 %v1219
        %v1922 = vpop.f32.mrf.mxu0
        %v1923 = vadd.f32 0.0, %v1922
        %v1924 = vpop.f32.mrf.mxu0
        %1925 = vmatprep.mubr.f32.mxu0 %v1225
        %1926 = vmatmul.mubr.f32.gmra.mxu0 %v1223
        %v1927 = vpop.f32.mrf.mxu0
        %v1928 = vadd.f32 0.0, %v1927
        %v1929 = vpop.f32.mrf.mxu0
        %1930 = vdwg.mxu0
        %vm1931 = vcmask 64512
        %v1932 = vsel %vm1931, %v1293, 0.0
        %v1933 = vrot.slane %v1932, 4
        %v1934 = vadd.f32 %v1932, %v1933
        %v1935 = vrot.slane %v1934, 2
        %v1936 = vadd.f32 %v1934, %v1935
        %v1937 = vrot.slane %v1936, 1
        %v1938 = vadd.f32 %v1936, %v1937
        %v1939 = vsel %vm1931, %v1298, 0.0
        %v1940 = vrot.slane %v1939, 4
        %v1941 = vadd.f32 %v1939, %v1940
        %v1942 = vrot.slane %v1941, 2
        %v1943 = vadd.f32 %v1941, %v1942
        %v1944 = vrot.slane %v1943, 1
        %v1945 = vadd.f32 %v1943, %v1944
        %v1946 = vsel %vm1931, %v1303, 0.0
        %v1947 = vrot.slane %v1946, 4
        %v1948 = vadd.f32 %v1946, %v1947
        %v1949 = vrot.slane %v1948, 2
        %v1950 = vadd.f32 %v1948, %v1949
        %v1951 = vrot.slane %v1950, 1
        %v1952 = vadd.f32 %v1950, %v1951
        %v1953 = vsel %vm1931, %v1308, 0.0
        %v1954 = vrot.slane %v1953, 4
        %v1955 = vadd.f32 %v1953, %v1954
        %v1956 = vrot.slane %v1955, 2
        %v1957 = vadd.f32 %v1955, %v1956
        %v1958 = vrot.slane %v1957, 1
        %v1959 = vadd.f32 %v1957, %v1958
        %v1960 = vsel %vm1931, %v1313, 0.0
        %v1961 = vrot.slane %v1960, 4
        %v1962 = vadd.f32 %v1960, %v1961
        %v1963 = vrot.slane %v1962, 2
        %v1964 = vadd.f32 %v1962, %v1963
        %v1965 = vrot.slane %v1964, 1
        %v1966 = vadd.f32 %v1964, %v1965
        %v1967 = vsel %vm1931, %v1318, 0.0
        %v1968 = vrot.slane %v1967, 4
        %v1969 = vadd.f32 %v1967, %v1968
        %v1970 = vrot.slane %v1969, 2
        %v1971 = vadd.f32 %v1969, %v1970
        %v1972 = vrot.slane %v1971, 1
        %v1973 = vadd.f32 %v1971, %v1972
        %v1974 = vsel %vm1931, %v1323, 0.0
        %v1975 = vrot.slane %v1974, 4
        %v1976 = vadd.f32 %v1974, %v1975
        %v1977 = vrot.slane %v1976, 2
        %v1978 = vadd.f32 %v1976, %v1977
        %v1979 = vrot.slane %v1978, 1
        %v1980 = vadd.f32 %v1978, %v1979
        %v1981 = vsel %vm1931, %v1328, 0.0
        %v1982 = vrot.slane %v1981, 4
        %v1983 = vadd.f32 %v1981, %v1982
        %v1984 = vrot.slane %v1983, 2
        %v1985 = vadd.f32 %v1983, %v1984
        %v1986 = vrot.slane %v1985, 1
        %v1987 = vadd.f32 %v1985, %v1986
        %v1988 = vsel %vm1931, %v1333, 0.0
        %v1989 = vrot.slane %v1988, 4
        %v1990 = vadd.f32 %v1988, %v1989
        %v1991 = vrot.slane %v1990, 2
        %v1992 = vadd.f32 %v1990, %v1991
        %v1993 = vrot.slane %v1992, 1
        %v1994 = vadd.f32 %v1992, %v1993
        %v1995 = vsel %vm1931, %v1338, 0.0
        %v1996 = vrot.slane %v1995, 4
        %v1997 = vadd.f32 %v1995, %v1996
        %v1998 = vrot.slane %v1997, 2
        %v1999 = vadd.f32 %v1997, %v1998
        %v2000 = vrot.slane %v1999, 1
        %v2001 = vadd.f32 %v1999, %v2000
        %v2002 = vsel %vm1931, %v1343, 0.0
        %v2003 = vrot.slane %v2002, 4
        %v2004 = vadd.f32 %v2002, %v2003
        %v2005 = vrot.slane %v2004, 2
        %v2006 = vadd.f32 %v2004, %v2005
        %v2007 = vrot.slane %v2006, 1
        %v2008 = vadd.f32 %v2006, %v2007
        %v2009 = vsel %vm1931, %v1348, 0.0
        %v2010 = vrot.slane %v2009, 4
        %v2011 = vadd.f32 %v2009, %v2010
        %v2012 = vrot.slane %v2011, 2
        %v2013 = vadd.f32 %v2011, %v2012
        %v2014 = vrot.slane %v2013, 1
        %v2015 = vadd.f32 %v2013, %v2014
        %v2016 = vsel %vm1931, %v1353, 0.0
        %v2017 = vrot.slane %v2016, 4
        %v2018 = vadd.f32 %v2016, %v2017
        %v2019 = vrot.slane %v2018, 2
        %v2020 = vadd.f32 %v2018, %v2019
        %v2021 = vrot.slane %v2020, 1
        %v2022 = vadd.f32 %v2020, %v2021
        %v2023 = vsel %vm1931, %v1358, 0.0
        %v2024 = vrot.slane %v2023, 4
        %v2025 = vadd.f32 %v2023, %v2024
        %v2026 = vrot.slane %v2025, 2
        %v2027 = vadd.f32 %v2025, %v2026
        %v2028 = vrot.slane %v2027, 1
        %v2029 = vadd.f32 %v2027, %v2028
        %v2030 = vsel %vm1931, %v1363, 0.0
        %v2031 = vrot.slane %v2030, 4
        %v2032 = vadd.f32 %v2030, %v2031
        %v2033 = vrot.slane %v2032, 2
        %v2034 = vadd.f32 %v2032, %v2033
        %v2035 = vrot.slane %v2034, 1
        %v2036 = vadd.f32 %v2034, %v2035
        %v2037 = vsel %vm1931, %v1368, 0.0
        %v2038 = vrot.slane %v2037, 4
        %v2039 = vadd.f32 %v2037, %v2038
        %v2040 = vrot.slane %v2039, 2
        %v2041 = vadd.f32 %v2039, %v2040
        %v2042 = vrot.slane %v2041, 1
        %v2043 = vadd.f32 %v2041, %v2042
        %v2044 = vsel %vm1931, %v1373, 0.0
        %v2045 = vrot.slane %v2044, 4
        %v2046 = vadd.f32 %v2044, %v2045
        %v2047 = vrot.slane %v2046, 2
        %v2048 = vadd.f32 %v2046, %v2047
        %v2049 = vrot.slane %v2048, 1
        %v2050 = vadd.f32 %v2048, %v2049
        %v2051 = vsel %vm1931, %v1378, 0.0
        %v2052 = vrot.slane %v2051, 4
        %v2053 = vadd.f32 %v2051, %v2052
        %v2054 = vrot.slane %v2053, 2
        %v2055 = vadd.f32 %v2053, %v2054
        %v2056 = vrot.slane %v2055, 1
        %v2057 = vadd.f32 %v2055, %v2056
        %v2058 = vsel %vm1931, %v1383, 0.0
        %v2059 = vrot.slane %v2058, 4
        %v2060 = vadd.f32 %v2058, %v2059
        %v2061 = vrot.slane %v2060, 2
        %v2062 = vadd.f32 %v2060, %v2061
        %v2063 = vrot.slane %v2062, 1
        %v2064 = vadd.f32 %v2062, %v2063
        %v2065 = vsel %vm1931, %v1388, 0.0
        %v2066 = vrot.slane %v2065, 4
        %v2067 = vadd.f32 %v2065, %v2066
        %v2068 = vrot.slane %v2067, 2
        %v2069 = vadd.f32 %v2067, %v2068
        %v2070 = vrot.slane %v2069, 1
        %v2071 = vadd.f32 %v2069, %v2070
        %v2072 = vsel %vm1931, %v1393, 0.0
        %v2073 = vrot.slane %v2072, 4
        %v2074 = vadd.f32 %v2072, %v2073
        %v2075 = vrot.slane %v2074, 2
        %v2076 = vadd.f32 %v2074, %v2075
        %v2077 = vrot.slane %v2076, 1
        %v2078 = vadd.f32 %v2076, %v2077
        %v2079 = vsel %vm1931, %v1398, 0.0
        %v2080 = vrot.slane %v2079, 4
        %v2081 = vadd.f32 %v2079, %v2080
        %v2082 = vrot.slane %v2081, 2
        %v2083 = vadd.f32 %v2081, %v2082
        %v2084 = vrot.slane %v2083, 1
        %v2085 = vadd.f32 %v2083, %v2084
        %v2086 = vsel %vm1931, %v1403, 0.0
        %v2087 = vrot.slane %v2086, 4
        %v2088 = vadd.f32 %v2086, %v2087
        %v2089 = vrot.slane %v2088, 2
        %v2090 = vadd.f32 %v2088, %v2089
        %v2091 = vrot.slane %v2090, 1
        %v2092 = vadd.f32 %v2090, %v2091
        %v2093 = vsel %vm1931, %v1408, 0.0
        %v2094 = vrot.slane %v2093, 4
        %v2095 = vadd.f32 %v2093, %v2094
        %v2096 = vrot.slane %v2095, 2
        %v2097 = vadd.f32 %v2095, %v2096
        %v2098 = vrot.slane %v2097, 1
        %v2099 = vadd.f32 %v2097, %v2098
        %v2100 = vsel %vm1931, %v1413, 0.0
        %v2101 = vrot.slane %v2100, 4
        %v2102 = vadd.f32 %v2100, %v2101
        %v2103 = vrot.slane %v2102, 2
        %v2104 = vadd.f32 %v2102, %v2103
        %v2105 = vrot.slane %v2104, 1
        %v2106 = vadd.f32 %v2104, %v2105
        %v2107 = vsel %vm1931, %v1418, 0.0
        %v2108 = vrot.slane %v2107, 4
        %v2109 = vadd.f32 %v2107, %v2108
        %v2110 = vrot.slane %v2109, 2
        %v2111 = vadd.f32 %v2109, %v2110
        %v2112 = vrot.slane %v2111, 1
        %v2113 = vadd.f32 %v2111, %v2112
        %v2114 = vsel %vm1931, %v1423, 0.0
        %v2115 = vrot.slane %v2114, 4
        %v2116 = vadd.f32 %v2114, %v2115
        %v2117 = vrot.slane %v2116, 2
        %v2118 = vadd.f32 %v2116, %v2117
        %v2119 = vrot.slane %v2118, 1
        %v2120 = vadd.f32 %v2118, %v2119
        %v2121 = vsel %vm1931, %v1428, 0.0
        %v2122 = vrot.slane %v2121, 4
        %v2123 = vadd.f32 %v2121, %v2122
        %v2124 = vrot.slane %v2123, 2
        %v2125 = vadd.f32 %v2123, %v2124
        %v2126 = vrot.slane %v2125, 1
        %v2127 = vadd.f32 %v2125, %v2126
        %v2128 = vsel %vm1931, %v1433, 0.0
        %v2129 = vrot.slane %v2128, 4
        %v2130 = vadd.f32 %v2128, %v2129
        %v2131 = vrot.slane %v2130, 2
        %v2132 = vadd.f32 %v2130, %v2131
        %v2133 = vrot.slane %v2132, 1
        %v2134 = vadd.f32 %v2132, %v2133
        %v2135 = vsel %vm1931, %v1438, 0.0
        %v2136 = vrot.slane %v2135, 4
        %v2137 = vadd.f32 %v2135, %v2136
        %v2138 = vrot.slane %v2137, 2
        %v2139 = vadd.f32 %v2137, %v2138
        %v2140 = vrot.slane %v2139, 1
        %v2141 = vadd.f32 %v2139, %v2140
        %v2142 = vsel %vm1931, %v1443, 0.0
        %v2143 = vrot.slane %v2142, 4
        %v2144 = vadd.f32 %v2142, %v2143
        %v2145 = vrot.slane %v2144, 2
        %v2146 = vadd.f32 %v2144, %v2145
        %v2147 = vrot.slane %v2146, 1
        %v2148 = vadd.f32 %v2146, %v2147
        %v2149 = vsel %vm1931, %v1448, 0.0
        %v2150 = vrot.slane %v2149, 4
        %v2151 = vadd.f32 %v2149, %v2150
        %v2152 = vrot.slane %v2151, 2
        %v2153 = vadd.f32 %v2151, %v2152
        %v2154 = vrot.slane %v2153, 1
        %v2155 = vadd.f32 %v2153, %v2154
        %v2156 = vsel %vm1931, %v1453, 0.0
        %v2157 = vrot.slane %v2156, 4
        %v2158 = vadd.f32 %v2156, %v2157
        %v2159 = vrot.slane %v2158, 2
        %v2160 = vadd.f32 %v2158, %v2159
        %v2161 = vrot.slane %v2160, 1
        %v2162 = vadd.f32 %v2160, %v2161
        %v2163 = vsel %vm1931, %v1458, 0.0
        %v2164 = vrot.slane %v2163, 4
        %v2165 = vadd.f32 %v2163, %v2164
        %v2166 = vrot.slane %v2165, 2
        %v2167 = vadd.f32 %v2165, %v2166
        %v2168 = vrot.slane %v2167, 1
        %v2169 = vadd.f32 %v2167, %v2168
        %v2170 = vsel %vm1931, %v1463, 0.0
        %v2171 = vrot.slane %v2170, 4
        %v2172 = vadd.f32 %v2170, %v2171
        %v2173 = vrot.slane %v2172, 2
        %v2174 = vadd.f32 %v2172, %v2173
        %v2175 = vrot.slane %v2174, 1
        %v2176 = vadd.f32 %v2174, %v2175
        %v2177 = vsel %vm1931, %v1468, 0.0
        %v2178 = vrot.slane %v2177, 4
        %v2179 = vadd.f32 %v2177, %v2178
        %v2180 = vrot.slane %v2179, 2
        %v2181 = vadd.f32 %v2179, %v2180
        %v2182 = vrot.slane %v2181, 1
        %v2183 = vadd.f32 %v2181, %v2182
        %v2184 = vsel %vm1931, %v1473, 0.0
        %v2185 = vrot.slane %v2184, 4
        %v2186 = vadd.f32 %v2184, %v2185
        %v2187 = vrot.slane %v2186, 2
        %v2188 = vadd.f32 %v2186, %v2187
        %v2189 = vrot.slane %v2188, 1
        %v2190 = vadd.f32 %v2188, %v2189
        %v2191 = vsel %vm1931, %v1478, 0.0
        %v2192 = vrot.slane %v2191, 4
        %v2193 = vadd.f32 %v2191, %v2192
        %v2194 = vrot.slane %v2193, 2
        %v2195 = vadd.f32 %v2193, %v2194
        %v2196 = vrot.slane %v2195, 1
        %v2197 = vadd.f32 %v2195, %v2196
        %v2198 = vsel %vm1931, %v1483, 0.0
        %v2199 = vrot.slane %v2198, 4
        %v2200 = vadd.f32 %v2198, %v2199
        %v2201 = vrot.slane %v2200, 2
        %v2202 = vadd.f32 %v2200, %v2201
        %v2203 = vrot.slane %v2202, 1
        %v2204 = vadd.f32 %v2202, %v2203
        %v2205 = vsel %vm1931, %v1488, 0.0
        %v2206 = vrot.slane %v2205, 4
        %v2207 = vadd.f32 %v2205, %v2206
        %v2208 = vrot.slane %v2207, 2
        %v2209 = vadd.f32 %v2207, %v2208
        %v2210 = vrot.slane %v2209, 1
        %v2211 = vadd.f32 %v2209, %v2210
        %v2212 = vsel %vm1931, %v1493, 0.0
        %v2213 = vrot.slane %v2212, 4
        %v2214 = vadd.f32 %v2212, %v2213
        %v2215 = vrot.slane %v2214, 2
        %v2216 = vadd.f32 %v2214, %v2215
        %v2217 = vrot.slane %v2216, 1
        %v2218 = vadd.f32 %v2216, %v2217
        %v2219 = vsel %vm1931, %v1498, 0.0
        %v2220 = vrot.slane %v2219, 4
        %v2221 = vadd.f32 %v2219, %v2220
        %v2222 = vrot.slane %v2221, 2
        %v2223 = vadd.f32 %v2221, %v2222
        %v2224 = vrot.slane %v2223, 1
        %v2225 = vadd.f32 %v2223, %v2224
        %v2226 = vsel %vm1931, %v1503, 0.0
        %v2227 = vrot.slane %v2226, 4
        %v2228 = vadd.f32 %v2226, %v2227
        %v2229 = vrot.slane %v2228, 2
        %v2230 = vadd.f32 %v2228, %v2229
        %v2231 = vrot.slane %v2230, 1
        %v2232 = vadd.f32 %v2230, %v2231
        %v2233 = vsel %vm1931, %v1508, 0.0
        %v2234 = vrot.slane %v2233, 4
        %v2235 = vadd.f32 %v2233, %v2234
        %v2236 = vrot.slane %v2235, 2
        %v2237 = vadd.f32 %v2235, %v2236
        %v2238 = vrot.slane %v2237, 1
        %v2239 = vadd.f32 %v2237, %v2238
        %v2240 = vsel %vm1931, %v1513, 0.0
        %v2241 = vrot.slane %v2240, 4
        %v2242 = vadd.f32 %v2240, %v2241
        %v2243 = vrot.slane %v2242, 2
        %v2244 = vadd.f32 %v2242, %v2243
        %v2245 = vrot.slane %v2244, 1
        %v2246 = vadd.f32 %v2244, %v2245
        %v2247 = vsel %vm1931, %v1518, 0.0
        %v2248 = vrot.slane %v2247, 4
        %v2249 = vadd.f32 %v2247, %v2248
        %v2250 = vrot.slane %v2249, 2
        %v2251 = vadd.f32 %v2249, %v2250
        %v2252 = vrot.slane %v2251, 1
        %v2253 = vadd.f32 %v2251, %v2252
        %v2254 = vsel %vm1931, %v1523, 0.0
        %v2255 = vrot.slane %v2254, 4
        %v2256 = vadd.f32 %v2254, %v2255
        %v2257 = vrot.slane %v2256, 2
        %v2258 = vadd.f32 %v2256, %v2257
        %v2259 = vrot.slane %v2258, 1
        %v2260 = vadd.f32 %v2258, %v2259
        %v2261 = vsel %vm1931, %v1528, 0.0
        %v2262 = vrot.slane %v2261, 4
        %v2263 = vadd.f32 %v2261, %v2262
        %v2264 = vrot.slane %v2263, 2
        %v2265 = vadd.f32 %v2263, %v2264
        %v2266 = vrot.slane %v2265, 1
        %v2267 = vadd.f32 %v2265, %v2266
        %v2268 = vsel %vm1931, %v1533, 0.0
        %v2269 = vrot.slane %v2268, 4
        %v2270 = vadd.f32 %v2268, %v2269
        %v2271 = vrot.slane %v2270, 2
        %v2272 = vadd.f32 %v2270, %v2271
        %v2273 = vrot.slane %v2272, 1
        %v2274 = vadd.f32 %v2272, %v2273
        %v2275 = vsel %vm1931, %v1538, 0.0
        %v2276 = vrot.slane %v2275, 4
        %v2277 = vadd.f32 %v2275, %v2276
        %v2278 = vrot.slane %v2277, 2
        %v2279 = vadd.f32 %v2277, %v2278
        %v2280 = vrot.slane %v2279, 1
        %v2281 = vadd.f32 %v2279, %v2280
        %v2282 = vsel %vm1931, %v1543, 0.0
        %v2283 = vrot.slane %v2282, 4
        %v2284 = vadd.f32 %v2282, %v2283
        %v2285 = vrot.slane %v2284, 2
        %v2286 = vadd.f32 %v2284, %v2285
        %v2287 = vrot.slane %v2286, 1
        %v2288 = vadd.f32 %v2286, %v2287
        %v2289 = vsel %vm1931, %v1548, 0.0
        %v2290 = vrot.slane %v2289, 4
        %v2291 = vadd.f32 %v2289, %v2290
        %v2292 = vrot.slane %v2291, 2
        %v2293 = vadd.f32 %v2291, %v2292
        %v2294 = vrot.slane %v2293, 1
        %v2295 = vadd.f32 %v2293, %v2294
        %v2296 = vsel %vm1931, %v1553, 0.0
        %v2297 = vrot.slane %v2296, 4
        %v2298 = vadd.f32 %v2296, %v2297
        %v2299 = vrot.slane %v2298, 2
        %v2300 = vadd.f32 %v2298, %v2299
        %v2301 = vrot.slane %v2300, 1
        %v2302 = vadd.f32 %v2300, %v2301
        %v2303 = vsel %vm1931, %v1558, 0.0
        %v2304 = vrot.slane %v2303, 4
        %v2305 = vadd.f32 %v2303, %v2304
        %v2306 = vrot.slane %v2305, 2
        %v2307 = vadd.f32 %v2305, %v2306
        %v2308 = vrot.slane %v2307, 1
        %v2309 = vadd.f32 %v2307, %v2308
        %v2310 = vsel %vm1931, %v1563, 0.0
        %v2311 = vrot.slane %v2310, 4
        %v2312 = vadd.f32 %v2310, %v2311
        %v2313 = vrot.slane %v2312, 2
        %v2314 = vadd.f32 %v2312, %v2313
        %v2315 = vrot.slane %v2314, 1
        %v2316 = vadd.f32 %v2314, %v2315
        %v2317 = vsel %vm1931, %v1568, 0.0
        %v2318 = vrot.slane %v2317, 4
        %v2319 = vadd.f32 %v2317, %v2318
        %v2320 = vrot.slane %v2319, 2
        %v2321 = vadd.f32 %v2319, %v2320
        %v2322 = vrot.slane %v2321, 1
        %v2323 = vadd.f32 %v2321, %v2322
        %v2324 = vsel %vm1931, %v1573, 0.0
        %v2325 = vrot.slane %v2324, 4
        %v2326 = vadd.f32 %v2324, %v2325
        %v2327 = vrot.slane %v2326, 2
        %v2328 = vadd.f32 %v2326, %v2327
        %v2329 = vrot.slane %v2328, 1
        %v2330 = vadd.f32 %v2328, %v2329
        %v2331 = vsel %vm1931, %v1578, 0.0
        %v2332 = vrot.slane %v2331, 4
        %v2333 = vadd.f32 %v2331, %v2332
        %v2334 = vrot.slane %v2333, 2
        %v2335 = vadd.f32 %v2333, %v2334
        %v2336 = vrot.slane %v2335, 1
        %v2337 = vadd.f32 %v2335, %v2336
        %v2338 = vsel %vm1931, %v1583, 0.0
        %v2339 = vrot.slane %v2338, 4
        %v2340 = vadd.f32 %v2338, %v2339
        %v2341 = vrot.slane %v2340, 2
        %v2342 = vadd.f32 %v2340, %v2341
        %v2343 = vrot.slane %v2342, 1
        %v2344 = vadd.f32 %v2342, %v2343
        %v2345 = vsel %vm1931, %v1588, 0.0
        %v2346 = vrot.slane %v2345, 4
        %v2347 = vadd.f32 %v2345, %v2346
        %v2348 = vrot.slane %v2347, 2
        %v2349 = vadd.f32 %v2347, %v2348
        %v2350 = vrot.slane %v2349, 1
        %v2351 = vadd.f32 %v2349, %v2350
        %v2352 = vsel %vm1931, %v1593, 0.0
        %v2353 = vrot.slane %v2352, 4
        %v2354 = vadd.f32 %v2352, %v2353
        %v2355 = vrot.slane %v2354, 2
        %v2356 = vadd.f32 %v2354, %v2355
        %v2357 = vrot.slane %v2356, 1
        %v2358 = vadd.f32 %v2356, %v2357
        %v2359 = vsel %vm1931, %v1598, 0.0
        %v2360 = vrot.slane %v2359, 4
        %v2361 = vadd.f32 %v2359, %v2360
        %v2362 = vrot.slane %v2361, 2
        %v2363 = vadd.f32 %v2361, %v2362
        %v2364 = vrot.slane %v2363, 1
        %v2365 = vadd.f32 %v2363, %v2364
        %v2366 = vsel %vm1931, %v1603, 0.0
        %v2367 = vrot.slane %v2366, 4
        %v2368 = vadd.f32 %v2366, %v2367
        %v2369 = vrot.slane %v2368, 2
        %v2370 = vadd.f32 %v2368, %v2369
        %v2371 = vrot.slane %v2370, 1
        %v2372 = vadd.f32 %v2370, %v2371
        %v2373 = vsel %vm1931, %v1608, 0.0
        %v2374 = vrot.slane %v2373, 4
        %v2375 = vadd.f32 %v2373, %v2374
        %v2376 = vrot.slane %v2375, 2
        %v2377 = vadd.f32 %v2375, %v2376
        %v2378 = vrot.slane %v2377, 1
        %v2379 = vadd.f32 %v2377, %v2378
        %v2380 = vsel %vm1931, %v1613, 0.0
        %v2381 = vrot.slane %v2380, 4
        %v2382 = vadd.f32 %v2380, %v2381
        %v2383 = vrot.slane %v2382, 2
        %v2384 = vadd.f32 %v2382, %v2383
        %v2385 = vrot.slane %v2384, 1
        %v2386 = vadd.f32 %v2384, %v2385
        %v2387 = vsel %vm1931, %v1618, 0.0
        %v2388 = vrot.slane %v2387, 4
        %v2389 = vadd.f32 %v2387, %v2388
        %v2390 = vrot.slane %v2389, 2
        %v2391 = vadd.f32 %v2389, %v2390
        %v2392 = vrot.slane %v2391, 1
        %v2393 = vadd.f32 %v2391, %v2392
        %v2394 = vsel %vm1931, %v1623, 0.0
        %v2395 = vrot.slane %v2394, 4
        %v2396 = vadd.f32 %v2394, %v2395
        %v2397 = vrot.slane %v2396, 2
        %v2398 = vadd.f32 %v2396, %v2397
        %v2399 = vrot.slane %v2398, 1
        %v2400 = vadd.f32 %v2398, %v2399
        %v2401 = vsel %vm1931, %v1628, 0.0
        %v2402 = vrot.slane %v2401, 4
        %v2403 = vadd.f32 %v2401, %v2402
        %v2404 = vrot.slane %v2403, 2
        %v2405 = vadd.f32 %v2403, %v2404
        %v2406 = vrot.slane %v2405, 1
        %v2407 = vadd.f32 %v2405, %v2406
        %v2408 = vsel %vm1931, %v1633, 0.0
        %v2409 = vrot.slane %v2408, 4
        %v2410 = vadd.f32 %v2408, %v2409
        %v2411 = vrot.slane %v2410, 2
        %v2412 = vadd.f32 %v2410, %v2411
        %v2413 = vrot.slane %v2412, 1
        %v2414 = vadd.f32 %v2412, %v2413
        %v2415 = vsel %vm1931, %v1638, 0.0
        %v2416 = vrot.slane %v2415, 4
        %v2417 = vadd.f32 %v2415, %v2416
        %v2418 = vrot.slane %v2417, 2
        %v2419 = vadd.f32 %v2417, %v2418
        %v2420 = vrot.slane %v2419, 1
        %v2421 = vadd.f32 %v2419, %v2420
        %v2422 = vsel %vm1931, %v1643, 0.0
        %v2423 = vrot.slane %v2422, 4
        %v2424 = vadd.f32 %v2422, %v2423
        %v2425 = vrot.slane %v2424, 2
        %v2426 = vadd.f32 %v2424, %v2425
        %v2427 = vrot.slane %v2426, 1
        %v2428 = vadd.f32 %v2426, %v2427
        %v2429 = vsel %vm1931, %v1648, 0.0
        %v2430 = vrot.slane %v2429, 4
        %v2431 = vadd.f32 %v2429, %v2430
        %v2432 = vrot.slane %v2431, 2
        %v2433 = vadd.f32 %v2431, %v2432
        %v2434 = vrot.slane %v2433, 1
        %v2435 = vadd.f32 %v2433, %v2434
        %v2436 = vsel %vm1931, %v1653, 0.0
        %v2437 = vrot.slane %v2436, 4
        %v2438 = vadd.f32 %v2436, %v2437
        %v2439 = vrot.slane %v2438, 2
        %v2440 = vadd.f32 %v2438, %v2439
        %v2441 = vrot.slane %v2440, 1
        %v2442 = vadd.f32 %v2440, %v2441
        %v2443 = vsel %vm1931, %v1658, 0.0
        %v2444 = vrot.slane %v2443, 4
        %v2445 = vadd.f32 %v2443, %v2444
        %v2446 = vrot.slane %v2445, 2
        %v2447 = vadd.f32 %v2445, %v2446
        %v2448 = vrot.slane %v2447, 1
        %v2449 = vadd.f32 %v2447, %v2448
        %v2450 = vsel %vm1931, %v1663, 0.0
        %v2451 = vrot.slane %v2450, 4
        %v2452 = vadd.f32 %v2450, %v2451
        %v2453 = vrot.slane %v2452, 2
        %v2454 = vadd.f32 %v2452, %v2453
        %v2455 = vrot.slane %v2454, 1
        %v2456 = vadd.f32 %v2454, %v2455
        %v2457 = vsel %vm1931, %v1668, 0.0
        %v2458 = vrot.slane %v2457, 4
        %v2459 = vadd.f32 %v2457, %v2458
        %v2460 = vrot.slane %v2459, 2
        %v2461 = vadd.f32 %v2459, %v2460
        %v2462 = vrot.slane %v2461, 1
        %v2463 = vadd.f32 %v2461, %v2462
        %v2464 = vsel %vm1931, %v1673, 0.0
        %v2465 = vrot.slane %v2464, 4
        %v2466 = vadd.f32 %v2464, %v2465
        %v2467 = vrot.slane %v2466, 2
        %v2468 = vadd.f32 %v2466, %v2467
        %v2469 = vrot.slane %v2468, 1
        %v2470 = vadd.f32 %v2468, %v2469
        %v2471 = vsel %vm1931, %v1678, 0.0
        %v2472 = vrot.slane %v2471, 4
        %v2473 = vadd.f32 %v2471, %v2472
        %v2474 = vrot.slane %v2473, 2
        %v2475 = vadd.f32 %v2473, %v2474
        %v2476 = vrot.slane %v2475, 1
        %v2477 = vadd.f32 %v2475, %v2476
        %v2478 = vsel %vm1931, %v1683, 0.0
        %v2479 = vrot.slane %v2478, 4
        %v2480 = vadd.f32 %v2478, %v2479
        %v2481 = vrot.slane %v2480, 2
        %v2482 = vadd.f32 %v2480, %v2481
        %v2483 = vrot.slane %v2482, 1
        %v2484 = vadd.f32 %v2482, %v2483
        %v2485 = vsel %vm1931, %v1688, 0.0
        %v2486 = vrot.slane %v2485, 4
        %v2487 = vadd.f32 %v2485, %v2486
        %v2488 = vrot.slane %v2487, 2
        %v2489 = vadd.f32 %v2487, %v2488
        %v2490 = vrot.slane %v2489, 1
        %v2491 = vadd.f32 %v2489, %v2490
        %v2492 = vsel %vm1931, %v1693, 0.0
        %v2493 = vrot.slane %v2492, 4
        %v2494 = vadd.f32 %v2492, %v2493
        %v2495 = vrot.slane %v2494, 2
        %v2496 = vadd.f32 %v2494, %v2495
        %v2497 = vrot.slane %v2496, 1
        %v2498 = vadd.f32 %v2496, %v2497
        %v2499 = vsel %vm1931, %v1698, 0.0
        %v2500 = vrot.slane %v2499, 4
        %v2501 = vadd.f32 %v2499, %v2500
        %v2502 = vrot.slane %v2501, 2
        %v2503 = vadd.f32 %v2501, %v2502
        %v2504 = vrot.slane %v2503, 1
        %v2505 = vadd.f32 %v2503, %v2504
        %v2506 = vsel %vm1931, %v1703, 0.0
        %v2507 = vrot.slane %v2506, 4
        %v2508 = vadd.f32 %v2506, %v2507
        %v2509 = vrot.slane %v2508, 2
        %v2510 = vadd.f32 %v2508, %v2509
        %v2511 = vrot.slane %v2510, 1
        %v2512 = vadd.f32 %v2510, %v2511
        %v2513 = vsel %vm1931, %v1708, 0.0
        %v2514 = vrot.slane %v2513, 4
        %v2515 = vadd.f32 %v2513, %v2514
        %v2516 = vrot.slane %v2515, 2
        %v2517 = vadd.f32 %v2515, %v2516
        %v2518 = vrot.slane %v2517, 1
        %v2519 = vadd.f32 %v2517, %v2518
        %v2520 = vsel %vm1931, %v1713, 0.0
        %v2521 = vrot.slane %v2520, 4
        %v2522 = vadd.f32 %v2520, %v2521
        %v2523 = vrot.slane %v2522, 2
        %v2524 = vadd.f32 %v2522, %v2523
        %v2525 = vrot.slane %v2524, 1
        %v2526 = vadd.f32 %v2524, %v2525
        %v2527 = vsel %vm1931, %v1718, 0.0
        %v2528 = vrot.slane %v2527, 4
        %v2529 = vadd.f32 %v2527, %v2528
        %v2530 = vrot.slane %v2529, 2
        %v2531 = vadd.f32 %v2529, %v2530
        %v2532 = vrot.slane %v2531, 1
        %v2533 = vadd.f32 %v2531, %v2532
        %v2534 = vsel %vm1931, %v1723, 0.0
        %v2535 = vrot.slane %v2534, 4
        %v2536 = vadd.f32 %v2534, %v2535
        %v2537 = vrot.slane %v2536, 2
        %v2538 = vadd.f32 %v2536, %v2537
        %v2539 = vrot.slane %v2538, 1
        %v2540 = vadd.f32 %v2538, %v2539
        %v2541 = vsel %vm1931, %v1728, 0.0
        %v2542 = vrot.slane %v2541, 4
        %v2543 = vadd.f32 %v2541, %v2542
        %v2544 = vrot.slane %v2543, 2
        %v2545 = vadd.f32 %v2543, %v2544
        %v2546 = vrot.slane %v2545, 1
        %v2547 = vadd.f32 %v2545, %v2546
        %v2548 = vsel %vm1931, %v1733, 0.0
        %v2549 = vrot.slane %v2548, 4
        %v2550 = vadd.f32 %v2548, %v2549
        %v2551 = vrot.slane %v2550, 2
        %v2552 = vadd.f32 %v2550, %v2551
        %v2553 = vrot.slane %v2552, 1
        %v2554 = vadd.f32 %v2552, %v2553
        %v2555 = vsel %vm1931, %v1738, 0.0
        %v2556 = vrot.slane %v2555, 4
        %v2557 = vadd.f32 %v2555, %v2556
        %v2558 = vrot.slane %v2557, 2
        %v2559 = vadd.f32 %v2557, %v2558
        %v2560 = vrot.slane %v2559, 1
        %v2561 = vadd.f32 %v2559, %v2560
        %v2562 = vsel %vm1931, %v1743, 0.0
        %v2563 = vrot.slane %v2562, 4
        %v2564 = vadd.f32 %v2562, %v2563
        %v2565 = vrot.slane %v2564, 2
        %v2566 = vadd.f32 %v2564, %v2565
        %v2567 = vrot.slane %v2566, 1
        %v2568 = vadd.f32 %v2566, %v2567
        %v2569 = vsel %vm1931, %v1748, 0.0
        %v2570 = vrot.slane %v2569, 4
        %v2571 = vadd.f32 %v2569, %v2570
        %v2572 = vrot.slane %v2571, 2
        %v2573 = vadd.f32 %v2571, %v2572
        %v2574 = vrot.slane %v2573, 1
        %v2575 = vadd.f32 %v2573, %v2574
        %v2576 = vsel %vm1931, %v1753, 0.0
        %v2577 = vrot.slane %v2576, 4
        %v2578 = vadd.f32 %v2576, %v2577
        %v2579 = vrot.slane %v2578, 2
        %v2580 = vadd.f32 %v2578, %v2579
        %v2581 = vrot.slane %v2580, 1
        %v2582 = vadd.f32 %v2580, %v2581
        %v2583 = vsel %vm1931, %v1758, 0.0
        %v2584 = vrot.slane %v2583, 4
        %v2585 = vadd.f32 %v2583, %v2584
        %v2586 = vrot.slane %v2585, 2
        %v2587 = vadd.f32 %v2585, %v2586
        %v2588 = vrot.slane %v2587, 1
        %v2589 = vadd.f32 %v2587, %v2588
        %v2590 = vsel %vm1931, %v1763, 0.0
        %v2591 = vrot.slane %v2590, 4
        %v2592 = vadd.f32 %v2590, %v2591
        %v2593 = vrot.slane %v2592, 2
        %v2594 = vadd.f32 %v2592, %v2593
        %v2595 = vrot.slane %v2594, 1
        %v2596 = vadd.f32 %v2594, %v2595
        %v2597 = vsel %vm1931, %v1768, 0.0
        %v2598 = vrot.slane %v2597, 4
        %v2599 = vadd.f32 %v2597, %v2598
        %v2600 = vrot.slane %v2599, 2
        %v2601 = vadd.f32 %v2599, %v2600
        %v2602 = vrot.slane %v2601, 1
        %v2603 = vadd.f32 %v2601, %v2602
        %v2604 = vsel %vm1931, %v1773, 0.0
        %v2605 = vrot.slane %v2604, 4
        %v2606 = vadd.f32 %v2604, %v2605
        %v2607 = vrot.slane %v2606, 2
        %v2608 = vadd.f32 %v2606, %v2607
        %v2609 = vrot.slane %v2608, 1
        %v2610 = vadd.f32 %v2608, %v2609
        %v2611 = vsel %vm1931, %v1778, 0.0
        %v2612 = vrot.slane %v2611, 4
        %v2613 = vadd.f32 %v2611, %v2612
        %v2614 = vrot.slane %v2613, 2
        %v2615 = vadd.f32 %v2613, %v2614
        %v2616 = vrot.slane %v2615, 1
        %v2617 = vadd.f32 %v2615, %v2616
        %v2618 = vsel %vm1931, %v1783, 0.0
        %v2619 = vrot.slane %v2618, 4
        %v2620 = vadd.f32 %v2618, %v2619
        %v2621 = vrot.slane %v2620, 2
        %v2622 = vadd.f32 %v2620, %v2621
        %v2623 = vrot.slane %v2622, 1
        %v2624 = vadd.f32 %v2622, %v2623
        %v2625 = vsel %vm1931, %v1788, 0.0
        %v2626 = vrot.slane %v2625, 4
        %v2627 = vadd.f32 %v2625, %v2626
        %v2628 = vrot.slane %v2627, 2
        %v2629 = vadd.f32 %v2627, %v2628
        %v2630 = vrot.slane %v2629, 1
        %v2631 = vadd.f32 %v2629, %v2630
        %v2632 = vsel %vm1931, %v1793, 0.0
        %v2633 = vrot.slane %v2632, 4
        %v2634 = vadd.f32 %v2632, %v2633
        %v2635 = vrot.slane %v2634, 2
        %v2636 = vadd.f32 %v2634, %v2635
        %v2637 = vrot.slane %v2636, 1
        %v2638 = vadd.f32 %v2636, %v2637
        %v2639 = vsel %vm1931, %v1798, 0.0
        %v2640 = vrot.slane %v2639, 4
        %v2641 = vadd.f32 %v2639, %v2640
        %v2642 = vrot.slane %v2641, 2
        %v2643 = vadd.f32 %v2641, %v2642
        %v2644 = vrot.slane %v2643, 1
        %v2645 = vadd.f32 %v2643, %v2644
        %v2646 = vsel %vm1931, %v1803, 0.0
        %v2647 = vrot.slane %v2646, 4
        %v2648 = vadd.f32 %v2646, %v2647
        %v2649 = vrot.slane %v2648, 2
        %v2650 = vadd.f32 %v2648, %v2649
        %v2651 = vrot.slane %v2650, 1
        %v2652 = vadd.f32 %v2650, %v2651
        %v2653 = vsel %vm1931, %v1808, 0.0
        %v2654 = vrot.slane %v2653, 4
        %v2655 = vadd.f32 %v2653, %v2654
        %v2656 = vrot.slane %v2655, 2
        %v2657 = vadd.f32 %v2655, %v2656
        %v2658 = vrot.slane %v2657, 1
        %v2659 = vadd.f32 %v2657, %v2658
        %v2660 = vsel %vm1931, %v1813, 0.0
        %v2661 = vrot.slane %v2660, 4
        %v2662 = vadd.f32 %v2660, %v2661
        %v2663 = vrot.slane %v2662, 2
        %v2664 = vadd.f32 %v2662, %v2663
        %v2665 = vrot.slane %v2664, 1
        %v2666 = vadd.f32 %v2664, %v2665
        %v2667 = vsel %vm1931, %v1818, 0.0
        %v2668 = vrot.slane %v2667, 4
        %v2669 = vadd.f32 %v2667, %v2668
        %v2670 = vrot.slane %v2669, 2
        %v2671 = vadd.f32 %v2669, %v2670
        %v2672 = vrot.slane %v2671, 1
        %v2673 = vadd.f32 %v2671, %v2672
        %v2674 = vsel %vm1931, %v1823, 0.0
        %v2675 = vrot.slane %v2674, 4
        %v2676 = vadd.f32 %v2674, %v2675
        %v2677 = vrot.slane %v2676, 2
        %v2678 = vadd.f32 %v2676, %v2677
        %v2679 = vrot.slane %v2678, 1
        %v2680 = vadd.f32 %v2678, %v2679
        %v2681 = vsel %vm1931, %v1828, 0.0
        %v2682 = vrot.slane %v2681, 4
        %v2683 = vadd.f32 %v2681, %v2682
        %v2684 = vrot.slane %v2683, 2
        %v2685 = vadd.f32 %v2683, %v2684
        %v2686 = vrot.slane %v2685, 1
        %v2687 = vadd.f32 %v2685, %v2686
        %v2688 = vsel %vm1931, %v1833, 0.0
        %v2689 = vrot.slane %v2688, 4
        %v2690 = vadd.f32 %v2688, %v2689
        %v2691 = vrot.slane %v2690, 2
        %v2692 = vadd.f32 %v2690, %v2691
        %v2693 = vrot.slane %v2692, 1
        %v2694 = vadd.f32 %v2692, %v2693
        %v2695 = vsel %vm1931, %v1838, 0.0
        %v2696 = vrot.slane %v2695, 4
        %v2697 = vadd.f32 %v2695, %v2696
        %v2698 = vrot.slane %v2697, 2
        %v2699 = vadd.f32 %v2697, %v2698
        %v2700 = vrot.slane %v2699, 1
        %v2701 = vadd.f32 %v2699, %v2700
        %v2702 = vsel %vm1931, %v1843, 0.0
        %v2703 = vrot.slane %v2702, 4
        %v2704 = vadd.f32 %v2702, %v2703
        %v2705 = vrot.slane %v2704, 2
        %v2706 = vadd.f32 %v2704, %v2705
        %v2707 = vrot.slane %v2706, 1
        %v2708 = vadd.f32 %v2706, %v2707
        %v2709 = vsel %vm1931, %v1848, 0.0
        %v2710 = vrot.slane %v2709, 4
        %v2711 = vadd.f32 %v2709, %v2710
        %v2712 = vrot.slane %v2711, 2
        %v2713 = vadd.f32 %v2711, %v2712
        %v2714 = vrot.slane %v2713, 1
        %v2715 = vadd.f32 %v2713, %v2714
        %v2716 = vsel %vm1931, %v1853, 0.0
        %v2717 = vrot.slane %v2716, 4
        %v2718 = vadd.f32 %v2716, %v2717
        %v2719 = vrot.slane %v2718, 2
        %v2720 = vadd.f32 %v2718, %v2719
        %v2721 = vrot.slane %v2720, 1
        %v2722 = vadd.f32 %v2720, %v2721
        %v2723 = vsel %vm1931, %v1858, 0.0
        %v2724 = vrot.slane %v2723, 4
        %v2725 = vadd.f32 %v2723, %v2724
        %v2726 = vrot.slane %v2725, 2
        %v2727 = vadd.f32 %v2725, %v2726
        %v2728 = vrot.slane %v2727, 1
        %v2729 = vadd.f32 %v2727, %v2728
        %v2730 = vsel %vm1931, %v1863, 0.0
        %v2731 = vrot.slane %v2730, 4
        %v2732 = vadd.f32 %v2730, %v2731
        %v2733 = vrot.slane %v2732, 2
        %v2734 = vadd.f32 %v2732, %v2733
        %v2735 = vrot.slane %v2734, 1
        %v2736 = vadd.f32 %v2734, %v2735
        %v2737 = vsel %vm1931, %v1868, 0.0
        %v2738 = vrot.slane %v2737, 4
        %v2739 = vadd.f32 %v2737, %v2738
        %v2740 = vrot.slane %v2739, 2
        %v2741 = vadd.f32 %v2739, %v2740
        %v2742 = vrot.slane %v2741, 1
        %v2743 = vadd.f32 %v2741, %v2742
        %v2744 = vsel %vm1931, %v1873, 0.0
        %v2745 = vrot.slane %v2744, 4
        %v2746 = vadd.f32 %v2744, %v2745
        %v2747 = vrot.slane %v2746, 2
        %v2748 = vadd.f32 %v2746, %v2747
        %v2749 = vrot.slane %v2748, 1
        %v2750 = vadd.f32 %v2748, %v2749
        %v2751 = vsel %vm1931, %v1878, 0.0
        %v2752 = vrot.slane %v2751, 4
        %v2753 = vadd.f32 %v2751, %v2752
        %v2754 = vrot.slane %v2753, 2
        %v2755 = vadd.f32 %v2753, %v2754
        %v2756 = vrot.slane %v2755, 1
        %v2757 = vadd.f32 %v2755, %v2756
        %v2758 = vsel %vm1931, %v1883, 0.0
        %v2759 = vrot.slane %v2758, 4
        %v2760 = vadd.f32 %v2758, %v2759
        %v2761 = vrot.slane %v2760, 2
        %v2762 = vadd.f32 %v2760, %v2761
        %v2763 = vrot.slane %v2762, 1
        %v2764 = vadd.f32 %v2762, %v2763
        %v2765 = vsel %vm1931, %v1888, 0.0
        %v2766 = vrot.slane %v2765, 4
        %v2767 = vadd.f32 %v2765, %v2766
        %v2768 = vrot.slane %v2767, 2
        %v2769 = vadd.f32 %v2767, %v2768
        %v2770 = vrot.slane %v2769, 1
        %v2771 = vadd.f32 %v2769, %v2770
        %v2772 = vsel %vm1931, %v1893, 0.0
        %v2773 = vrot.slane %v2772, 4
        %v2774 = vadd.f32 %v2772, %v2773
        %v2775 = vrot.slane %v2774, 2
        %v2776 = vadd.f32 %v2774, %v2775
        %v2777 = vrot.slane %v2776, 1
        %v2778 = vadd.f32 %v2776, %v2777
        %v2779 = vsel %vm1931, %v1898, 0.0
        %v2780 = vrot.slane %v2779, 4
        %v2781 = vadd.f32 %v2779, %v2780
        %v2782 = vrot.slane %v2781, 2
        %v2783 = vadd.f32 %v2781, %v2782
        %v2784 = vrot.slane %v2783, 1
        %v2785 = vadd.f32 %v2783, %v2784
        %v2786 = vsel %vm1931, %v1903, 0.0
        %v2787 = vrot.slane %v2786, 4
        %v2788 = vadd.f32 %v2786, %v2787
        %v2789 = vrot.slane %v2788, 2
        %v2790 = vadd.f32 %v2788, %v2789
        %v2791 = vrot.slane %v2790, 1
        %v2792 = vadd.f32 %v2790, %v2791
        %v2793 = vsel %vm1931, %v1908, 0.0
        %v2794 = vrot.slane %v2793, 4
        %v2795 = vadd.f32 %v2793, %v2794
        %v2796 = vrot.slane %v2795, 2
        %v2797 = vadd.f32 %v2795, %v2796
        %v2798 = vrot.slane %v2797, 1
        %v2799 = vadd.f32 %v2797, %v2798
        %v2800 = vsel %vm1931, %v1913, 0.0
        %v2801 = vrot.slane %v2800, 4
        %v2802 = vadd.f32 %v2800, %v2801
        %v2803 = vrot.slane %v2802, 2
        %v2804 = vadd.f32 %v2802, %v2803
        %v2805 = vrot.slane %v2804, 1
        %v2806 = vadd.f32 %v2804, %v2805
        %v2807 = vsel %vm1931, %v1918, 0.0
        %v2808 = vrot.slane %v2807, 4
        %v2809 = vadd.f32 %v2807, %v2808
        %v2810 = vrot.slane %v2809, 2
        %v2811 = vadd.f32 %v2809, %v2810
        %v2812 = vrot.slane %v2811, 1
        %v2813 = vadd.f32 %v2811, %v2812
        %v2814 = vsel %vm1931, %v1923, 0.0
        %v2815 = vrot.slane %v2814, 4
        %v2816 = vadd.f32 %v2814, %v2815
        %v2817 = vrot.slane %v2816, 2
        %v2818 = vadd.f32 %v2816, %v2817
        %v2819 = vrot.slane %v2818, 1
        %v2820 = vadd.f32 %v2818, %v2819
        %v2821 = vsel %vm1931, %v1928, 0.0
        %v2822 = vrot.slane %v2821, 4
        %v2823 = vadd.f32 %v2821, %v2822
        %v2824 = vrot.slane %v2823, 2
        %v2825 = vadd.f32 %v2823, %v2824
        %v2826 = vrot.slane %v2825, 1
        %v2827 = vadd.f32 %v2825, %v2826
        %vm2956 = vcmask 1041409
        %v2957 = vsel %vm2956, %v1945, %v1938
        %vm2958 = vcmask 1042434
        %v2959 = vsel %vm2958, %v1952, %v2957
        %vm2960 = vcmask 1043459
        %v2961 = vsel %vm2960, %v1959, %v2959
        %vm2962 = vcmask 1044484
        %v2963 = vsel %vm2962, %v1966, %v2961
        %vm2964 = vcmask 1045509
        %v2965 = vsel %vm2964, %v1973, %v2963
        %vm2966 = vcmask 1046534
        %v2967 = vsel %vm2966, %v1980, %v2965
        %vm2968 = vcmask 1047559
        %v2969 = vsel %vm2968, %v1987, %v2967
        %v2970 = vsel %vm2956, %v2001, %v1994
        %v2971 = vsel %vm2958, %v2008, %v2970
        %v2972 = vsel %vm2960, %v2015, %v2971
        %v2973 = vsel %vm2962, %v2022, %v2972
        %v2974 = vsel %vm2964, %v2029, %v2973
        %v2975 = vsel %vm2966, %v2036, %v2974
        %v2976 = vsel %vm2968, %v2043, %v2975
        %v2977 = vsel %vm2956, %v2057, %v2050
        %v2978 = vsel %vm2958, %v2064, %v2977
        %v2979 = vsel %vm2960, %v2071, %v2978
        %v2980 = vsel %vm2962, %v2078, %v2979
        %v2981 = vsel %vm2964, %v2085, %v2980
        %v2982 = vsel %vm2966, %v2092, %v2981
        %v2983 = vsel %vm2968, %v2099, %v2982
        %v2984 = vsel %vm2956, %v2113, %v2106
        %v2985 = vsel %vm2958, %v2120, %v2984
        %v2986 = vsel %vm2960, %v2127, %v2985
        %v2987 = vsel %vm2962, %v2134, %v2986
        %v2988 = vsel %vm2964, %v2141, %v2987
        %v2989 = vsel %vm2966, %v2148, %v2988
        %v2990 = vsel %vm2968, %v2155, %v2989
        %v2991 = vsel %vm2956, %v2169, %v2162
        %v2992 = vsel %vm2958, %v2176, %v2991
        %v2993 = vsel %vm2960, %v2183, %v2992
        %v2994 = vsel %vm2962, %v2190, %v2993
        %v2995 = vsel %vm2964, %v2197, %v2994
        %v2996 = vsel %vm2966, %v2204, %v2995
        %v2997 = vsel %vm2968, %v2211, %v2996
        %v2998 = vsel %vm2956, %v2225, %v2218
        %v2999 = vsel %vm2958, %v2232, %v2998
        %v3000 = vsel %vm2960, %v2239, %v2999
        %v3001 = vsel %vm2962, %v2246, %v3000
        %v3002 = vsel %vm2964, %v2253, %v3001
        %v3003 = vsel %vm2966, %v2260, %v3002
        %v3004 = vsel %vm2968, %v2267, %v3003
        %v3005 = vsel %vm2956, %v2281, %v2274
        %v3006 = vsel %vm2958, %v2288, %v3005
        %v3007 = vsel %vm2960, %v2295, %v3006
        %v3008 = vsel %vm2962, %v2302, %v3007
        %v3009 = vsel %vm2964, %v2309, %v3008
        %v3010 = vsel %vm2966, %v2316, %v3009
        %v3011 = vsel %vm2968, %v2323, %v3010
        %v3012 = vsel %vm2956, %v2337, %v2330
        %v3013 = vsel %vm2958, %v2344, %v3012
        %v3014 = vsel %vm2960, %v2351, %v3013
        %v3015 = vsel %vm2962, %v2358, %v3014
        %v3016 = vsel %vm2964, %v2365, %v3015
        %v3017 = vsel %vm2966, %v2372, %v3016
        %v3018 = vsel %vm2968, %v2379, %v3017
        %v3019 = vsel %vm2956, %v2393, %v2386
        %v3020 = vsel %vm2958, %v2400, %v3019
        %v3021 = vsel %vm2960, %v2407, %v3020
        %v3022 = vsel %vm2962, %v2414, %v3021
        %v3023 = vsel %vm2964, %v2421, %v3022
        %v3024 = vsel %vm2966, %v2428, %v3023
        %v3025 = vsel %vm2968, %v2435, %v3024
        %v3026 = vsel %vm2956, %v2449, %v2442
        %v3027 = vsel %vm2958, %v2456, %v3026
        %v3028 = vsel %vm2960, %v2463, %v3027
        %v3029 = vsel %vm2962, %v2470, %v3028
        %v3030 = vsel %vm2964, %v2477, %v3029
        %v3031 = vsel %vm2966, %v2484, %v3030
        %v3032 = vsel %vm2968, %v2491, %v3031
        %v3033 = vsel %vm2956, %v2505, %v2498
        %v3034 = vsel %vm2958, %v2512, %v3033
        %v3035 = vsel %vm2960, %v2519, %v3034
        %v3036 = vsel %vm2962, %v2526, %v3035
        %v3037 = vsel %vm2964, %v2533, %v3036
        %v3038 = vsel %vm2966, %v2540, %v3037
        %v3039 = vsel %vm2968, %v2547, %v3038
        %v3040 = vsel %vm2956, %v2561, %v2554
        %v3041 = vsel %vm2958, %v2568, %v3040
        %v3042 = vsel %vm2960, %v2575, %v3041
        %v3043 = vsel %vm2962, %v2582, %v3042
        %v3044 = vsel %vm2964, %v2589, %v3043
        %v3045 = vsel %vm2966, %v2596, %v3044
        %v3046 = vsel %vm2968, %v2603, %v3045
        %v3047 = vsel %vm2956, %v2617, %v2610
        %v3048 = vsel %vm2958, %v2624, %v3047
        %v3049 = vsel %vm2960, %v2631, %v3048
        %v3050 = vsel %vm2962, %v2638, %v3049
        %v3051 = vsel %vm2964, %v2645, %v3050
        %v3052 = vsel %vm2966, %v2652, %v3051
        %v3053 = vsel %vm2968, %v2659, %v3052
        %v3054 = vsel %vm2956, %v2673, %v2666
        %v3055 = vsel %vm2958, %v2680, %v3054
        %v3056 = vsel %vm2960, %v2687, %v3055
        %v3057 = vsel %vm2962, %v2694, %v3056
        %v3058 = vsel %vm2964, %v2701, %v3057
        %v3059 = vsel %vm2966, %v2708, %v3058
        %v3060 = vsel %vm2968, %v2715, %v3059
        %v3061 = vsel %vm2956, %v2729, %v2722
        %v3062 = vsel %vm2958, %v2736, %v3061
        %v3063 = vsel %vm2960, %v2743, %v3062
        %v3064 = vsel %vm2962, %v2750, %v3063
        %v3065 = vsel %vm2964, %v2757, %v3064
        %v3066 = vsel %vm2966, %v2764, %v3065
        %v3067 = vsel %vm2968, %v2771, %v3066
        %v3068 = vsel %vm2956, %v2785, %v2778
        %v3069 = vsel %vm2958, %v2792, %v3068
        %v3070 = vsel %vm2960, %v2799, %v3069
        %v3071 = vsel %vm2962, %v2806, %v3070
        %v3072 = vsel %vm2964, %v2813, %v3071
        %v3073 = vsel %vm2966, %v2820, %v3072
        %v3074 = vsel %vm2968, %v2827, %v3073
        %v3076 = vsel %vm1931, 1.0, 0
        %v3078 = vsel %vm1931, %v2969, 0
        %v3080 = vsel %vm1931, %v2976, 0
        %v3082 = vsel %vm1931, %v2983, 0
        %v3084 = vsel %vm1931, %v2990, 0
        %v3086 = vsel %vm1931, %v2997, 0
        %v3088 = vsel %vm1931, %v3004, 0
        %v3090 = vsel %vm1931, %v3011, 0
        %v3092 = vsel %vm1931, %v3018, 0
        %v3094 = vsel %vm1931, %v3025, 0
        %v3096 = vsel %vm1931, %v3032, 0
        %v3098 = vsel %vm1931, %v3039, 0
        %v3100 = vsel %vm1931, %v3046, 0
        %v3102 = vsel %vm1931, %v3053, 0
        %v3104 = vsel %vm1931, %v3060, 0
        %v3106 = vsel %vm1931, %v3067, 0
        %v3108 = vsel %vm1931, %v3074, 0
        %3110 = vmatprep.subr.mxu0 0.0
        %3111 = vmatpush1.xpose.msra.mxu0 %v3108
        %3112 = vmatprep.subr.mxu0 0.0
        %3113 = vmatpush1.xpose.msra.mxu0 %v3106
        %3114 = vmatprep.subr.mxu0 0.0
        %3115 = vmatpush1.xpose.msra.mxu0 %v3104
        %3116 = vmatprep.subr.mxu0 0.0
        %3117 = vmatpush1.xpose.msra.mxu0 %v3102
        %3118 = vmatprep.subr.mxu0 0.0
        %3119 = vmatpush1.xpose.msra.mxu0 %v3100
        %3120 = vmatprep.subr.mxu0 0.0
        %3121 = vmatpush1.xpose.msra.mxu0 %v3098
        %3122 = vmatprep.subr.mxu0 0.0
        %3123 = vmatpush1.xpose.msra.mxu0 %v3096
        %3124 = vmatprep.subr.mxu0 0.0
        %3125 = vmatpush1.xpose.msra.mxu0 %v3094
        %3126 = vmatprep.subr.mxu0 0.0
        %3127 = vmatpush1.xpose.msra.mxu0 %v3092
        %3128 = vmatprep.subr.mxu0 0.0
        %3129 = vmatpush1.xpose.msra.mxu0 %v3090
        %3130 = vmatprep.subr.mxu0 0.0
        %3131 = vmatpush1.xpose.msra.mxu0 %v3088
        %3132 = vmatprep.subr.mxu0 0.0
        %3133 = vmatpush1.xpose.msra.mxu0 %v3086
        %3134 = vmatprep.subr.mxu0 0.0
        %3135 = vmatpush1.xpose.msra.mxu0 %v3084
        %3136 = vmatprep.subr.mxu0 0.0
        %3137 = vmatpush1.xpose.msra.mxu0 %v3082
        %3138 = vmatprep.subr.mxu0 0.0
        %3139 = vmatpush1.xpose.msra.mxu0 %v3080
        %3140 = vmatprep.subr.mxu0 0.0
        %3141 = vmatpush1.xpose.msra.mxu0 %v3078
        %3142 = vmatprep.subr.mxu0 0.0
        %3143 = vmatpush2.xpose.msra.mxu0 0.0
        %3144 = vmatprep.subr.mxu0 0.0
        %3145 = vmatpush2.xpose.msra.mxu0 0.0
        %3146 = vmatprep.subr.mxu0 0.0
        %3147 = vmatpush2.xpose.msra.mxu0 0.0
        %3148 = vmatprep.subr.mxu0 0.0
        %3149 = vmatpush2.xpose.msra.mxu0 0.0
        %3150 = vmatprep.subr.mxu0 0.0
        %3151 = vmatpush2.xpose.msra.mxu0 0.0
        %3152 = vmatprep.subr.mxu0 0.0
        %3153 = vmatpush2.xpose.msra.mxu0 0.0
        %3154 = vmatprep.subr.mxu0 0.0
        %3155 = vmatpush2.xpose.msra.mxu0 0.0
        %3156 = vmatprep.subr.mxu0 0.0
        %3157 = vmatpush2.xpose.msra.mxu0 0.0
        %3158 = vmatprep.subr.mxu0 0.0
        %3159 = vmatpush2.xpose.msra.mxu0 0.0
        %3160 = vmatprep.subr.mxu0 0.0
        %3161 = vmatpush2.xpose.msra.mxu0 0.0
        %3162 = vmatprep.subr.mxu0 0.0
        %3163 = vmatpush2.xpose.msra.mxu0 0.0
        %3164 = vmatprep.subr.mxu0 0.0
        %3165 = vmatpush2.xpose.msra.mxu0 0.0
        %3166 = vmatprep.subr.mxu0 0.0
        %3167 = vmatpush2.xpose.msra.mxu0 0.0
        %3168 = vmatprep.subr.mxu0 0.0
        %3169 = vmatpush2.xpose.msra.mxu0 0.0
        %3170 = vmatprep.subr.mxu0 0.0
        %3171 = vmatpush2.xpose.msra.mxu0 0.0
        %3172 = vmatprep.subr.mxu0 0.0
        %3173 = vmatpush2.xpose.msra.mxu0 0.0
        %3174 = vmatprep.mubr.f32.mxu0 0.0
        %3175 = vmatmul.mubr.f32.gmra.mxu0 %v3076
        %v3176 = vpop.f32.mrf.mxu0
        %v3177 = vadd.f32 0.0, %v3176
        %v3178 = vpop.f32.mrf.mxu0
        %3179 = vdwg.mxu0
        %v3180 = vmul.f32 %v3177, 6.1035156e-05
        %s3181 = smul.u32 %s22, 128
        %v3182 = vlaneseq
        %v3183 = vand.u32 %v3182, 127
        %v3184 = vstv %s3181
        %v3185 = vadd.s32 %v3184, %v3183
        %s3186 = sld [smem:[#allocation3]]
        %v3187 = vstv %s3186
        %vm3188 = vcmp.lt.s32.totalorder %v3185, %v3187
        %v3189 = vsub.f32 %v658, %v713
        %v3190 = vmul.f32 %v3189, %v3180
        %v3191 = vsel %vm3188, %v3190, 0.0
        %3192 = vst [vmem:[%s394] sm:$0x1] %v3191
        %v3193 = vmul.f32 %v658, 0.9
        %v3194 = vmul.f32 %v713, 0.1
        %v3195 = vadd.f32 %v3193, %v3194
        %3196 = vst [vmem:[%s397] sm:$0x1] %v3195
        %p3197 = scmp.lt.s32.totalorder %s22, 2
        %s3198 = scalar_select %p3197, %s22, 2
        %s3199 = scalar_lea.vmem %s5, %s3198
        %p3200 = scmp.lt.s32.totalorder %s22, 2
        %s3201 = scalar_select %p3200, %s22, 2
        %s3202 = scalar_lea.vmem %s6, %s3201
        // Predicated region
        $region117: #{_graph_loss_impl.1} parent=103 // pred_check
          %p3203 = pneg %p144
        $region118: #{_graph_loss_impl.1} parent=103 // pred_check_branch
          %3205 = sbr.rel (%p3203) target = $region120
        $region119: #{_graph_loss_impl.1} parent=103 // pred_region
          _
        $region120: #{_graph_loss_impl.1} parent=103 // pred_fallthru
          _
        // Predicated region
        $region121: #{_graph_loss_impl.1} parent=103 // pred_check
          %p3206 = pneg %p170
        $region122: #{_graph_loss_impl.1} parent=103 // pred_check_branch
          %3208 = sbr.rel (%p3206) target = $region124
        $region123: #{_graph_loss_impl.1} parent=103 // pred_region
          _
        $region124: #{_graph_loss_impl.1} parent=103 // pred_fallthru
          _
      $region104: #{_graph_loss_impl.1} parent=5 // pred_fallthru
        _
      %p3209 = scmp.le.s32.totalorder 2, %s17
      // Predicated region
      $region125: #{_graph_loss_impl.1} parent=5 // pred_check
        %p3210 = pneg %p3209
      $region126: #{_graph_loss_impl.1} parent=5 // pred_check_branch
        %3212 = sbr.rel (%p3210) target = $region128
      $region127: #{_graph_loss_impl.1} parent=5 // pred_region
        %s3213 = ssub.s32 %s17, 2
        // Predicated region
        $region129: #{_graph_loss_impl.1} parent=127 // pred_check
          %p3214 = pneg %p150
        $region130: #{_graph_loss_impl.1} parent=127 // pred_check_branch
          %3216 = sbr.rel (%p3214) target = $region132
        $region131: #{_graph_loss_impl.1} parent=127 // pred_region
          %p3217 = scmp.lt.s32.totalorder %s23, 2
          %s3218 = scalar_select %p3217, %s23, 2
          %s3219 = scalar_lea.vmem %s5, %s3218
        $region132: #{_graph_loss_impl.1} parent=127 // pred_fallthru
          _
        // Predicated region
        $region133: #{_graph_loss_impl.1} parent=127 // pred_check
          %p3220 = pneg %p176
        $region134: #{_graph_loss_impl.1} parent=127 // pred_check_branch
          %3222 = sbr.rel (%p3220) target = $region136
        $region135: #{_graph_loss_impl.1} parent=127 // pred_region
          %p3223 = scmp.lt.s32.totalorder %s23, 2
          %s3224 = scalar_select %p3223, %s23, 2
          %s3225 = scalar_lea.vmem %s6, %s3224
        $region136: #{_graph_loss_impl.1} parent=127 // pred_fallthru
          _
      $region128: #{_graph_loss_impl.1} parent=5 // pred_fallthru
        _
    $region6: #{_graph_loss_impl.1} parent=1 // loop_footer
      %s21 = sadd.s32 1, %s17
    $region7: #{_graph_loss_impl.1} parent=1 // loop_footer_branch
      %16 = sbr.rel target = $region3
    $region8: #{_graph_loss_impl.1} parent=1 // loop_exit
      _
    %3226 = vsyncpa [#allocation7], 1
    %s3227 = scalar_lea.sflag [#allocation7], 1
    %3228 = vsyncpa %s3227, 1

</llo_original>
